<compile_context>
chip_gen: v6e
topology: v6e:2x2x1
jax: 0.10.0
libtpu: 0.0.40
codegen_flags: <defaults>
</compile_context>

<pallas_src>
import functools

import jax
import jax.numpy as jnp
from jax.experimental import pallas as pl
from jax.experimental.pallas import tpu as pltpu

# ---------------- hyper-parameters (the PyTorch module's globals) ----------------
N_EMBED = 32
N_HEADS = 4
N_LAYERS = 2
CONTEXT_SIZE = 8
VOCAB_SIZE = 65
HEAD_DIM = N_EMBED // N_HEADS
LN_EPS = 1e-5
VOCAB_PAD = 128          # lane-dense logits width (next multiple of 128 >= vocab)


# ---------------- in-kernel helpers ----------------
def _layer_norm(x, w, b):
    # x: (N, C); w, b: (1, C)
    mean = jnp.mean(x, axis=-1, keepdims=True)
    var = jnp.mean((x - mean) ** 2, axis=-1, keepdims=True)
    return (x - mean) * jax.lax.rsqrt(var + LN_EPS) * w + b


# ---------------- fused whole-forward kernel ----------------
def gpt_forward_kernel(x_ref, ln1w, ln1b, wqkv, wo, bo, ln2w, ln2b,
                       w1, b1, w2, b2, lnfw, lnfb, wout, bout,
                       logits_ref, *, batch):
    BT, C = x_ref.shape
    B = batch
    T = BT // B
    H, D = N_HEADS, HEAD_DIM
    scale = D ** -0.5

    # Causal additive bias (0 on/below diagonal, -1e30 above), computed once.
    row = jax.lax.broadcasted_iota(jnp.int32, (T, T), 0)
    col = jax.lax.broadcasted_iota(jnp.int32, (T, T), 1)
    causal_bias = jnp.where(col <= row, 0.0, -1e30).astype(jnp.float32)   # (T, T)

    x = x_ref[...]                                                        # (BT, C) f32

    for li in range(N_LAYERS):                     # static unroll over layers
        # ----- multi-head causal self-attention on LN1(x) -----
        h = _layer_norm(x, ln1w[li], ln1b[li])                            # (BT, C)
        qkv = jnp.dot(h, wqkv[li], preferred_element_type=jnp.float32)    # (BT, 3C)
        qkv = qkv.reshape(B, T, 3 * C)

        # Gather the H heads into one (B*H, T, D) batch so each attention
        # matmul and the mask/softmax pipeline run once for all heads.
        q = jnp.concatenate(
            [qkv[:, :, hh * D:(hh + 1) * D] for hh in range(H)], axis=0)
        k = jnp.concatenate(
            [qkv[:, :, C + hh * D:C + (hh + 1) * D] for hh in range(H)], axis=0)
        v = jnp.concatenate(
            [qkv[:, :, 2 * C + hh * D:2 * C + (hh + 1) * D] for hh in range(H)], axis=0)

        s = jnp.einsum("nqd,nkd->nqk", q, k,
                       preferred_element_type=jnp.float32) * scale        # (B*H, T, T)
        s = s + causal_bias[None, :, :]
        s = s - jnp.max(s, axis=-1, keepdims=True)
        p = jnp.exp(s)
        p = p * pl.reciprocal(jnp.sum(p, axis=-1, keepdims=True), approx=True)
        o = jnp.einsum("nqk,nkd->nqd", p, v,
                       preferred_element_type=jnp.float32)                # (B*H, T, D)

        # back to (B, T, C): head hh occupies rows hh*B:(hh+1)*B
        attn = jnp.concatenate(
            [o[hh * B:(hh + 1) * B] for hh in range(H)], axis=-1)         # (B, T, C)
        attn = attn.reshape(BT, C)
        x = x + jnp.dot(attn, wo[li], preferred_element_type=jnp.float32) + bo[li]

        # ----- feed-forward (4x expansion, ReLU) on LN2(x) -----
        h2 = _layer_norm(x, ln2w[li], ln2b[li])
        f = jnp.maximum(
            jnp.dot(h2, w1[li], preferred_element_type=jnp.float32) + b1[li], 0.0)
        x = x + jnp.dot(f, w2[li], preferred_element_type=jnp.float32) + b2[li]

    # ----- final LayerNorm + LM head, stored lane-dense (BT, 128) -----
    hf = _layer_norm(x, lnfw[...], lnfb[...])
    logits_ref[...] = (
        jnp.dot(hf, wout[...], preferred_element_type=jnp.float32) + bout[...]
    )


# ---------------- pallas_call wrapper ----------------
def _vmem_spec():
    return pl.BlockSpec(memory_space=pltpu.MemorySpace.VMEM)


def gpt_apply(params, x_flat, batch):
    args = (
        x_flat,
        params["ln1_w"], params["ln1_b"], params["w_qkv"],
        params["w_o"], params["b_o"],
        params["ln2_w"], params["ln2_b"],
        params["w1"], params["b1"], params["w2"], params["b2"],
        params["ln_f_w"], params["ln_f_b"],
        params["w_out_p"], params["b_out_p"],
    )
    return pl.pallas_call(
        functools.partial(gpt_forward_kernel, batch=batch),
        out_shape=jax.ShapeDtypeStruct((x_flat.shape[0], VOCAB_PAD), jnp.float32),
        in_specs=[_vmem_spec() for _ in args],
        out_specs=_vmem_spec(),
    )(*args)


# ---------------- parameter init (deterministic) ----------------
def init_params(key):
    def nrm(k, shape, std=0.02):
        return jax.random.normal(k, shape, dtype=jnp.float32) * std

    k = jax.random.split(key, 7)
    C, L = N_EMBED, N_LAYERS
    return {
        "tok_emb": nrm(k[0], (VOCAB_SIZE, C)),
        "pos_emb": nrm(k[1], (CONTEXT_SIZE, C)),
        # per-layer weights stacked along a leading layer axis (all VMEM resident)
        "ln1_w": jnp.ones((L, 1, C), jnp.float32),
        "ln1_b": jnp.zeros((L, 1, C), jnp.float32),
        "w_qkv": nrm(k[2], (L, C, 3 * C)),          # fused [Wq | Wk | Wv]
        "w_o": nrm(k[3], (L, C, C)),
        "b_o": jnp.zeros((L, 1, C), jnp.float32),
        "ln2_w": jnp.ones((L, 1, C), jnp.float32),
        "ln2_b": jnp.zeros((L, 1, C), jnp.float32),
        "w1": nrm(k[4], (L, C, 4 * C)),
        "b1": jnp.zeros((L, 1, 4 * C), jnp.float32),
        "w2": nrm(k[5], (L, 4 * C, C)),
        "b2": jnp.zeros((L, 1, C), jnp.float32),
        "ln_f_w": jnp.ones((1, C), jnp.float32),
        "ln_f_b": jnp.zeros((1, C), jnp.float32),
        # LM head padded to 128 lanes; columns >= VOCAB_SIZE are zero
        "w_out_p": jnp.pad(nrm(k[6], (C, VOCAB_SIZE)),
                           ((0, 0), (0, VOCAB_PAD - VOCAB_SIZE))),
        "b_out_p": jnp.zeros((1, VOCAB_PAD), jnp.float32),
    }


# ---------------- full forward (glue + single Pallas kernel) ----------------
def gpt_forward(params, idx, targets=None):
    B, T = idx.shape
    tok = jnp.take(params["tok_emb"], idx, axis=0)          # (B, T, C) gather
    pos = params["pos_emb"][:T]                              # (T, C)
    x = (tok + pos[None, :, :]).reshape(B * T, N_EMBED)      # (B*T, C)

    logits_pad = gpt_apply(params, x, B)                     # (B*T, 128)
    logits = logits_pad[:, :VOCAB_SIZE].reshape(B, T, VOCAB_SIZE)

    if targets is None:
        loss = None
    else:
        lp = jax.nn.log_softmax(logits.reshape(B * T, VOCAB_SIZE), axis=-1)
        loss = -jnp.mean(jnp.take_along_axis(lp, targets.reshape(-1, 1), axis=1))
    return logits, loss


if __name__ == "__main__":
    key = jax.random.PRNGKey(0)
    pkey, ikey, tkey = jax.random.split(key, 3)
    params = init_params(pkey)

    B, T = 2, CONTEXT_SIZE
    idx = jax.random.randint(ikey, (B, T), 0, VOCAB_SIZE, dtype=jnp.int32)
    targets = jax.random.randint(tkey, (B, T), 0, VOCAB_SIZE, dtype=jnp.int32)

    logits, loss = gpt_forward(params, idx)                  # inference path
    logits = jax.block_until_ready(logits)
    assert logits.shape == (B, T, VOCAB_SIZE) and loss is None

    logits2, loss2 = gpt_forward(params, idx, targets)       # with-targets path
    jax.block_until_ready((logits2, loss2))
    assert jnp.isfinite(loss2)

    print("KERNEL_OK")
</pallas_src>

<mosaic_0001>
module attributes {stable_mosaic.version = 11 : i64} {
  func.func @gpt_forward_kernel(%arg0: memref<16x32xf32, #tpu.memory_space<vmem>>, %arg1: memref<2x1x32xf32, #tpu.memory_space<vmem>>, %arg2: memref<2x1x32xf32, #tpu.memory_space<vmem>>, %arg3: memref<2x32x96xf32, #tpu.memory_space<vmem>>, %arg4: memref<2x32x32xf32, #tpu.memory_space<vmem>>, %arg5: memref<2x1x32xf32, #tpu.memory_space<vmem>>, %arg6: memref<2x1x32xf32, #tpu.memory_space<vmem>>, %arg7: memref<2x1x32xf32, #tpu.memory_space<vmem>>, %arg8: memref<2x32x128xf32, #tpu.memory_space<vmem>>, %arg9: memref<2x1x128xf32, #tpu.memory_space<vmem>>, %arg10: memref<2x128x32xf32, #tpu.memory_space<vmem>>, %arg11: memref<2x1x32xf32, #tpu.memory_space<vmem>>, %arg12: memref<1x32xf32, #tpu.memory_space<vmem>>, %arg13: memref<1x32xf32, #tpu.memory_space<vmem>>, %arg14: memref<32x128xf32, #tpu.memory_space<vmem>>, %arg15: memref<1x128xf32, #tpu.memory_space<vmem>>, %arg16: memref<16x128xf32, #tpu.memory_space<vmem>>) attributes {dimension_semantics = [], scalar_prefetch = 0 : i64, scratch_operands = 0 : i64, tpu.core_type = #tpu.core_type<tc>} {
    %0 = tpu.iota {dimensions = array<i32: 0>} : vector<8x8xi32>
    %1 = tpu.iota {dimensions = array<i32: 1>} : vector<8x8xi32>
    %2 = arith.cmpi sle, %1, %0 : vector<8x8xi32>
    %cst = arith.constant 0.000000e+00 : f32
    %cst_0 = arith.constant -1.000000e+30 : f32
    %3 = vector.broadcast %cst : f32 to vector<8x8xf32>
    %4 = vector.broadcast %cst_0 : f32 to vector<8x8xf32>
    %5 = arith.select %2, %3, %4 : vector<8x8xi1>, vector<8x8xf32>
    %c0 = arith.constant 0 : index
    %c0_1 = arith.constant 0 : index
    %6 = vector.load %arg0[%c0, %c0_1] : memref<16x32xf32, #tpu.memory_space<vmem>>, vector<16x32xf32>
    %c0_2 = arith.constant 0 : index
    %c0_3 = arith.constant 0 : index
    %c0_4 = arith.constant 0 : index
    %7 = vector.load %arg1[%c0_2, %c0_3, %c0_4] : memref<2x1x32xf32, #tpu.memory_space<vmem>>, vector<1x1x32xf32>
    %8 = vector.shape_cast %7 : vector<1x1x32xf32> to vector<1x32xf32>
    %c0_5 = arith.constant 0 : index
    %c0_6 = arith.constant 0 : index
    %c0_7 = arith.constant 0 : index
    %9 = vector.load %arg2[%c0_5, %c0_6, %c0_7] : memref<2x1x32xf32, #tpu.memory_space<vmem>>, vector<1x1x32xf32>
    %10 = vector.shape_cast %9 : vector<1x1x32xf32> to vector<1x32xf32>
    %cst_8 = arith.constant dense<0.000000e+00> : vector<16xf32>
    %11 = vector.multi_reduction <add>, %6, %cst_8 [1] : vector<16x32xf32> to vector<16xf32>
    %12 = vector.shape_cast %11 : vector<16xf32> to vector<16x1xf32>
    %cst_9 = arith.constant 3.200000e+01 : f32
    %13 = vector.broadcast %cst_9 : f32 to vector<16x1xf32>
    %14 = arith.divf %12, %13 : vector<16x1xf32>
    %15 = vector.broadcast %14 : vector<16x1xf32> to vector<16x32xf32>
    %16 = arith.subf %6, %15 : vector<16x32xf32>
    %17 = arith.mulf %16, %16 : vector<16x32xf32>
    %cst_10 = arith.constant dense<0.000000e+00> : vector<16xf32>
    %18 = vector.multi_reduction <add>, %17, %cst_10 [1] : vector<16x32xf32> to vector<16xf32>
    %19 = vector.shape_cast %18 : vector<16xf32> to vector<16x1xf32>
    %cst_11 = arith.constant 3.200000e+01 : f32
    %20 = vector.broadcast %cst_11 : f32 to vector<16x1xf32>
    %21 = arith.divf %19, %20 : vector<16x1xf32>
    %22 = vector.broadcast %14 : vector<16x1xf32> to vector<16x32xf32>
    %23 = arith.subf %6, %22 : vector<16x32xf32>
    %cst_12 = arith.constant 9.99999974E-6 : f32
    %24 = vector.broadcast %cst_12 : f32 to vector<16x1xf32>
    %25 = arith.addf %21, %24 : vector<16x1xf32>
    %26 = math.rsqrt %25 : vector<16x1xf32>
    %27 = vector.broadcast %26 : vector<16x1xf32> to vector<16x32xf32>
    %28 = arith.mulf %23, %27 : vector<16x32xf32>
    %29 = vector.broadcast %8 : vector<1x32xf32> to vector<16x32xf32>
    %30 = arith.mulf %28, %29 : vector<16x32xf32>
    %31 = vector.broadcast %10 : vector<1x32xf32> to vector<16x32xf32>
    %32 = arith.addf %30, %31 : vector<16x32xf32>
    %c0_13 = arith.constant 0 : index
    %c0_14 = arith.constant 0 : index
    %c0_15 = arith.constant 0 : index
    %33 = vector.load %arg3[%c0_13, %c0_14, %c0_15] : memref<2x32x96xf32, #tpu.memory_space<vmem>>, vector<1x32x96xf32>
    %34 = vector.shape_cast %33 : vector<1x32x96xf32> to vector<32x96xf32>
    %cst_16 = arith.constant dense<0.000000e+00> : vector<16x96xf32>
    %35 = tpu.matmul %32, %34, %cst_16 {dimension_numbers = #tpu.dot_dimension_numbers<[1], [0], [0], [1], [0, 0, 1, 1], [], []>} : vector<16x32xf32>, vector<32x96xf32>, vector<16x96xf32> -> vector<16x96xf32>
    %36 = vector.shape_cast %35 : vector<16x96xf32> to vector<2x8x96xf32>
    %37 = vector.extract_strided_slice %36 {offsets = [0, 0, 0], sizes = [2, 8, 8], strides = [1, 1, 1]} : vector<2x8x96xf32> to vector<2x8x8xf32>
    %38 = vector.extract_strided_slice %36 {offsets = [0, 0, 8], sizes = [2, 8, 8], strides = [1, 1, 1]} : vector<2x8x96xf32> to vector<2x8x8xf32>
    %39 = vector.extract_strided_slice %36 {offsets = [0, 0, 16], sizes = [2, 8, 8], strides = [1, 1, 1]} : vector<2x8x96xf32> to vector<2x8x8xf32>
    %40 = vector.extract_strided_slice %36 {offsets = [0, 0, 24], sizes = [2, 8, 8], strides = [1, 1, 1]} : vector<2x8x96xf32> to vector<2x8x8xf32>
    %41 = tpu.concatenate %37, %38, %39, %40 in 0 : vector<2x8x8xf32>, vector<2x8x8xf32>, vector<2x8x8xf32>, vector<2x8x8xf32> -> vector<8x8x8xf32>
    %42 = vector.extract_strided_slice %36 {offsets = [0, 0, 32], sizes = [2, 8, 8], strides = [1, 1, 1]} : vector<2x8x96xf32> to vector<2x8x8xf32>
    %43 = vector.extract_strided_slice %36 {offsets = [0, 0, 40], sizes = [2, 8, 8], strides = [1, 1, 1]} : vector<2x8x96xf32> to vector<2x8x8xf32>
    %44 = vector.extract_strided_slice %36 {offsets = [0, 0, 48], sizes = [2, 8, 8], strides = [1, 1, 1]} : vector<2x8x96xf32> to vector<2x8x8xf32>
    %45 = vector.extract_strided_slice %36 {offsets = [0, 0, 56], sizes = [2, 8, 8], strides = [1, 1, 1]} : vector<2x8x96xf32> to vector<2x8x8xf32>
    %46 = tpu.concatenate %42, %43, %44, %45 in 0 : vector<2x8x8xf32>, vector<2x8x8xf32>, vector<2x8x8xf32>, vector<2x8x8xf32> -> vector<8x8x8xf32>
    %47 = vector.extract_strided_slice %36 {offsets = [0, 0, 64], sizes = [2, 8, 8], strides = [1, 1, 1]} : vector<2x8x96xf32> to vector<2x8x8xf32>
    %48 = vector.extract_strided_slice %36 {offsets = [0, 0, 72], sizes = [2, 8, 8], strides = [1, 1, 1]} : vector<2x8x96xf32> to vector<2x8x8xf32>
    %49 = vector.extract_strided_slice %36 {offsets = [0, 0, 80], sizes = [2, 8, 8], strides = [1, 1, 1]} : vector<2x8x96xf32> to vector<2x8x8xf32>
    %50 = vector.extract_strided_slice %36 {offsets = [0, 0, 88], sizes = [2, 8, 8], strides = [1, 1, 1]} : vector<2x8x96xf32> to vector<2x8x8xf32>
    %51 = tpu.concatenate %47, %48, %49, %50 in 0 : vector<2x8x8xf32>, vector<2x8x8xf32>, vector<2x8x8xf32>, vector<2x8x8xf32> -> vector<8x8x8xf32>
    "tpu.trace_start"() <{level = 10 : i32, message = "nqd,nkd->nqk"}> : () -> ()
    %cst_17 = arith.constant dense<0.000000e+00> : vector<8x8x8xf32>
    %52 = tpu.matmul %41, %46, %cst_17 {dimension_numbers = #tpu.dot_dimension_numbers<[2], [2], [1], [1], [0, 0, 0, 1, 1, 1], [0], [0]>} : vector<8x8x8xf32>, vector<8x8x8xf32>, vector<8x8x8xf32> -> vector<8x8x8xf32>
    "tpu.trace_stop"() : () -> ()
    %cst_18 = arith.constant 0.353553385 : f32
    %53 = vector.broadcast %cst_18 : f32 to vector<8x8x8xf32>
    %54 = arith.mulf %52, %53 : vector<8x8x8xf32>
    %55 = vector.shape_cast %5 : vector<8x8xf32> to vector<1x8x8xf32>
    %56 = vector.broadcast %55 : vector<1x8x8xf32> to vector<8x8x8xf32>
    %57 = arith.addf %54, %56 : vector<8x8x8xf32>
    %cst_19 = arith.constant dense<0xFF800000> : vector<8x8xf32>
    %58 = vector.multi_reduction <maximumf>, %57, %cst_19 [2] : vector<8x8x8xf32> to vector<8x8xf32>
    %59 = vector.shape_cast %58 : vector<8x8xf32> to vector<8x8x1xf32>
    %60 = vector.broadcast %59 : vector<8x8x1xf32> to vector<8x8x8xf32>
    %61 = arith.subf %57, %60 : vector<8x8x8xf32>
    %62 = math.exp %61 : vector<8x8x8xf32>
    %cst_20 = arith.constant dense<0.000000e+00> : vector<8x8xf32>
    %63 = vector.multi_reduction <add>, %62, %cst_20 [2] : vector<8x8x8xf32> to vector<8x8xf32>
    %64 = vector.shape_cast %63 : vector<8x8xf32> to vector<8x8x1xf32>
    %65 = tpu.reciprocal %64 {approx = true} : vector<8x8x1xf32> -> vector<8x8x1xf32>
    %66 = vector.broadcast %65 : vector<8x8x1xf32> to vector<8x8x8xf32>
    %67 = arith.mulf %62, %66 : vector<8x8x8xf32>
    "tpu.trace_start"() <{level = 10 : i32, message = "nqk,nkd->nqd"}> : () -> ()
    %cst_21 = arith.constant dense<0.000000e+00> : vector<8x8x8xf32>
    %68 = tpu.matmul %67, %51, %cst_21 {dimension_numbers = #tpu.dot_dimension_numbers<[2], [1], [1], [2], [0, 0, 0, 1, 1, 2], [0], [0]>} : vector<8x8x8xf32>, vector<8x8x8xf32>, vector<8x8x8xf32> -> vector<8x8x8xf32>
    "tpu.trace_stop"() : () -> ()
    %69 = vector.extract_strided_slice %68 {offsets = [0, 0, 0], sizes = [2, 8, 8], strides = [1, 1, 1]} : vector<8x8x8xf32> to vector<2x8x8xf32>
    %70 = vector.extract_strided_slice %68 {offsets = [2, 0, 0], sizes = [2, 8, 8], strides = [1, 1, 1]} : vector<8x8x8xf32> to vector<2x8x8xf32>
    %71 = vector.extract_strided_slice %68 {offsets = [4, 0, 0], sizes = [2, 8, 8], strides = [1, 1, 1]} : vector<8x8x8xf32> to vector<2x8x8xf32>
    %72 = vector.extract_strided_slice %68 {offsets = [6, 0, 0], sizes = [2, 8, 8], strides = [1, 1, 1]} : vector<8x8x8xf32> to vector<2x8x8xf32>
    %73 = tpu.concatenate %69, %70, %71, %72 in 2 : vector<2x8x8xf32>, vector<2x8x8xf32>, vector<2x8x8xf32>, vector<2x8x8xf32> -> vector<2x8x32xf32>
    %74 = vector.shape_cast %73 : vector<2x8x32xf32> to vector<16x32xf32>
    %c0_22 = arith.constant 0 : index
    %c0_23 = arith.constant 0 : index
    %c0_24 = arith.constant 0 : index
    %75 = vector.load %arg4[%c0_22, %c0_23, %c0_24] : memref<2x32x32xf32, #tpu.memory_space<vmem>>, vector<1x32x32xf32>
    %76 = vector.shape_cast %75 : vector<1x32x32xf32> to vector<32x32xf32>
    %cst_25 = arith.constant dense<0.000000e+00> : vector<16x32xf32>
    %77 = tpu.matmul %74, %76, %cst_25 {dimension_numbers = #tpu.dot_dimension_numbers<[1], [0], [0], [1], [0, 0, 1, 1], [], []>} : vector<16x32xf32>, vector<32x32xf32>, vector<16x32xf32> -> vector<16x32xf32>
    %78 = arith.addf %6, %77 : vector<16x32xf32>
    %c0_26 = arith.constant 0 : index
    %c0_27 = arith.constant 0 : index
    %c0_28 = arith.constant 0 : index
    %79 = vector.load %arg5[%c0_26, %c0_27, %c0_28] : memref<2x1x32xf32, #tpu.memory_space<vmem>>, vector<1x1x32xf32>
    %80 = vector.shape_cast %79 : vector<1x1x32xf32> to vector<1x32xf32>
    %81 = vector.broadcast %80 : vector<1x32xf32> to vector<16x32xf32>
    %82 = arith.addf %78, %81 : vector<16x32xf32>
    %c0_29 = arith.constant 0 : index
    %c0_30 = arith.constant 0 : index
    %c0_31 = arith.constant 0 : index
    %83 = vector.load %arg6[%c0_29, %c0_30, %c0_31] : memref<2x1x32xf32, #tpu.memory_space<vmem>>, vector<1x1x32xf32>
    %84 = vector.shape_cast %83 : vector<1x1x32xf32> to vector<1x32xf32>
    %c0_32 = arith.constant 0 : index
    %c0_33 = arith.constant 0 : index
    %c0_34 = arith.constant 0 : index
    %85 = vector.load %arg7[%c0_32, %c0_33, %c0_34] : memref<2x1x32xf32, #tpu.memory_space<vmem>>, vector<1x1x32xf32>
    %86 = vector.shape_cast %85 : vector<1x1x32xf32> to vector<1x32xf32>
    %cst_35 = arith.constant dense<0.000000e+00> : vector<16xf32>
    %87 = vector.multi_reduction <add>, %82, %cst_35 [1] : vector<16x32xf32> to vector<16xf32>
    %88 = vector.shape_cast %87 : vector<16xf32> to vector<16x1xf32>
    %cst_36 = arith.constant 3.200000e+01 : f32
    %89 = vector.broadcast %cst_36 : f32 to vector<16x1xf32>
    %90 = arith.divf %88, %89 : vector<16x1xf32>
    %91 = vector.broadcast %90 : vector<16x1xf32> to vector<16x32xf32>
    %92 = arith.subf %82, %91 : vector<16x32xf32>
    %93 = arith.mulf %92, %92 : vector<16x32xf32>
    %cst_37 = arith.constant dense<0.000000e+00> : vector<16xf32>
    %94 = vector.multi_reduction <add>, %93, %cst_37 [1] : vector<16x32xf32> to vector<16xf32>
    %95 = vector.shape_cast %94 : vector<16xf32> to vector<16x1xf32>
    %cst_38 = arith.constant 3.200000e+01 : f32
    %96 = vector.broadcast %cst_38 : f32 to vector<16x1xf32>
    %97 = arith.divf %95, %96 : vector<16x1xf32>
    %98 = vector.broadcast %90 : vector<16x1xf32> to vector<16x32xf32>
    %99 = arith.subf %82, %98 : vector<16x32xf32>
    %cst_39 = arith.constant 9.99999974E-6 : f32
    %100 = vector.broadcast %cst_39 : f32 to vector<16x1xf32>
    %101 = arith.addf %97, %100 : vector<16x1xf32>
    %102 = math.rsqrt %101 : vector<16x1xf32>
    %103 = vector.broadcast %102 : vector<16x1xf32> to vector<16x32xf32>
    %104 = arith.mulf %99, %103 : vector<16x32xf32>
    %105 = vector.broadcast %84 : vector<1x32xf32> to vector<16x32xf32>
    %106 = arith.mulf %104, %105 : vector<16x32xf32>
    %107 = vector.broadcast %86 : vector<1x32xf32> to vector<16x32xf32>
    %108 = arith.addf %106, %107 : vector<16x32xf32>
    %c0_40 = arith.constant 0 : index
    %c0_41 = arith.constant 0 : index
    %c0_42 = arith.constant 0 : index
    %109 = vector.load %arg8[%c0_40, %c0_41, %c0_42] : memref<2x32x128xf32, #tpu.memory_space<vmem>>, vector<1x32x128xf32>
    %110 = vector.shape_cast %109 : vector<1x32x128xf32> to vector<32x128xf32>
    %cst_43 = arith.constant dense<0.000000e+00> : vector<16x128xf32>
    %111 = tpu.matmul %108, %110, %cst_43 {dimension_numbers = #tpu.dot_dimension_numbers<[1], [0], [0], [1], [0, 0, 1, 1], [], []>} : vector<16x32xf32>, vector<32x128xf32>, vector<16x128xf32> -> vector<16x128xf32>
    %c0_44 = arith.constant 0 : index
    %c0_45 = arith.constant 0 : index
    %c0_46 = arith.constant 0 : index
    %112 = vector.load %arg9[%c0_44, %c0_45, %c0_46] : memref<2x1x128xf32, #tpu.memory_space<vmem>>, vector<1x1x128xf32>
    %113 = vector.shape_cast %112 : vector<1x1x128xf32> to vector<1x128xf32>
    %114 = vector.broadcast %113 : vector<1x128xf32> to vector<16x128xf32>
    %115 = arith.addf %111, %114 : vector<16x128xf32>
    %cst_47 = arith.constant 0.000000e+00 : f32
    %116 = vector.broadcast %cst_47 : f32 to vector<16x128xf32>
    %117 = arith.maximumf %115, %116 : vector<16x128xf32>
    %c0_48 = arith.constant 0 : index
    %c0_49 = arith.constant 0 : index
    %c0_50 = arith.constant 0 : index
    %118 = vector.load %arg10[%c0_48, %c0_49, %c0_50] : memref<2x128x32xf32, #tpu.memory_space<vmem>>, vector<1x128x32xf32>
    %119 = vector.shape_cast %118 : vector<1x128x32xf32> to vector<128x32xf32>
    %cst_51 = arith.constant dense<0.000000e+00> : vector<16x32xf32>
    %120 = tpu.matmul %117, %119, %cst_51 {dimension_numbers = #tpu.dot_dimension_numbers<[1], [0], [0], [1], [0, 0, 1, 1], [], []>} : vector<16x128xf32>, vector<128x32xf32>, vector<16x32xf32> -> vector<16x32xf32>
    %121 = arith.addf %82, %120 : vector<16x32xf32>
    %c0_52 = arith.constant 0 : index
    %c0_53 = arith.constant 0 : index
    %c0_54 = arith.constant 0 : index
    %122 = vector.load %arg11[%c0_52, %c0_53, %c0_54] : memref<2x1x32xf32, #tpu.memory_space<vmem>>, vector<1x1x32xf32>
    %123 = vector.shape_cast %122 : vector<1x1x32xf32> to vector<1x32xf32>
    %124 = vector.broadcast %123 : vector<1x32xf32> to vector<16x32xf32>
    %125 = arith.addf %121, %124 : vector<16x32xf32>
    %c1 = arith.constant 1 : index
    %c0_55 = arith.constant 0 : index
    %c0_56 = arith.constant 0 : index
    %126 = vector.load %arg1[%c1, %c0_55, %c0_56] : memref<2x1x32xf32, #tpu.memory_space<vmem>>, vector<1x1x32xf32>
    %127 = vector.shape_cast %126 : vector<1x1x32xf32> to vector<1x32xf32>
    %c1_57 = arith.constant 1 : index
    %c0_58 = arith.constant 0 : index
    %c0_59 = arith.constant 0 : index
    %128 = vector.load %arg2[%c1_57, %c0_58, %c0_59] : memref<2x1x32xf32, #tpu.memory_space<vmem>>, vector<1x1x32xf32>
    %129 = vector.shape_cast %128 : vector<1x1x32xf32> to vector<1x32xf32>
    %cst_60 = arith.constant dense<0.000000e+00> : vector<16xf32>
    %130 = vector.multi_reduction <add>, %125, %cst_60 [1] : vector<16x32xf32> to vector<16xf32>
    %131 = vector.shape_cast %130 : vector<16xf32> to vector<16x1xf32>
    %cst_61 = arith.constant 3.200000e+01 : f32
    %132 = vector.broadcast %cst_61 : f32 to vector<16x1xf32>
    %133 = arith.divf %131, %132 : vector<16x1xf32>
    %134 = vector.broadcast %133 : vector<16x1xf32> to vector<16x32xf32>
    %135 = arith.subf %125, %134 : vector<16x32xf32>
    %136 = arith.mulf %135, %135 : vector<16x32xf32>
    %cst_62 = arith.constant dense<0.000000e+00> : vector<16xf32>
    %137 = vector.multi_reduction <add>, %136, %cst_62 [1] : vector<16x32xf32> to vector<16xf32>
    %138 = vector.shape_cast %137 : vector<16xf32> to vector<16x1xf32>
    %cst_63 = arith.constant 3.200000e+01 : f32
    %139 = vector.broadcast %cst_63 : f32 to vector<16x1xf32>
    %140 = arith.divf %138, %139 : vector<16x1xf32>
    %141 = vector.broadcast %133 : vector<16x1xf32> to vector<16x32xf32>
    %142 = arith.subf %125, %141 : vector<16x32xf32>
    %cst_64 = arith.constant 9.99999974E-6 : f32
    %143 = vector.broadcast %cst_64 : f32 to vector<16x1xf32>
    %144 = arith.addf %140, %143 : vector<16x1xf32>
    %145 = math.rsqrt %144 : vector<16x1xf32>
    %146 = vector.broadcast %145 : vector<16x1xf32> to vector<16x32xf32>
    %147 = arith.mulf %142, %146 : vector<16x32xf32>
    %148 = vector.broadcast %127 : vector<1x32xf32> to vector<16x32xf32>
    %149 = arith.mulf %147, %148 : vector<16x32xf32>
    %150 = vector.broadcast %129 : vector<1x32xf32> to vector<16x32xf32>
    %151 = arith.addf %149, %150 : vector<16x32xf32>
    %c1_65 = arith.constant 1 : index
    %c0_66 = arith.constant 0 : index
    %c0_67 = arith.constant 0 : index
    %152 = vector.load %arg3[%c1_65, %c0_66, %c0_67] : memref<2x32x96xf32, #tpu.memory_space<vmem>>, vector<1x32x96xf32>
    %153 = vector.shape_cast %152 : vector<1x32x96xf32> to vector<32x96xf32>
    %cst_68 = arith.constant dense<0.000000e+00> : vector<16x96xf32>
    %154 = tpu.matmul %151, %153, %cst_68 {dimension_numbers = #tpu.dot_dimension_numbers<[1], [0], [0], [1], [0, 0, 1, 1], [], []>} : vector<16x32xf32>, vector<32x96xf32>, vector<16x96xf32> -> vector<16x96xf32>
    %155 = vector.shape_cast %154 : vector<16x96xf32> to vector<2x8x96xf32>
    %156 = vector.extract_strided_slice %155 {offsets = [0, 0, 0], sizes = [2, 8, 8], strides = [1, 1, 1]} : vector<2x8x96xf32> to vector<2x8x8xf32>
    %157 = vector.extract_strided_slice %155 {offsets = [0, 0, 8], sizes = [2, 8, 8], strides = [1, 1, 1]} : vector<2x8x96xf32> to vector<2x8x8xf32>
    %158 = vector.extract_strided_slice %155 {offsets = [0, 0, 16], sizes = [2, 8, 8], strides = [1, 1, 1]} : vector<2x8x96xf32> to vector<2x8x8xf32>
    %159 = vector.extract_strided_slice %155 {offsets = [0, 0, 24], sizes = [2, 8, 8], strides = [1, 1, 1]} : vector<2x8x96xf32> to vector<2x8x8xf32>
    %160 = tpu.concatenate %156, %157, %158, %159 in 0 : vector<2x8x8xf32>, vector<2x8x8xf32>, vector<2x8x8xf32>, vector<2x8x8xf32> -> vector<8x8x8xf32>
    %161 = vector.extract_strided_slice %155 {offsets = [0, 0, 32], sizes = [2, 8, 8], strides = [1, 1, 1]} : vector<2x8x96xf32> to vector<2x8x8xf32>
    %162 = vector.extract_strided_slice %155 {offsets = [0, 0, 40], sizes = [2, 8, 8], strides = [1, 1, 1]} : vector<2x8x96xf32> to vector<2x8x8xf32>
    %163 = vector.extract_strided_slice %155 {offsets = [0, 0, 48], sizes = [2, 8, 8], strides = [1, 1, 1]} : vector<2x8x96xf32> to vector<2x8x8xf32>
    %164 = vector.extract_strided_slice %155 {offsets = [0, 0, 56], sizes = [2, 8, 8], strides = [1, 1, 1]} : vector<2x8x96xf32> to vector<2x8x8xf32>
    %165 = tpu.concatenate %161, %162, %163, %164 in 0 : vector<2x8x8xf32>, vector<2x8x8xf32>, vector<2x8x8xf32>, vector<2x8x8xf32> -> vector<8x8x8xf32>
    %166 = vector.extract_strided_slice %155 {offsets = [0, 0, 64], sizes = [2, 8, 8], strides = [1, 1, 1]} : vector<2x8x96xf32> to vector<2x8x8xf32>
    %167 = vector.extract_strided_slice %155 {offsets = [0, 0, 72], sizes = [2, 8, 8], strides = [1, 1, 1]} : vector<2x8x96xf32> to vector<2x8x8xf32>
    %168 = vector.extract_strided_slice %155 {offsets = [0, 0, 80], sizes = [2, 8, 8], strides = [1, 1, 1]} : vector<2x8x96xf32> to vector<2x8x8xf32>
    %169 = vector.extract_strided_slice %155 {offsets = [0, 0, 88], sizes = [2, 8, 8], strides = [1, 1, 1]} : vector<2x8x96xf32> to vector<2x8x8xf32>
    %170 = tpu.concatenate %166, %167, %168, %169 in 0 : vector<2x8x8xf32>, vector<2x8x8xf32>, vector<2x8x8xf32>, vector<2x8x8xf32> -> vector<8x8x8xf32>
    "tpu.trace_start"() <{level = 10 : i32, message = "nqd,nkd->nqk"}> : () -> ()
    %cst_69 = arith.constant dense<0.000000e+00> : vector<8x8x8xf32>
    %171 = tpu.matmul %160, %165, %cst_69 {dimension_numbers = #tpu.dot_dimension_numbers<[2], [2], [1], [1], [0, 0, 0, 1, 1, 1], [0], [0]>} : vector<8x8x8xf32>, vector<8x8x8xf32>, vector<8x8x8xf32> -> vector<8x8x8xf32>
    "tpu.trace_stop"() : () -> ()
    %cst_70 = arith.constant 0.353553385 : f32
    %172 = vector.broadcast %cst_70 : f32 to vector<8x8x8xf32>
    %173 = arith.mulf %171, %172 : vector<8x8x8xf32>
    %174 = vector.shape_cast %5 : vector<8x8xf32> to vector<1x8x8xf32>
    %175 = vector.broadcast %174 : vector<1x8x8xf32> to vector<8x8x8xf32>
    %176 = arith.addf %173, %175 : vector<8x8x8xf32>
    %cst_71 = arith.constant dense<0xFF800000> : vector<8x8xf32>
    %177 = vector.multi_reduction <maximumf>, %176, %cst_71 [2] : vector<8x8x8xf32> to vector<8x8xf32>
    %178 = vector.shape_cast %177 : vector<8x8xf32> to vector<8x8x1xf32>
    %179 = vector.broadcast %178 : vector<8x8x1xf32> to vector<8x8x8xf32>
    %180 = arith.subf %176, %179 : vector<8x8x8xf32>
    %181 = math.exp %180 : vector<8x8x8xf32>
    %cst_72 = arith.constant dense<0.000000e+00> : vector<8x8xf32>
    %182 = vector.multi_reduction <add>, %181, %cst_72 [2] : vector<8x8x8xf32> to vector<8x8xf32>
    %183 = vector.shape_cast %182 : vector<8x8xf32> to vector<8x8x1xf32>
    %184 = tpu.reciprocal %183 {approx = true} : vector<8x8x1xf32> -> vector<8x8x1xf32>
    %185 = vector.broadcast %184 : vector<8x8x1xf32> to vector<8x8x8xf32>
    %186 = arith.mulf %181, %185 : vector<8x8x8xf32>
    "tpu.trace_start"() <{level = 10 : i32, message = "nqk,nkd->nqd"}> : () -> ()
    %cst_73 = arith.constant dense<0.000000e+00> : vector<8x8x8xf32>
    %187 = tpu.matmul %186, %170, %cst_73 {dimension_numbers = #tpu.dot_dimension_numbers<[2], [1], [1], [2], [0, 0, 0, 1, 1, 2], [0], [0]>} : vector<8x8x8xf32>, vector<8x8x8xf32>, vector<8x8x8xf32> -> vector<8x8x8xf32>
    "tpu.trace_stop"() : () -> ()
    %188 = vector.extract_strided_slice %187 {offsets = [0, 0, 0], sizes = [2, 8, 8], strides = [1, 1, 1]} : vector<8x8x8xf32> to vector<2x8x8xf32>
    %189 = vector.extract_strided_slice %187 {offsets = [2, 0, 0], sizes = [2, 8, 8], strides = [1, 1, 1]} : vector<8x8x8xf32> to vector<2x8x8xf32>
    %190 = vector.extract_strided_slice %187 {offsets = [4, 0, 0], sizes = [2, 8, 8], strides = [1, 1, 1]} : vector<8x8x8xf32> to vector<2x8x8xf32>
    %191 = vector.extract_strided_slice %187 {offsets = [6, 0, 0], sizes = [2, 8, 8], strides = [1, 1, 1]} : vector<8x8x8xf32> to vector<2x8x8xf32>
    %192 = tpu.concatenate %188, %189, %190, %191 in 2 : vector<2x8x8xf32>, vector<2x8x8xf32>, vector<2x8x8xf32>, vector<2x8x8xf32> -> vector<2x8x32xf32>
    %193 = vector.shape_cast %192 : vector<2x8x32xf32> to vector<16x32xf32>
    %c1_74 = arith.constant 1 : index
    %c0_75 = arith.constant 0 : index
    %c0_76 = arith.constant 0 : index
    %194 = vector.load %arg4[%c1_74, %c0_75, %c0_76] : memref<2x32x32xf32, #tpu.memory_space<vmem>>, vector<1x32x32xf32>
    %195 = vector.shape_cast %194 : vector<1x32x32xf32> to vector<32x32xf32>
    %cst_77 = arith.constant dense<0.000000e+00> : vector<16x32xf32>
    %196 = tpu.matmul %193, %195, %cst_77 {dimension_numbers = #tpu.dot_dimension_numbers<[1], [0], [0], [1], [0, 0, 1, 1], [], []>} : vector<16x32xf32>, vector<32x32xf32>, vector<16x32xf32> -> vector<16x32xf32>
    %197 = arith.addf %125, %196 : vector<16x32xf32>
    %c1_78 = arith.constant 1 : index
    %c0_79 = arith.constant 0 : index
    %c0_80 = arith.constant 0 : index
    %198 = vector.load %arg5[%c1_78, %c0_79, %c0_80] : memref<2x1x32xf32, #tpu.memory_space<vmem>>, vector<1x1x32xf32>
    %199 = vector.shape_cast %198 : vector<1x1x32xf32> to vector<1x32xf32>
    %200 = vector.broadcast %199 : vector<1x32xf32> to vector<16x32xf32>
    %201 = arith.addf %197, %200 : vector<16x32xf32>
    %c1_81 = arith.constant 1 : index
    %c0_82 = arith.constant 0 : index
    %c0_83 = arith.constant 0 : index
    %202 = vector.load %arg6[%c1_81, %c0_82, %c0_83] : memref<2x1x32xf32, #tpu.memory_space<vmem>>, vector<1x1x32xf32>
    %203 = vector.shape_cast %202 : vector<1x1x32xf32> to vector<1x32xf32>
    %c1_84 = arith.constant 1 : index
    %c0_85 = arith.constant 0 : index
    %c0_86 = arith.constant 0 : index
    %204 = vector.load %arg7[%c1_84, %c0_85, %c0_86] : memref<2x1x32xf32, #tpu.memory_space<vmem>>, vector<1x1x32xf32>
    %205 = vector.shape_cast %204 : vector<1x1x32xf32> to vector<1x32xf32>
    %cst_87 = arith.constant dense<0.000000e+00> : vector<16xf32>
    %206 = vector.multi_reduction <add>, %201, %cst_87 [1] : vector<16x32xf32> to vector<16xf32>
    %207 = vector.shape_cast %206 : vector<16xf32> to vector<16x1xf32>
    %cst_88 = arith.constant 3.200000e+01 : f32
    %208 = vector.broadcast %cst_88 : f32 to vector<16x1xf32>
    %209 = arith.divf %207, %208 : vector<16x1xf32>
    %210 = vector.broadcast %209 : vector<16x1xf32> to vector<16x32xf32>
    %211 = arith.subf %201, %210 : vector<16x32xf32>
    %212 = arith.mulf %211, %211 : vector<16x32xf32>
    %cst_89 = arith.constant dense<0.000000e+00> : vector<16xf32>
    %213 = vector.multi_reduction <add>, %212, %cst_89 [1] : vector<16x32xf32> to vector<16xf32>
    %214 = vector.shape_cast %213 : vector<16xf32> to vector<16x1xf32>
    %cst_90 = arith.constant 3.200000e+01 : f32
    %215 = vector.broadcast %cst_90 : f32 to vector<16x1xf32>
    %216 = arith.divf %214, %215 : vector<16x1xf32>
    %217 = vector.broadcast %209 : vector<16x1xf32> to vector<16x32xf32>
    %218 = arith.subf %201, %217 : vector<16x32xf32>
    %cst_91 = arith.constant 9.99999974E-6 : f32
    %219 = vector.broadcast %cst_91 : f32 to vector<16x1xf32>
    %220 = arith.addf %216, %219 : vector<16x1xf32>
    %221 = math.rsqrt %220 : vector<16x1xf32>
    %222 = vector.broadcast %221 : vector<16x1xf32> to vector<16x32xf32>
    %223 = arith.mulf %218, %222 : vector<16x32xf32>
    %224 = vector.broadcast %203 : vector<1x32xf32> to vector<16x32xf32>
    %225 = arith.mulf %223, %224 : vector<16x32xf32>
    %226 = vector.broadcast %205 : vector<1x32xf32> to vector<16x32xf32>
    %227 = arith.addf %225, %226 : vector<16x32xf32>
    %c1_92 = arith.constant 1 : index
    %c0_93 = arith.constant 0 : index
    %c0_94 = arith.constant 0 : index
    %228 = vector.load %arg8[%c1_92, %c0_93, %c0_94] : memref<2x32x128xf32, #tpu.memory_space<vmem>>, vector<1x32x128xf32>
    %229 = vector.shape_cast %228 : vector<1x32x128xf32> to vector<32x128xf32>
    %cst_95 = arith.constant dense<0.000000e+00> : vector<16x128xf32>
    %230 = tpu.matmul %227, %229, %cst_95 {dimension_numbers = #tpu.dot_dimension_numbers<[1], [0], [0], [1], [0, 0, 1, 1], [], []>} : vector<16x32xf32>, vector<32x128xf32>, vector<16x128xf32> -> vector<16x128xf32>
    %c1_96 = arith.constant 1 : index
    %c0_97 = arith.constant 0 : index
    %c0_98 = arith.constant 0 : index
    %231 = vector.load %arg9[%c1_96, %c0_97, %c0_98] : memref<2x1x128xf32, #tpu.memory_space<vmem>>, vector<1x1x128xf32>
    %232 = vector.shape_cast %231 : vector<1x1x128xf32> to vector<1x128xf32>
    %233 = vector.broadcast %232 : vector<1x128xf32> to vector<16x128xf32>
    %234 = arith.addf %230, %233 : vector<16x128xf32>
    %cst_99 = arith.constant 0.000000e+00 : f32
    %235 = vector.broadcast %cst_99 : f32 to vector<16x128xf32>
    %236 = arith.maximumf %234, %235 : vector<16x128xf32>
    %c1_100 = arith.constant 1 : index
    %c0_101 = arith.constant 0 : index
    %c0_102 = arith.constant 0 : index
    %237 = vector.load %arg10[%c1_100, %c0_101, %c0_102] : memref<2x128x32xf32, #tpu.memory_space<vmem>>, vector<1x128x32xf32>
    %238 = vector.shape_cast %237 : vector<1x128x32xf32> to vector<128x32xf32>
    %cst_103 = arith.constant dense<0.000000e+00> : vector<16x32xf32>
    %239 = tpu.matmul %236, %238, %cst_103 {dimension_numbers = #tpu.dot_dimension_numbers<[1], [0], [0], [1], [0, 0, 1, 1], [], []>} : vector<16x128xf32>, vector<128x32xf32>, vector<16x32xf32> -> vector<16x32xf32>
    %240 = arith.addf %201, %239 : vector<16x32xf32>
    %c1_104 = arith.constant 1 : index
    %c0_105 = arith.constant 0 : index
    %c0_106 = arith.constant 0 : index
    %241 = vector.load %arg11[%c1_104, %c0_105, %c0_106] : memref<2x1x32xf32, #tpu.memory_space<vmem>>, vector<1x1x32xf32>
    %242 = vector.shape_cast %241 : vector<1x1x32xf32> to vector<1x32xf32>
    %243 = vector.broadcast %242 : vector<1x32xf32> to vector<16x32xf32>
    %244 = arith.addf %240, %243 : vector<16x32xf32>
    %c0_107 = arith.constant 0 : index
    %c0_108 = arith.constant 0 : index
    %245 = vector.load %arg12[%c0_107, %c0_108] : memref<1x32xf32, #tpu.memory_space<vmem>>, vector<1x32xf32>
    %c0_109 = arith.constant 0 : index
    %c0_110 = arith.constant 0 : index
    %246 = vector.load %arg13[%c0_109, %c0_110] : memref<1x32xf32, #tpu.memory_space<vmem>>, vector<1x32xf32>
    %cst_111 = arith.constant dense<0.000000e+00> : vector<16xf32>
    %247 = vector.multi_reduction <add>, %244, %cst_111 [1] : vector<16x32xf32> to vector<16xf32>
    %248 = vector.shape_cast %247 : vector<16xf32> to vector<16x1xf32>
    %cst_112 = arith.constant 3.200000e+01 : f32
    %249 = vector.broadcast %cst_112 : f32 to vector<16x1xf32>
    %250 = arith.divf %248, %249 : vector<16x1xf32>
    %251 = vector.broadcast %250 : vector<16x1xf32> to vector<16x32xf32>
    %252 = arith.subf %244, %251 : vector<16x32xf32>
    %253 = arith.mulf %252, %252 : vector<16x32xf32>
    %cst_113 = arith.constant dense<0.000000e+00> : vector<16xf32>
    %254 = vector.multi_reduction <add>, %253, %cst_113 [1] : vector<16x32xf32> to vector<16xf32>
    %255 = vector.shape_cast %254 : vector<16xf32> to vector<16x1xf32>
    %cst_114 = arith.constant 3.200000e+01 : f32
    %256 = vector.broadcast %cst_114 : f32 to vector<16x1xf32>
    %257 = arith.divf %255, %256 : vector<16x1xf32>
    %258 = vector.broadcast %250 : vector<16x1xf32> to vector<16x32xf32>
    %259 = arith.subf %244, %258 : vector<16x32xf32>
    %cst_115 = arith.constant 9.99999974E-6 : f32
    %260 = vector.broadcast %cst_115 : f32 to vector<16x1xf32>
    %261 = arith.addf %257, %260 : vector<16x1xf32>
    %262 = math.rsqrt %261 : vector<16x1xf32>
    %263 = vector.broadcast %262 : vector<16x1xf32> to vector<16x32xf32>
    %264 = arith.mulf %259, %263 : vector<16x32xf32>
    %265 = vector.broadcast %245 : vector<1x32xf32> to vector<16x32xf32>
    %266 = arith.mulf %264, %265 : vector<16x32xf32>
    %267 = vector.broadcast %246 : vector<1x32xf32> to vector<16x32xf32>
    %268 = arith.addf %266, %267 : vector<16x32xf32>
    %c0_116 = arith.constant 0 : index
    %c0_117 = arith.constant 0 : index
    %269 = vector.load %arg14[%c0_116, %c0_117] : memref<32x128xf32, #tpu.memory_space<vmem>>, vector<32x128xf32>
    %cst_118 = arith.constant dense<0.000000e+00> : vector<16x128xf32>
    %270 = tpu.matmul %268, %269, %cst_118 {dimension_numbers = #tpu.dot_dimension_numbers<[1], [0], [0], [1], [0, 0, 1, 1], [], []>} : vector<16x32xf32>, vector<32x128xf32>, vector<16x128xf32> -> vector<16x128xf32>
    %c0_119 = arith.constant 0 : index
    %c0_120 = arith.constant 0 : index
    %271 = vector.load %arg15[%c0_119, %c0_120] : memref<1x128xf32, #tpu.memory_space<vmem>>, vector<1x128xf32>
    %272 = vector.broadcast %271 : vector<1x128xf32> to vector<16x128xf32>
    %273 = arith.addf %270, %272 : vector<16x128xf32>
    %c0_121 = arith.constant 0 : index
    %c0_122 = arith.constant 0 : index
    %274 = vector.load %arg16[%c0_121, %c0_122] : memref<16x128xf32, #tpu.memory_space<vmem>>, vector<16x128xf32>
    tpu.vector_store %arg16[%c0_121, %c0_122], %273 {strides = array<i32>} : memref<16x128xf32, #tpu.memory_space<vmem>>, vector<16x128xf32>,
    return
  }
}

</mosaic_0001>

<llo_original>
// kernel: tpu_custom_call.1
$region0: #{tpu_custom_call.1}
  #allocation0 [shape = 'u32[]', space=smem, size = 0x4, offset = 0x4, fixed_abs, tag = 'smem constant byte address 0x4 - core index']
  #allocation1 [shape = 'u32[144,128]{1,0:T(1,128)}', space=vmem, size = 0x12000, scoped, tag = 'internal scratch']
  %s0 = inlined_call_operand.vmem [shape: f32[16,32], index: 0, kind: input, shape index: {}]
  %s1 = inlined_call_operand.vmem [shape: f32[2,1,32], index: 1, kind: input, shape index: {}]
  %s2 = inlined_call_operand.vmem [shape: f32[2,1,32], index: 2, kind: input, shape index: {}]
  %s3 = inlined_call_operand.vmem [shape: f32[2,32,96], index: 3, kind: input, shape index: {}]
  %s4 = inlined_call_operand.vmem [shape: f32[2,32,32], index: 4, kind: input, shape index: {}]
  %s5 = inlined_call_operand.vmem [shape: f32[2,1,32], index: 5, kind: input, shape index: {}]
  %s6 = inlined_call_operand.vmem [shape: f32[2,1,32], index: 6, kind: input, shape index: {}]
  %s7 = inlined_call_operand.vmem [shape: f32[2,1,32], index: 7, kind: input, shape index: {}]
  %s8 = inlined_call_operand.vmem [shape: f32[2,32,128], index: 8, kind: input, shape index: {}]
  %s9 = inlined_call_operand.vmem [shape: f32[2,1,128], index: 9, kind: input, shape index: {}]
  %s10 = inlined_call_operand.vmem [shape: f32[2,128,32], index: 10, kind: input, shape index: {}]
  %s11 = inlined_call_operand.vmem [shape: f32[2,1,32], index: 11, kind: input, shape index: {}]
  %s12 = inlined_call_operand.vmem [shape: f32[1,32], index: 12, kind: input, shape index: {}]
  %s13 = inlined_call_operand.vmem [shape: f32[1,32], index: 13, kind: input, shape index: {}]
  %s14 = inlined_call_operand.vmem [shape: f32[32,128], index: 14, kind: input, shape index: {}]
  %s15 = inlined_call_operand.vmem [shape: f32[1,128], index: 15, kind: input, shape index: {}]
  %s16 = inlined_call_operand.hbm [shape: f32[16,128], index: 16, kind: output, shape index: {}]
  %s17 = sld [smem:[#allocation0]]
  $region74: #{tpu_custom_call.1} parent=0
    _
  %s19 = ssub.s32 1, %s17
  %s20 = scalar_select 0, %s19, %s17
  $region1: #{tpu_custom_call.1} parent=0
    #allocation2 [shape = 'u8[8192]{0}', space=vmem, size = 0x2000, scoped, tag = 'output window, operand 0, single buffered']
    #allocation3 [shape = 's32[1]{0}', space=sflag, size = 0x4, scoped, tag = 'scoped memory for tpu_custom_call.1']
    %21 = vsyncpa [#allocation3], 0
    // Predicated region
    $region2: #{tpu_custom_call.1} parent=1 // pred_check
      _
    $region3: #{tpu_custom_call.1} parent=1 // pred_check_branch
      %23 = sbr.rel (0) target = $region5
    $region4: #{tpu_custom_call.1} parent=1 // pred_region
      _
    $region5: #{tpu_custom_call.1} parent=1 // pred_fallthru
      _
    // Predicated region
    $region6: #{tpu_custom_call.1} parent=1 // pred_check
      _
    $region7: #{tpu_custom_call.1} parent=1 // pred_check_branch
      %25 = sbr.rel (0) target = $region9
    $region8: #{tpu_custom_call.1} parent=1 // pred_region
      _
    $region9: #{tpu_custom_call.1} parent=1 // pred_fallthru
      _
    // Predicated region
    $region10: #{tpu_custom_call.1} parent=1 // pred_check
      _
    $region11: #{tpu_custom_call.1} parent=1 // pred_check_branch
      %27 = sbr.rel (0) target = $region13
    $region12: #{tpu_custom_call.1} parent=1 // pred_region
      _
    $region13: #{tpu_custom_call.1} parent=1 // pred_fallthru
      _
    // Predicated region
    $region14: #{tpu_custom_call.1} parent=1 // pred_check
      _
    $region15: #{tpu_custom_call.1} parent=1 // pred_check_branch
      %29 = sbr.rel (0) target = $region17
    $region16: #{tpu_custom_call.1} parent=1 // pred_region
      _
    $region17: #{tpu_custom_call.1} parent=1 // pred_fallthru
      _
    // Predicated region
    $region18: #{tpu_custom_call.1} parent=1 // pred_check
      _
    $region19: #{tpu_custom_call.1} parent=1 // pred_check_branch
      %31 = sbr.rel (0) target = $region21
    $region20: #{tpu_custom_call.1} parent=1 // pred_region
      _
    $region21: #{tpu_custom_call.1} parent=1 // pred_fallthru
      _
    // Predicated region
    $region22: #{tpu_custom_call.1} parent=1 // pred_check
      _
    $region23: #{tpu_custom_call.1} parent=1 // pred_check_branch
      %33 = sbr.rel (0) target = $region25
    $region24: #{tpu_custom_call.1} parent=1 // pred_region
      _
    $region25: #{tpu_custom_call.1} parent=1 // pred_fallthru
      _
    // Predicated region
    $region26: #{tpu_custom_call.1} parent=1 // pred_check
      _
    $region27: #{tpu_custom_call.1} parent=1 // pred_check_branch
      %35 = sbr.rel (0) target = $region29
    $region28: #{tpu_custom_call.1} parent=1 // pred_region
      _
    $region29: #{tpu_custom_call.1} parent=1 // pred_fallthru
      _
    // Predicated region
    $region30: #{tpu_custom_call.1} parent=1 // pred_check
      _
    $region31: #{tpu_custom_call.1} parent=1 // pred_check_branch
      %37 = sbr.rel (0) target = $region33
    $region32: #{tpu_custom_call.1} parent=1 // pred_region
      _
    $region33: #{tpu_custom_call.1} parent=1 // pred_fallthru
      _
    // Predicated region
    $region34: #{tpu_custom_call.1} parent=1 // pred_check
      _
    $region35: #{tpu_custom_call.1} parent=1 // pred_check_branch
      %39 = sbr.rel (0) target = $region37
    $region36: #{tpu_custom_call.1} parent=1 // pred_region
      _
    $region37: #{tpu_custom_call.1} parent=1 // pred_fallthru
      _
    // Predicated region
    $region38: #{tpu_custom_call.1} parent=1 // pred_check
      _
    $region39: #{tpu_custom_call.1} parent=1 // pred_check_branch
      %41 = sbr.rel (0) target = $region41
    $region40: #{tpu_custom_call.1} parent=1 // pred_region
      _
    $region41: #{tpu_custom_call.1} parent=1 // pred_fallthru
      _
    // Predicated region
    $region42: #{tpu_custom_call.1} parent=1 // pred_check
      _
    $region43: #{tpu_custom_call.1} parent=1 // pred_check_branch
      %43 = sbr.rel (0) target = $region45
    $region44: #{tpu_custom_call.1} parent=1 // pred_region
      _
    $region45: #{tpu_custom_call.1} parent=1 // pred_fallthru
      _
    // Predicated region
    $region46: #{tpu_custom_call.1} parent=1 // pred_check
      _
    $region47: #{tpu_custom_call.1} parent=1 // pred_check_branch
      %45 = sbr.rel (0) target = $region49
    $region48: #{tpu_custom_call.1} parent=1 // pred_region
      _
    $region49: #{tpu_custom_call.1} parent=1 // pred_fallthru
      _
    // Predicated region
    $region50: #{tpu_custom_call.1} parent=1 // pred_check
      _
    $region51: #{tpu_custom_call.1} parent=1 // pred_check_branch
      %47 = sbr.rel (0) target = $region53
    $region52: #{tpu_custom_call.1} parent=1 // pred_region
      _
    $region53: #{tpu_custom_call.1} parent=1 // pred_fallthru
      _
    // Predicated region
    $region54: #{tpu_custom_call.1} parent=1 // pred_check
      _
    $region55: #{tpu_custom_call.1} parent=1 // pred_check_branch
      %49 = sbr.rel (0) target = $region57
    $region56: #{tpu_custom_call.1} parent=1 // pred_region
      _
    $region57: #{tpu_custom_call.1} parent=1 // pred_fallthru
      _
    // Predicated region
    $region58: #{tpu_custom_call.1} parent=1 // pred_check
      _
    $region59: #{tpu_custom_call.1} parent=1 // pred_check_branch
      %51 = sbr.rel (0) target = $region61
    $region60: #{tpu_custom_call.1} parent=1 // pred_region
      _
    $region61: #{tpu_custom_call.1} parent=1 // pred_fallthru
      _
    // Predicated region
    $region62: #{tpu_custom_call.1} parent=1 // pred_check
      _
    $region63: #{tpu_custom_call.1} parent=1 // pred_check_branch
      %53 = sbr.rel (0) target = $region65
    $region64: #{tpu_custom_call.1} parent=1 // pred_region
      _
    $region65: #{tpu_custom_call.1} parent=1 // pred_fallthru
      _
    %v54 = vlaneseq
    %v55 = vshrl.u32 %v54, 7
    %v56 = vlaneseq
    %v57 = vand.u32 %v56, 127
    %vm58 = vcmp.le.s32.totalorder %v57, %v55
    %v59 = vsel %vm58, 0.0, -1e+30
    %v60 = vld [vmem:[%s0] sm:$0xff]
    %v61 = vld [vmem:[%s0 + $0x8] sm:$0xff]
    %v62 = vld [vmem:[%s1] sm:$0x1]
    %v63 = vld [vmem:[%s2] sm:$0x1]
    %vm64 = vcmask 261120
    %v65 = vsel %vm64, %v60, 0.0
    %66 = vadd.xlane.f32.xlu0 %v65
    %v67 = vpop.xlane.xlu0 %66
    %v68 = vsel %vm64, %v61, 0.0
    %69 = vadd.xlane.f32.xlu0 %v68
    %v70 = vpop.xlane.xlu0 %69
    %v71 = vrcp.pop 32.0
    %v72 = vmul.f32 %v67, %v71
    %v73 = vmul.f32 %v70, %v71
    %v74 = vsub.f32 %v60, %v72
    %v75 = vsub.f32 %v61, %v73
    %v76 = vmul.f32 %v74, %v74
    %v77 = vmul.f32 %v75, %v75
    %v78 = vsel %vm64, %v76, 0.0
    %79 = vadd.xlane.f32.xlu0 %v78
    %v80 = vpop.xlane.xlu0 %79
    %v81 = vsel %vm64, %v77, 0.0
    %82 = vadd.xlane.f32.xlu0 %v81
    %v83 = vpop.xlane.xlu0 %82
    %v84 = vmul.f32 %v80, %v71
    %v85 = vmul.f32 %v83, %v71
    %v86 = vadd.f32 %v84, 1e-05
    %v87 = vadd.f32 %v85, 1e-05
    %v88 = vrsqrt.pop %v86
    %v89 = vrsqrt.pop %v87
    %v90 = vmul.f32 %v74, %v88
    %v91 = vmul.f32 %v75, %v89
    %v93 = vlaneseq
    %v94 = vshrl.u32 %v93, 7
    %v95 = vsub.s32 0, %v94
    %v96 = vrot.slane %v62, %v95
    %v98 = vmul.f32 %v90, %v96
    %v99 = vmul.f32 %v91, %v96
    %v101 = vlaneseq
    %v102 = vshrl.u32 %v101, 7
    %v103 = vsub.s32 0, %v102
    %v104 = vrot.slane %v63, %v103
    %v106 = vadd.f32 %v98, %v104
    %v107 = vadd.f32 %v99, %v104
    %v108 = vld [vmem:[%s3] sm:$0xff]
    %v109 = vld [vmem:[%s3 + $0x8] sm:$0xff]
    %v110 = vld [vmem:[%s3 + $0x10] sm:$0xff]
    %v111 = vld [vmem:[%s3 + $0x18] sm:$0xff]
    %v113 = vsel %vm64, %v106, 0
    %v116 = vsel %vm64, %v107, 0
    %118 = vmatprep.subr.mxu0 0.0
    %119 = vmatpush1.msra.mxu0 0.0
    %120 = vmatprep.subr.mxu0 0.0
    %121 = vmatpush1.msra.mxu0 0.0
    %122 = vmatprep.subr.mxu0 0.0
    %123 = vmatpush1.msra.mxu0 0.0
    %124 = vmatprep.subr.mxu0 0.0
    %125 = vmatpush1.msra.mxu0 0.0
    %126 = vmatprep.subr.mxu0 0.0
    %127 = vmatpush1.msra.mxu0 0.0
    %128 = vmatprep.subr.mxu0 0.0
    %129 = vmatpush1.msra.mxu0 0.0
    %130 = vmatprep.subr.mxu0 0.0
    %131 = vmatpush1.msra.mxu0 0.0
    %132 = vmatprep.subr.mxu0 0.0
    %133 = vmatpush1.msra.mxu0 0.0
    %134 = vmatprep.subr.mxu0 0.0
    %135 = vmatpush1.msra.mxu0 0.0
    %136 = vmatprep.subr.mxu0 0.0
    %137 = vmatpush1.msra.mxu0 0.0
    %138 = vmatprep.subr.mxu0 0.0
    %139 = vmatpush1.msra.mxu0 0.0
    %140 = vmatprep.subr.mxu0 0.0
    %141 = vmatpush1.msra.mxu0 0.0
    %142 = vmatprep.subr.mxu0 0.0
    %143 = vmatpush1.msra.mxu0 %v111
    %144 = vmatprep.subr.mxu0 0.0
    %145 = vmatpush1.msra.mxu0 %v110
    %146 = vmatprep.subr.mxu0 0.0
    %147 = vmatpush1.msra.mxu0 %v109
    %148 = vmatprep.subr.mxu0 0.0
    %149 = vmatpush1.msra.mxu0 %v108
    %150 = vmatprep.subr.mxu0 0.0
    %151 = vmatpush2.msra.mxu0 0.0
    %152 = vmatprep.subr.mxu0 0.0
    %153 = vmatpush2.msra.mxu0 0.0
    %154 = vmatprep.subr.mxu0 0.0
    %155 = vmatpush2.msra.mxu0 0.0
    %156 = vmatprep.subr.mxu0 0.0
    %157 = vmatpush2.msra.mxu0 0.0
    %158 = vmatprep.subr.mxu0 0.0
    %159 = vmatpush2.msra.mxu0 0.0
    %160 = vmatprep.subr.mxu0 0.0
    %161 = vmatpush2.msra.mxu0 0.0
    %162 = vmatprep.subr.mxu0 0.0
    %163 = vmatpush2.msra.mxu0 0.0
    %164 = vmatprep.subr.mxu0 0.0
    %165 = vmatpush2.msra.mxu0 0.0
    %166 = vmatprep.subr.mxu0 0.0
    %167 = vmatpush2.msra.mxu0 0.0
    %168 = vmatprep.subr.mxu0 0.0
    %169 = vmatpush2.msra.mxu0 0.0
    %170 = vmatprep.subr.mxu0 0.0
    %171 = vmatpush2.msra.mxu0 0.0
    %172 = vmatprep.subr.mxu0 0.0
    %173 = vmatpush2.msra.mxu0 0.0
    %174 = vmatprep.subr.mxu0 0.0
    %175 = vmatpush2.msra.mxu0 0.0
    %176 = vmatprep.subr.mxu0 0.0
    %177 = vmatpush2.msra.mxu0 0.0
    %178 = vmatprep.subr.mxu0 0.0
    %179 = vmatpush2.msra.mxu0 0.0
    %180 = vmatprep.subr.mxu0 0.0
    %181 = vmatpush2.msra.mxu0 0.0
    %182 = vmatprep.mubr.f32.mxu0 0.0
    %183 = vmatmul.mubr.f32.gmra.mxu0 %v113
    %v184 = vpop.f32.mrf.mxu0
    %v185 = vadd.f32 0.0, %v184
    %v186 = vpop.f32.mrf.mxu0
    %187 = vmatprep.mubr.f32.mxu0 0.0
    %188 = vmatmul.mubr.f32.gmra.mxu0 %v116
    %v189 = vpop.f32.mrf.mxu0
    %v190 = vadd.f32 0.0, %v189
    %v191 = vpop.f32.mrf.mxu0
    %192 = vdwg.mxu0
    %195 = vrot.lane.b32.xlu0 %v185, 120
    %v196 = vpop.permute.xlu0 %195
    %197 = vrot.lane.b32.xlu0 %v190, 120
    %v198 = vpop.permute.xlu0 %197
    %199 = vrot.lane.b32.xlu0 %v185, 112
    %v200 = vpop.permute.xlu0 %199
    %201 = vrot.lane.b32.xlu0 %v190, 112
    %v202 = vpop.permute.xlu0 %201
    %203 = vrot.lane.b32.xlu0 %v185, 104
    %v204 = vpop.permute.xlu0 %203
    %205 = vrot.lane.b32.xlu0 %v190, 104
    %v206 = vpop.permute.xlu0 %205
    %207 = vrot.lane.b32.xlu0 %v185, 96
    %v208 = vpop.permute.xlu0 %207
    %vm209 = vcmask 64512
    %v210 = vsel %vm209, %v185, 0
    %v212 = vsel %vm209, %v208, 0
    %214 = vmatprep.subr.mxu0 0.0
    %215 = vmatpush1.xpose.msra.mxu0 0.0
    %216 = vmatprep.subr.mxu0 0.0
    %217 = vmatpush1.xpose.msra.mxu0 0.0
    %218 = vmatprep.subr.mxu0 0.0
    %219 = vmatpush1.xpose.msra.mxu0 0.0
    %220 = vmatprep.subr.mxu0 0.0
    %221 = vmatpush1.xpose.msra.mxu0 0.0
    %222 = vmatprep.subr.mxu0 0.0
    %223 = vmatpush1.xpose.msra.mxu0 0.0
    %224 = vmatprep.subr.mxu0 0.0
    %225 = vmatpush1.xpose.msra.mxu0 0.0
    %226 = vmatprep.subr.mxu0 0.0
    %227 = vmatpush1.xpose.msra.mxu0 0.0
    %228 = vmatprep.subr.mxu0 0.0
    %229 = vmatpush1.xpose.msra.mxu0 0.0
    %230 = vmatprep.subr.mxu0 0.0
    %231 = vmatpush1.xpose.msra.mxu0 0.0
    %232 = vmatprep.subr.mxu0 0.0
    %233 = vmatpush1.xpose.msra.mxu0 0.0
    %234 = vmatprep.subr.mxu0 0.0
    %235 = vmatpush1.xpose.msra.mxu0 0.0
    %236 = vmatprep.subr.mxu0 0.0
    %237 = vmatpush1.xpose.msra.mxu0 0.0
    %238 = vmatprep.subr.mxu0 0.0
    %239 = vmatpush1.xpose.msra.mxu0 0.0
    %240 = vmatprep.subr.mxu0 0.0
    %241 = vmatpush1.xpose.msra.mxu0 0.0
    %242 = vmatprep.subr.mxu0 0.0
    %243 = vmatpush1.xpose.msra.mxu0 0.0
    %244 = vmatprep.subr.mxu0 0.0
    %245 = vmatpush1.xpose.msra.mxu0 %v212
    %246 = vmatprep.subr.mxu0 0.0
    %247 = vmatpush2.xpose.msra.mxu0 0.0
    %248 = vmatprep.subr.mxu0 0.0
    %249 = vmatpush2.xpose.msra.mxu0 0.0
    %250 = vmatprep.subr.mxu0 0.0
    %251 = vmatpush2.xpose.msra.mxu0 0.0
    %252 = vmatprep.subr.mxu0 0.0
    %253 = vmatpush2.xpose.msra.mxu0 0.0
    %254 = vmatprep.subr.mxu0 0.0
    %255 = vmatpush2.xpose.msra.mxu0 0.0
    %256 = vmatprep.subr.mxu0 0.0
    %257 = vmatpush2.xpose.msra.mxu0 0.0
    %258 = vmatprep.subr.mxu0 0.0
    %259 = vmatpush2.xpose.msra.mxu0 0.0
    %260 = vmatprep.subr.mxu0 0.0
    %261 = vmatpush2.xpose.msra.mxu0 0.0
    %262 = vmatprep.subr.mxu0 0.0
    %263 = vmatpush2.xpose.msra.mxu0 0.0
    %264 = vmatprep.subr.mxu0 0.0
    %265 = vmatpush2.xpose.msra.mxu0 0.0
    %266 = vmatprep.subr.mxu0 0.0
    %267 = vmatpush2.xpose.msra.mxu0 0.0
    %268 = vmatprep.subr.mxu0 0.0
    %269 = vmatpush2.xpose.msra.mxu0 0.0
    %270 = vmatprep.subr.mxu0 0.0
    %271 = vmatpush2.xpose.msra.mxu0 0.0
    %272 = vmatprep.subr.mxu0 0.0
    %273 = vmatpush2.xpose.msra.mxu0 0.0
    %274 = vmatprep.subr.mxu0 0.0
    %275 = vmatpush2.xpose.msra.mxu0 0.0
    %276 = vmatprep.subr.mxu0 0.0
    %277 = vmatpush2.xpose.msra.mxu0 0.0
    %278 = vmatprep.mubr.f32.mxu0 0.0
    %279 = vmatmul.mubr.f32.gmra.mxu0 %v210
    %v280 = vpop.f32.mrf.mxu0
    %v281 = vadd.f32 0.0, %v280
    %v282 = vpop.f32.mrf.mxu0
    %283 = vdwg.mxu0
    %284 = vrot.lane.b32.xlu0 %v190, 96
    %v285 = vpop.permute.xlu0 %284
    %v286 = vsel %vm209, %v190, 0
    %v288 = vsel %vm209, %v285, 0
    %290 = vmatprep.subr.mxu0 0.0
    %291 = vmatpush1.xpose.msra.mxu0 0.0
    %292 = vmatprep.subr.mxu0 0.0
    %293 = vmatpush1.xpose.msra.mxu0 0.0
    %294 = vmatprep.subr.mxu0 0.0
    %295 = vmatpush1.xpose.msra.mxu0 0.0
    %296 = vmatprep.subr.mxu0 0.0
    %297 = vmatpush1.xpose.msra.mxu0 0.0
    %298 = vmatprep.subr.mxu0 0.0
    %299 = vmatpush1.xpose.msra.mxu0 0.0
    %300 = vmatprep.subr.mxu0 0.0
    %301 = vmatpush1.xpose.msra.mxu0 0.0
    %302 = vmatprep.subr.mxu0 0.0
    %303 = vmatpush1.xpose.msra.mxu0 0.0
    %304 = vmatprep.subr.mxu0 0.0
    %305 = vmatpush1.xpose.msra.mxu0 0.0
    %306 = vmatprep.subr.mxu0 0.0
    %307 = vmatpush1.xpose.msra.mxu0 0.0
    %308 = vmatprep.subr.mxu0 0.0
    %309 = vmatpush1.xpose.msra.mxu0 0.0
    %310 = vmatprep.subr.mxu0 0.0
    %311 = vmatpush1.xpose.msra.mxu0 0.0
    %312 = vmatprep.subr.mxu0 0.0
    %313 = vmatpush1.xpose.msra.mxu0 0.0
    %314 = vmatprep.subr.mxu0 0.0
    %315 = vmatpush1.xpose.msra.mxu0 0.0
    %316 = vmatprep.subr.mxu0 0.0
    %317 = vmatpush1.xpose.msra.mxu0 0.0
    %318 = vmatprep.subr.mxu0 0.0
    %319 = vmatpush1.xpose.msra.mxu0 0.0
    %320 = vmatprep.subr.mxu0 0.0
    %321 = vmatpush1.xpose.msra.mxu0 %v288
    %322 = vmatprep.subr.mxu0 0.0
    %323 = vmatpush2.xpose.msra.mxu0 0.0
    %324 = vmatprep.subr.mxu0 0.0
    %325 = vmatpush2.xpose.msra.mxu0 0.0
    %326 = vmatprep.subr.mxu0 0.0
    %327 = vmatpush2.xpose.msra.mxu0 0.0
    %328 = vmatprep.subr.mxu0 0.0
    %329 = vmatpush2.xpose.msra.mxu0 0.0
    %330 = vmatprep.subr.mxu0 0.0
    %331 = vmatpush2.xpose.msra.mxu0 0.0
    %332 = vmatprep.subr.mxu0 0.0
    %333 = vmatpush2.xpose.msra.mxu0 0.0
    %334 = vmatprep.subr.mxu0 0.0
    %335 = vmatpush2.xpose.msra.mxu0 0.0
    %336 = vmatprep.subr.mxu0 0.0
    %337 = vmatpush2.xpose.msra.mxu0 0.0
    %338 = vmatprep.subr.mxu0 0.0
    %339 = vmatpush2.xpose.msra.mxu0 0.0
    %340 = vmatprep.subr.mxu0 0.0
    %341 = vmatpush2.xpose.msra.mxu0 0.0
    %342 = vmatprep.subr.mxu0 0.0
    %343 = vmatpush2.xpose.msra.mxu0 0.0
    %344 = vmatprep.subr.mxu0 0.0
    %345 = vmatpush2.xpose.msra.mxu0 0.0
    %346 = vmatprep.subr.mxu0 0.0
    %347 = vmatpush2.xpose.msra.mxu0 0.0
    %348 = vmatprep.subr.mxu0 0.0
    %349 = vmatpush2.xpose.msra.mxu0 0.0
    %350 = vmatprep.subr.mxu0 0.0
    %351 = vmatpush2.xpose.msra.mxu0 0.0
    %352 = vmatprep.subr.mxu0 0.0
    %353 = vmatpush2.xpose.msra.mxu0 0.0
    %354 = vmatprep.mubr.f32.mxu0 0.0
    %355 = vmatmul.mubr.f32.gmra.mxu0 %v286
    %v356 = vpop.f32.mrf.mxu0
    %v357 = vadd.f32 0.0, %v356
    %v358 = vpop.f32.mrf.mxu0
    %359 = vdwg.mxu0
    %360 = vrot.lane.b32.xlu0 %v196, 96
    %v361 = vpop.permute.xlu0 %360
    %v362 = vsel %vm209, %v196, 0
    %v364 = vsel %vm209, %v361, 0
    %366 = vmatprep.subr.mxu0 0.0
    %367 = vmatpush1.xpose.msra.mxu0 0.0
    %368 = vmatprep.subr.mxu0 0.0
    %369 = vmatpush1.xpose.msra.mxu0 0.0
    %370 = vmatprep.subr.mxu0 0.0
    %371 = vmatpush1.xpose.msra.mxu0 0.0
    %372 = vmatprep.subr.mxu0 0.0
    %373 = vmatpush1.xpose.msra.mxu0 0.0
    %374 = vmatprep.subr.mxu0 0.0
    %375 = vmatpush1.xpose.msra.mxu0 0.0
    %376 = vmatprep.subr.mxu0 0.0
    %377 = vmatpush1.xpose.msra.mxu0 0.0
    %378 = vmatprep.subr.mxu0 0.0
    %379 = vmatpush1.xpose.msra.mxu0 0.0
    %380 = vmatprep.subr.mxu0 0.0
    %381 = vmatpush1.xpose.msra.mxu0 0.0
    %382 = vmatprep.subr.mxu0 0.0
    %383 = vmatpush1.xpose.msra.mxu0 0.0
    %384 = vmatprep.subr.mxu0 0.0
    %385 = vmatpush1.xpose.msra.mxu0 0.0
    %386 = vmatprep.subr.mxu0 0.0
    %387 = vmatpush1.xpose.msra.mxu0 0.0
    %388 = vmatprep.subr.mxu0 0.0
    %389 = vmatpush1.xpose.msra.mxu0 0.0
    %390 = vmatprep.subr.mxu0 0.0
    %391 = vmatpush1.xpose.msra.mxu0 0.0
    %392 = vmatprep.subr.mxu0 0.0
    %393 = vmatpush1.xpose.msra.mxu0 0.0
    %394 = vmatprep.subr.mxu0 0.0
    %395 = vmatpush1.xpose.msra.mxu0 0.0
    %396 = vmatprep.subr.mxu0 0.0
    %397 = vmatpush1.xpose.msra.mxu0 %v364
    %398 = vmatprep.subr.mxu0 0.0
    %399 = vmatpush2.xpose.msra.mxu0 0.0
    %400 = vmatprep.subr.mxu0 0.0
    %401 = vmatpush2.xpose.msra.mxu0 0.0
    %402 = vmatprep.subr.mxu0 0.0
    %403 = vmatpush2.xpose.msra.mxu0 0.0
    %404 = vmatprep.subr.mxu0 0.0
    %405 = vmatpush2.xpose.msra.mxu0 0.0
    %406 = vmatprep.subr.mxu0 0.0
    %407 = vmatpush2.xpose.msra.mxu0 0.0
    %408 = vmatprep.subr.mxu0 0.0
    %409 = vmatpush2.xpose.msra.mxu0 0.0
    %410 = vmatprep.subr.mxu0 0.0
    %411 = vmatpush2.xpose.msra.mxu0 0.0
    %412 = vmatprep.subr.mxu0 0.0
    %413 = vmatpush2.xpose.msra.mxu0 0.0
    %414 = vmatprep.subr.mxu0 0.0
    %415 = vmatpush2.xpose.msra.mxu0 0.0
    %416 = vmatprep.subr.mxu0 0.0
    %417 = vmatpush2.xpose.msra.mxu0 0.0
    %418 = vmatprep.subr.mxu0 0.0
    %419 = vmatpush2.xpose.msra.mxu0 0.0
    %420 = vmatprep.subr.mxu0 0.0
    %421 = vmatpush2.xpose.msra.mxu0 0.0
    %422 = vmatprep.subr.mxu0 0.0
    %423 = vmatpush2.xpose.msra.mxu0 0.0
    %424 = vmatprep.subr.mxu0 0.0
    %425 = vmatpush2.xpose.msra.mxu0 0.0
    %426 = vmatprep.subr.mxu0 0.0
    %427 = vmatpush2.xpose.msra.mxu0 0.0
    %428 = vmatprep.subr.mxu0 0.0
    %429 = vmatpush2.xpose.msra.mxu0 0.0
    %430 = vmatprep.mubr.f32.mxu0 0.0
    %431 = vmatmul.mubr.f32.gmra.mxu0 %v362
    %v432 = vpop.f32.mrf.mxu0
    %v433 = vadd.f32 0.0, %v432
    %v434 = vpop.f32.mrf.mxu0
    %435 = vdwg.mxu0
    %436 = vrot.lane.b32.xlu0 %v198, 96
    %v437 = vpop.permute.xlu0 %436
    %v438 = vsel %vm209, %v198, 0
    %v440 = vsel %vm209, %v437, 0
    %442 = vmatprep.subr.mxu0 0.0
    %443 = vmatpush1.xpose.msra.mxu0 0.0
    %444 = vmatprep.subr.mxu0 0.0
    %445 = vmatpush1.xpose.msra.mxu0 0.0
    %446 = vmatprep.subr.mxu0 0.0
    %447 = vmatpush1.xpose.msra.mxu0 0.0
    %448 = vmatprep.subr.mxu0 0.0
    %449 = vmatpush1.xpose.msra.mxu0 0.0
    %450 = vmatprep.subr.mxu0 0.0
    %451 = vmatpush1.xpose.msra.mxu0 0.0
    %452 = vmatprep.subr.mxu0 0.0
    %453 = vmatpush1.xpose.msra.mxu0 0.0
    %454 = vmatprep.subr.mxu0 0.0
    %455 = vmatpush1.xpose.msra.mxu0 0.0
    %456 = vmatprep.subr.mxu0 0.0
    %457 = vmatpush1.xpose.msra.mxu0 0.0
    %458 = vmatprep.subr.mxu0 0.0
    %459 = vmatpush1.xpose.msra.mxu0 0.0
    %460 = vmatprep.subr.mxu0 0.0
    %461 = vmatpush1.xpose.msra.mxu0 0.0
    %462 = vmatprep.subr.mxu0 0.0
    %463 = vmatpush1.xpose.msra.mxu0 0.0
    %464 = vmatprep.subr.mxu0 0.0
    %465 = vmatpush1.xpose.msra.mxu0 0.0
    %466 = vmatprep.subr.mxu0 0.0
    %467 = vmatpush1.xpose.msra.mxu0 0.0
    %468 = vmatprep.subr.mxu0 0.0
    %469 = vmatpush1.xpose.msra.mxu0 0.0
    %470 = vmatprep.subr.mxu0 0.0
    %471 = vmatpush1.xpose.msra.mxu0 0.0
    %472 = vmatprep.subr.mxu0 0.0
    %473 = vmatpush1.xpose.msra.mxu0 %v440
    %474 = vmatprep.subr.mxu0 0.0
    %475 = vmatpush2.xpose.msra.mxu0 0.0
    %476 = vmatprep.subr.mxu0 0.0
    %477 = vmatpush2.xpose.msra.mxu0 0.0
    %478 = vmatprep.subr.mxu0 0.0
    %479 = vmatpush2.xpose.msra.mxu0 0.0
    %480 = vmatprep.subr.mxu0 0.0
    %481 = vmatpush2.xpose.msra.mxu0 0.0
    %482 = vmatprep.subr.mxu0 0.0
    %483 = vmatpush2.xpose.msra.mxu0 0.0
    %484 = vmatprep.subr.mxu0 0.0
    %485 = vmatpush2.xpose.msra.mxu0 0.0
    %486 = vmatprep.subr.mxu0 0.0
    %487 = vmatpush2.xpose.msra.mxu0 0.0
    %488 = vmatprep.subr.mxu0 0.0
    %489 = vmatpush2.xpose.msra.mxu0 0.0
    %490 = vmatprep.subr.mxu0 0.0
    %491 = vmatpush2.xpose.msra.mxu0 0.0
    %492 = vmatprep.subr.mxu0 0.0
    %493 = vmatpush2.xpose.msra.mxu0 0.0
    %494 = vmatprep.subr.mxu0 0.0
    %495 = vmatpush2.xpose.msra.mxu0 0.0
    %496 = vmatprep.subr.mxu0 0.0
    %497 = vmatpush2.xpose.msra.mxu0 0.0
    %498 = vmatprep.subr.mxu0 0.0
    %499 = vmatpush2.xpose.msra.mxu0 0.0
    %500 = vmatprep.subr.mxu0 0.0
    %501 = vmatpush2.xpose.msra.mxu0 0.0
    %502 = vmatprep.subr.mxu0 0.0
    %503 = vmatpush2.xpose.msra.mxu0 0.0
    %504 = vmatprep.subr.mxu0 0.0
    %505 = vmatpush2.xpose.msra.mxu0 0.0
    %506 = vmatprep.mubr.f32.mxu0 0.0
    %507 = vmatmul.mubr.f32.gmra.mxu0 %v438
    %v508 = vpop.f32.mrf.mxu0
    %v509 = vadd.f32 0.0, %v508
    %v510 = vpop.f32.mrf.mxu0
    %511 = vdwg.mxu0
    %512 = vrot.lane.b32.xlu0 %v200, 96
    %v513 = vpop.permute.xlu0 %512
    %v514 = vsel %vm209, %v200, 0
    %v516 = vsel %vm209, %v513, 0
    %518 = vmatprep.subr.mxu0 0.0
    %519 = vmatpush1.xpose.msra.mxu0 0.0
    %520 = vmatprep.subr.mxu0 0.0
    %521 = vmatpush1.xpose.msra.mxu0 0.0
    %522 = vmatprep.subr.mxu0 0.0
    %523 = vmatpush1.xpose.msra.mxu0 0.0
    %524 = vmatprep.subr.mxu0 0.0
    %525 = vmatpush1.xpose.msra.mxu0 0.0
    %526 = vmatprep.subr.mxu0 0.0
    %527 = vmatpush1.xpose.msra.mxu0 0.0
    %528 = vmatprep.subr.mxu0 0.0
    %529 = vmatpush1.xpose.msra.mxu0 0.0
    %530 = vmatprep.subr.mxu0 0.0
    %531 = vmatpush1.xpose.msra.mxu0 0.0
    %532 = vmatprep.subr.mxu0 0.0
    %533 = vmatpush1.xpose.msra.mxu0 0.0
    %534 = vmatprep.subr.mxu0 0.0
    %535 = vmatpush1.xpose.msra.mxu0 0.0
    %536 = vmatprep.subr.mxu0 0.0
    %537 = vmatpush1.xpose.msra.mxu0 0.0
    %538 = vmatprep.subr.mxu0 0.0
    %539 = vmatpush1.xpose.msra.mxu0 0.0
    %540 = vmatprep.subr.mxu0 0.0
    %541 = vmatpush1.xpose.msra.mxu0 0.0
    %542 = vmatprep.subr.mxu0 0.0
    %543 = vmatpush1.xpose.msra.mxu0 0.0
    %544 = vmatprep.subr.mxu0 0.0
    %545 = vmatpush1.xpose.msra.mxu0 0.0
    %546 = vmatprep.subr.mxu0 0.0
    %547 = vmatpush1.xpose.msra.mxu0 0.0
    %548 = vmatprep.subr.mxu0 0.0
    %549 = vmatpush1.xpose.msra.mxu0 %v516
    %550 = vmatprep.subr.mxu0 0.0
    %551 = vmatpush2.xpose.msra.mxu0 0.0
    %552 = vmatprep.subr.mxu0 0.0
    %553 = vmatpush2.xpose.msra.mxu0 0.0
    %554 = vmatprep.subr.mxu0 0.0
    %555 = vmatpush2.xpose.msra.mxu0 0.0
    %556 = vmatprep.subr.mxu0 0.0
    %557 = vmatpush2.xpose.msra.mxu0 0.0
    %558 = vmatprep.subr.mxu0 0.0
    %559 = vmatpush2.xpose.msra.mxu0 0.0
    %560 = vmatprep.subr.mxu0 0.0
    %561 = vmatpush2.xpose.msra.mxu0 0.0
    %562 = vmatprep.subr.mxu0 0.0
    %563 = vmatpush2.xpose.msra.mxu0 0.0
    %564 = vmatprep.subr.mxu0 0.0
    %565 = vmatpush2.xpose.msra.mxu0 0.0
    %566 = vmatprep.subr.mxu0 0.0
    %567 = vmatpush2.xpose.msra.mxu0 0.0
    %568 = vmatprep.subr.mxu0 0.0
    %569 = vmatpush2.xpose.msra.mxu0 0.0
    %570 = vmatprep.subr.mxu0 0.0
    %571 = vmatpush2.xpose.msra.mxu0 0.0
    %572 = vmatprep.subr.mxu0 0.0
    %573 = vmatpush2.xpose.msra.mxu0 0.0
    %574 = vmatprep.subr.mxu0 0.0
    %575 = vmatpush2.xpose.msra.mxu0 0.0
    %576 = vmatprep.subr.mxu0 0.0
    %577 = vmatpush2.xpose.msra.mxu0 0.0
    %578 = vmatprep.subr.mxu0 0.0
    %579 = vmatpush2.xpose.msra.mxu0 0.0
    %580 = vmatprep.subr.mxu0 0.0
    %581 = vmatpush2.xpose.msra.mxu0 0.0
    %582 = vmatprep.mubr.f32.mxu0 0.0
    %583 = vmatmul.mubr.f32.gmra.mxu0 %v514
    %v584 = vpop.f32.mrf.mxu0
    %v585 = vadd.f32 0.0, %v584
    %v586 = vpop.f32.mrf.mxu0
    %587 = vdwg.mxu0
    %588 = vrot.lane.b32.xlu0 %v202, 96
    %v589 = vpop.permute.xlu0 %588
    %v590 = vsel %vm209, %v202, 0
    %v592 = vsel %vm209, %v589, 0
    %594 = vmatprep.subr.mxu0 0.0
    %595 = vmatpush1.xpose.msra.mxu0 0.0
    %596 = vmatprep.subr.mxu0 0.0
    %597 = vmatpush1.xpose.msra.mxu0 0.0
    %598 = vmatprep.subr.mxu0 0.0
    %599 = vmatpush1.xpose.msra.mxu0 0.0
    %600 = vmatprep.subr.mxu0 0.0
    %601 = vmatpush1.xpose.msra.mxu0 0.0
    %602 = vmatprep.subr.mxu0 0.0
    %603 = vmatpush1.xpose.msra.mxu0 0.0
    %604 = vmatprep.subr.mxu0 0.0
    %605 = vmatpush1.xpose.msra.mxu0 0.0
    %606 = vmatprep.subr.mxu0 0.0
    %607 = vmatpush1.xpose.msra.mxu0 0.0
    %608 = vmatprep.subr.mxu0 0.0
    %609 = vmatpush1.xpose.msra.mxu0 0.0
    %610 = vmatprep.subr.mxu0 0.0
    %611 = vmatpush1.xpose.msra.mxu0 0.0
    %612 = vmatprep.subr.mxu0 0.0
    %613 = vmatpush1.xpose.msra.mxu0 0.0
    %614 = vmatprep.subr.mxu0 0.0
    %615 = vmatpush1.xpose.msra.mxu0 0.0
    %616 = vmatprep.subr.mxu0 0.0
    %617 = vmatpush1.xpose.msra.mxu0 0.0
    %618 = vmatprep.subr.mxu0 0.0
    %619 = vmatpush1.xpose.msra.mxu0 0.0
    %620 = vmatprep.subr.mxu0 0.0
    %621 = vmatpush1.xpose.msra.mxu0 0.0
    %622 = vmatprep.subr.mxu0 0.0
    %623 = vmatpush1.xpose.msra.mxu0 0.0
    %624 = vmatprep.subr.mxu0 0.0
    %625 = vmatpush1.xpose.msra.mxu0 %v592
    %626 = vmatprep.subr.mxu0 0.0
    %627 = vmatpush2.xpose.msra.mxu0 0.0
    %628 = vmatprep.subr.mxu0 0.0
    %629 = vmatpush2.xpose.msra.mxu0 0.0
    %630 = vmatprep.subr.mxu0 0.0
    %631 = vmatpush2.xpose.msra.mxu0 0.0
    %632 = vmatprep.subr.mxu0 0.0
    %633 = vmatpush2.xpose.msra.mxu0 0.0
    %634 = vmatprep.subr.mxu0 0.0
    %635 = vmatpush2.xpose.msra.mxu0 0.0
    %636 = vmatprep.subr.mxu0 0.0
    %637 = vmatpush2.xpose.msra.mxu0 0.0
    %638 = vmatprep.subr.mxu0 0.0
    %639 = vmatpush2.xpose.msra.mxu0 0.0
    %640 = vmatprep.subr.mxu0 0.0
    %641 = vmatpush2.xpose.msra.mxu0 0.0
    %642 = vmatprep.subr.mxu0 0.0
    %643 = vmatpush2.xpose.msra.mxu0 0.0
    %644 = vmatprep.subr.mxu0 0.0
    %645 = vmatpush2.xpose.msra.mxu0 0.0
    %646 = vmatprep.subr.mxu0 0.0
    %647 = vmatpush2.xpose.msra.mxu0 0.0
    %648 = vmatprep.subr.mxu0 0.0
    %649 = vmatpush2.xpose.msra.mxu0 0.0
    %650 = vmatprep.subr.mxu0 0.0
    %651 = vmatpush2.xpose.msra.mxu0 0.0
    %652 = vmatprep.subr.mxu0 0.0
    %653 = vmatpush2.xpose.msra.mxu0 0.0
    %654 = vmatprep.subr.mxu0 0.0
    %655 = vmatpush2.xpose.msra.mxu0 0.0
    %656 = vmatprep.subr.mxu0 0.0
    %657 = vmatpush2.xpose.msra.mxu0 0.0
    %658 = vmatprep.mubr.f32.mxu0 0.0
    %659 = vmatmul.mubr.f32.gmra.mxu0 %v590
    %v660 = vpop.f32.mrf.mxu0
    %v661 = vadd.f32 0.0, %v660
    %v662 = vpop.f32.mrf.mxu0
    %663 = vdwg.mxu0
    %664 = vrot.lane.b32.xlu0 %v204, 96
    %v665 = vpop.permute.xlu0 %664
    %v666 = vsel %vm209, %v204, 0
    %v668 = vsel %vm209, %v665, 0
    %670 = vmatprep.subr.mxu0 0.0
    %671 = vmatpush1.xpose.msra.mxu0 0.0
    %672 = vmatprep.subr.mxu0 0.0
    %673 = vmatpush1.xpose.msra.mxu0 0.0
    %674 = vmatprep.subr.mxu0 0.0
    %675 = vmatpush1.xpose.msra.mxu0 0.0
    %676 = vmatprep.subr.mxu0 0.0
    %677 = vmatpush1.xpose.msra.mxu0 0.0
    %678 = vmatprep.subr.mxu0 0.0
    %679 = vmatpush1.xpose.msra.mxu0 0.0
    %680 = vmatprep.subr.mxu0 0.0
    %681 = vmatpush1.xpose.msra.mxu0 0.0
    %682 = vmatprep.subr.mxu0 0.0
    %683 = vmatpush1.xpose.msra.mxu0 0.0
    %684 = vmatprep.subr.mxu0 0.0
    %685 = vmatpush1.xpose.msra.mxu0 0.0
    %686 = vmatprep.subr.mxu0 0.0
    %687 = vmatpush1.xpose.msra.mxu0 0.0
    %688 = vmatprep.subr.mxu0 0.0
    %689 = vmatpush1.xpose.msra.mxu0 0.0
    %690 = vmatprep.subr.mxu0 0.0
    %691 = vmatpush1.xpose.msra.mxu0 0.0
    %692 = vmatprep.subr.mxu0 0.0
    %693 = vmatpush1.xpose.msra.mxu0 0.0
    %694 = vmatprep.subr.mxu0 0.0
    %695 = vmatpush1.xpose.msra.mxu0 0.0
    %696 = vmatprep.subr.mxu0 0.0
    %697 = vmatpush1.xpose.msra.mxu0 0.0
    %698 = vmatprep.subr.mxu0 0.0
    %699 = vmatpush1.xpose.msra.mxu0 0.0
    %700 = vmatprep.subr.mxu0 0.0
    %701 = vmatpush1.xpose.msra.mxu0 %v668
    %702 = vmatprep.subr.mxu0 0.0
    %703 = vmatpush2.xpose.msra.mxu0 0.0
    %704 = vmatprep.subr.mxu0 0.0
    %705 = vmatpush2.xpose.msra.mxu0 0.0
    %706 = vmatprep.subr.mxu0 0.0
    %707 = vmatpush2.xpose.msra.mxu0 0.0
    %708 = vmatprep.subr.mxu0 0.0
    %709 = vmatpush2.xpose.msra.mxu0 0.0
    %710 = vmatprep.subr.mxu0 0.0
    %711 = vmatpush2.xpose.msra.mxu0 0.0
    %712 = vmatprep.subr.mxu0 0.0
    %713 = vmatpush2.xpose.msra.mxu0 0.0
    %714 = vmatprep.subr.mxu0 0.0
    %715 = vmatpush2.xpose.msra.mxu0 0.0
    %716 = vmatprep.subr.mxu0 0.0
    %717 = vmatpush2.xpose.msra.mxu0 0.0
    %718 = vmatprep.subr.mxu0 0.0
    %719 = vmatpush2.xpose.msra.mxu0 0.0
    %720 = vmatprep.subr.mxu0 0.0
    %721 = vmatpush2.xpose.msra.mxu0 0.0
    %722 = vmatprep.subr.mxu0 0.0
    %723 = vmatpush2.xpose.msra.mxu0 0.0
    %724 = vmatprep.subr.mxu0 0.0
    %725 = vmatpush2.xpose.msra.mxu0 0.0
    %726 = vmatprep.subr.mxu0 0.0
    %727 = vmatpush2.xpose.msra.mxu0 0.0
    %728 = vmatprep.subr.mxu0 0.0
    %729 = vmatpush2.xpose.msra.mxu0 0.0
    %730 = vmatprep.subr.mxu0 0.0
    %731 = vmatpush2.xpose.msra.mxu0 0.0
    %732 = vmatprep.subr.mxu0 0.0
    %733 = vmatpush2.xpose.msra.mxu0 0.0
    %734 = vmatprep.mubr.f32.mxu0 0.0
    %735 = vmatmul.mubr.f32.gmra.mxu0 %v666
    %v736 = vpop.f32.mrf.mxu0
    %v737 = vadd.f32 0.0, %v736
    %v738 = vpop.f32.mrf.mxu0
    %739 = vdwg.mxu0
    %740 = vrot.lane.b32.xlu0 %v206, 96
    %v741 = vpop.permute.xlu0 %740
    %v742 = vsel %vm209, %v206, 0
    %v744 = vsel %vm209, %v741, 0
    %746 = vmatprep.subr.mxu0 0.0
    %747 = vmatpush1.xpose.msra.mxu0 0.0
    %748 = vmatprep.subr.mxu0 0.0
    %749 = vmatpush1.xpose.msra.mxu0 0.0
    %750 = vmatprep.subr.mxu0 0.0
    %751 = vmatpush1.xpose.msra.mxu0 0.0
    %752 = vmatprep.subr.mxu0 0.0
    %753 = vmatpush1.xpose.msra.mxu0 0.0
    %754 = vmatprep.subr.mxu0 0.0
    %755 = vmatpush1.xpose.msra.mxu0 0.0
    %756 = vmatprep.subr.mxu0 0.0
    %757 = vmatpush1.xpose.msra.mxu0 0.0
    %758 = vmatprep.subr.mxu0 0.0
    %759 = vmatpush1.xpose.msra.mxu0 0.0
    %760 = vmatprep.subr.mxu0 0.0
    %761 = vmatpush1.xpose.msra.mxu0 0.0
    %762 = vmatprep.subr.mxu0 0.0
    %763 = vmatpush1.xpose.msra.mxu0 0.0
    %764 = vmatprep.subr.mxu0 0.0
    %765 = vmatpush1.xpose.msra.mxu0 0.0
    %766 = vmatprep.subr.mxu0 0.0
    %767 = vmatpush1.xpose.msra.mxu0 0.0
    %768 = vmatprep.subr.mxu0 0.0
    %769 = vmatpush1.xpose.msra.mxu0 0.0
    %770 = vmatprep.subr.mxu0 0.0
    %771 = vmatpush1.xpose.msra.mxu0 0.0
    %772 = vmatprep.subr.mxu0 0.0
    %773 = vmatpush1.xpose.msra.mxu0 0.0
    %774 = vmatprep.subr.mxu0 0.0
    %775 = vmatpush1.xpose.msra.mxu0 0.0
    %776 = vmatprep.subr.mxu0 0.0
    %777 = vmatpush1.xpose.msra.mxu0 %v744
    %778 = vmatprep.subr.mxu0 0.0
    %779 = vmatpush2.xpose.msra.mxu0 0.0
    %780 = vmatprep.subr.mxu0 0.0
    %781 = vmatpush2.xpose.msra.mxu0 0.0
    %782 = vmatprep.subr.mxu0 0.0
    %783 = vmatpush2.xpose.msra.mxu0 0.0
    %784 = vmatprep.subr.mxu0 0.0
    %785 = vmatpush2.xpose.msra.mxu0 0.0
    %786 = vmatprep.subr.mxu0 0.0
    %787 = vmatpush2.xpose.msra.mxu0 0.0
    %788 = vmatprep.subr.mxu0 0.0
    %789 = vmatpush2.xpose.msra.mxu0 0.0
    %790 = vmatprep.subr.mxu0 0.0
    %791 = vmatpush2.xpose.msra.mxu0 0.0
    %792 = vmatprep.subr.mxu0 0.0
    %793 = vmatpush2.xpose.msra.mxu0 0.0
    %794 = vmatprep.subr.mxu0 0.0
    %795 = vmatpush2.xpose.msra.mxu0 0.0
    %796 = vmatprep.subr.mxu0 0.0
    %797 = vmatpush2.xpose.msra.mxu0 0.0
    %798 = vmatprep.subr.mxu0 0.0
    %799 = vmatpush2.xpose.msra.mxu0 0.0
    %800 = vmatprep.subr.mxu0 0.0
    %801 = vmatpush2.xpose.msra.mxu0 0.0
    %802 = vmatprep.subr.mxu0 0.0
    %803 = vmatpush2.xpose.msra.mxu0 0.0
    %804 = vmatprep.subr.mxu0 0.0
    %805 = vmatpush2.xpose.msra.mxu0 0.0
    %806 = vmatprep.subr.mxu0 0.0
    %807 = vmatpush2.xpose.msra.mxu0 0.0
    %808 = vmatprep.subr.mxu0 0.0
    %809 = vmatpush2.xpose.msra.mxu0 0.0
    %810 = vmatprep.mubr.f32.mxu0 0.0
    %811 = vmatmul.mubr.f32.gmra.mxu0 %v742
    %v812 = vpop.f32.mrf.mxu0
    %v813 = vadd.f32 0.0, %v812
    %v814 = vpop.f32.mrf.mxu0
    %815 = vdwg.mxu0
    %v816 = vmul.f32 %v281, 0.35355338
    %v817 = vmul.f32 %v357, 0.35355338
    %v818 = vmul.f32 %v433, 0.35355338
    %v819 = vmul.f32 %v509, 0.35355338
    %v820 = vmul.f32 %v585, 0.35355338
    %v821 = vmul.f32 %v661, 0.35355338
    %v822 = vmul.f32 %v737, 0.35355338
    %v823 = vmul.f32 %v813, 0.35355338
    %v824 = vadd.f32 %v816, %v59
    %v825 = vadd.f32 %v817, %v59
    %v826 = vadd.f32 %v818, %v59
    %v827 = vadd.f32 %v819, %v59
    %v828 = vadd.f32 %v820, %v59
    %v829 = vadd.f32 %v821, %v59
    %v830 = vadd.f32 %v822, %v59
    %v831 = vadd.f32 %v823, %v59
    %v832 = vsel %vm209, %v824, -inf
    %833 = vmax.xlane.f32.xlu0 %v832
    %v834 = vpop.xlane.xlu0 %833
    %v835 = vsel %vm209, %v825, -inf
    %836 = vmax.xlane.f32.xlu0 %v835
    %v837 = vpop.xlane.xlu0 %836
    %v838 = vsel %vm209, %v826, -inf
    %839 = vmax.xlane.f32.xlu0 %v838
    %v840 = vpop.xlane.xlu0 %839
    %v841 = vsel %vm209, %v827, -inf
    %842 = vmax.xlane.f32.xlu0 %v841
    %v843 = vpop.xlane.xlu0 %842
    %v844 = vsel %vm209, %v828, -inf
    %845 = vmax.xlane.f32.xlu0 %v844
    %v846 = vpop.xlane.xlu0 %845
    %v847 = vsel %vm209, %v829, -inf
    %848 = vmax.xlane.f32.xlu0 %v847
    %v849 = vpop.xlane.xlu0 %848
    %v850 = vsel %vm209, %v830, -inf
    %851 = vmax.xlane.f32.xlu0 %v850
    %v852 = vpop.xlane.xlu0 %851
    %v853 = vsel %vm209, %v831, -inf
    %854 = vmax.xlane.f32.xlu0 %v853
    %v855 = vpop.xlane.xlu0 %854
    %v856 = vsub.f32 %v824, %v834
    %v857 = vsub.f32 %v825, %v837
    %v858 = vsub.f32 %v826, %v840
    %v859 = vsub.f32 %v827, %v843
    %v860 = vsub.f32 %v828, %v846
    %v861 = vsub.f32 %v829, %v849
    %v862 = vsub.f32 %v830, %v852
    %v863 = vsub.f32 %v831, %v855
    %v864 = vmul.f32 %v856, 1.442695
    %v865 = vpow.pop %v864
    %v866 = vmul.f32 %v857, 1.442695
    %v867 = vpow.pop %v866
    %v868 = vmul.f32 %v858, 1.442695
    %v869 = vpow.pop %v868
    %v870 = vmul.f32 %v859, 1.442695
    %v871 = vpow.pop %v870
    %v872 = vmul.f32 %v860, 1.442695
    %v873 = vpow.pop %v872
    %v874 = vmul.f32 %v861, 1.442695
    %v875 = vpow.pop %v874
    %v876 = vmul.f32 %v862, 1.442695
    %v877 = vpow.pop %v876
    %v878 = vmul.f32 %v863, 1.442695
    %v879 = vpow.pop %v878
    %v880 = vsel %vm209, %v865, 0.0
    %881 = vadd.xlane.f32.xlu0 %v880
    %v882 = vpop.xlane.xlu0 %881
    %v883 = vsel %vm209, %v867, 0.0
    %884 = vadd.xlane.f32.xlu0 %v883
    %v885 = vpop.xlane.xlu0 %884
    %v886 = vsel %vm209, %v869, 0.0
    %887 = vadd.xlane.f32.xlu0 %v886
    %v888 = vpop.xlane.xlu0 %887
    %v889 = vsel %vm209, %v871, 0.0
    %890 = vadd.xlane.f32.xlu0 %v889
    %v891 = vpop.xlane.xlu0 %890
    %v892 = vsel %vm209, %v873, 0.0
    %893 = vadd.xlane.f32.xlu0 %v892
    %v894 = vpop.xlane.xlu0 %893
    %v895 = vsel %vm209, %v875, 0.0
    %896 = vadd.xlane.f32.xlu0 %v895
    %v897 = vpop.xlane.xlu0 %896
    %v898 = vsel %vm209, %v877, 0.0
    %899 = vadd.xlane.f32.xlu0 %v898
    %v900 = vpop.xlane.xlu0 %899
    %v901 = vsel %vm209, %v879, 0.0
    %902 = vadd.xlane.f32.xlu0 %v901
    %v903 = vpop.xlane.xlu0 %902
    %v904 = vrcp.pop %v882
    %v905 = vrcp.pop %v885
    %v906 = vrcp.pop %v888
    %v907 = vrcp.pop %v891
    %v908 = vrcp.pop %v894
    %v909 = vrcp.pop %v897
    %v910 = vrcp.pop %v900
    %v911 = vrcp.pop %v903
    %v912 = vmul.f32 %v865, %v904
    %v913 = vmul.f32 %v867, %v905
    %v914 = vmul.f32 %v869, %v906
    %v915 = vmul.f32 %v871, %v907
    %v916 = vmul.f32 %v873, %v908
    %v917 = vmul.f32 %v875, %v909
    %v918 = vmul.f32 %v877, %v910
    %v919 = vmul.f32 %v879, %v911
    %920 = vrot.lane.b32.xlu0 %v185, 64
    %v921 = vpop.permute.xlu0 %920
    %v924 = vsel %vm209, %v912, 0
    %926 = vmatprep.subr.mxu0 0.0
    %927 = vmatpush1.msra.mxu0 0.0
    %928 = vmatprep.subr.mxu0 0.0
    %929 = vmatpush1.msra.mxu0 0.0
    %930 = vmatprep.subr.mxu0 0.0
    %931 = vmatpush1.msra.mxu0 0.0
    %932 = vmatprep.subr.mxu0 0.0
    %933 = vmatpush1.msra.mxu0 0.0
    %934 = vmatprep.subr.mxu0 0.0
    %935 = vmatpush1.msra.mxu0 0.0
    %936 = vmatprep.subr.mxu0 0.0
    %937 = vmatpush1.msra.mxu0 0.0
    %938 = vmatprep.subr.mxu0 0.0
    %939 = vmatpush1.msra.mxu0 0.0
    %940 = vmatprep.subr.mxu0 0.0
    %941 = vmatpush1.msra.mxu0 0.0
    %942 = vmatprep.subr.mxu0 0.0
    %943 = vmatpush1.msra.mxu0 0.0
    %944 = vmatprep.subr.mxu0 0.0
    %945 = vmatpush1.msra.mxu0 0.0
    %946 = vmatprep.subr.mxu0 0.0
    %947 = vmatpush1.msra.mxu0 0.0
    %948 = vmatprep.subr.mxu0 0.0
    %949 = vmatpush1.msra.mxu0 0.0
    %950 = vmatprep.subr.mxu0 0.0
    %951 = vmatpush1.msra.mxu0 0.0
    %952 = vmatprep.subr.mxu0 0.0
    %953 = vmatpush1.msra.mxu0 0.0
    %954 = vmatprep.subr.mxu0 0.0
    %955 = vmatpush1.msra.mxu0 0.0
    %956 = vmatprep.subr.mxu0 0.0
    %957 = vmatpush1.msra.mxu0 %v921
    %958 = vmatprep.subr.mxu0 0.0
    %959 = vmatpush2.msra.mxu0 0.0
    %960 = vmatprep.subr.mxu0 0.0
    %961 = vmatpush2.msra.mxu0 0.0
    %962 = vmatprep.subr.mxu0 0.0
    %963 = vmatpush2.msra.mxu0 0.0
    %964 = vmatprep.subr.mxu0 0.0
    %965 = vmatpush2.msra.mxu0 0.0
    %966 = vmatprep.subr.mxu0 0.0
    %967 = vmatpush2.msra.mxu0 0.0
    %968 = vmatprep.subr.mxu0 0.0
    %969 = vmatpush2.msra.mxu0 0.0
    %970 = vmatprep.subr.mxu0 0.0
    %971 = vmatpush2.msra.mxu0 0.0
    %972 = vmatprep.subr.mxu0 0.0
    %973 = vmatpush2.msra.mxu0 0.0
    %974 = vmatprep.subr.mxu0 0.0
    %975 = vmatpush2.msra.mxu0 0.0
    %976 = vmatprep.subr.mxu0 0.0
    %977 = vmatpush2.msra.mxu0 0.0
    %978 = vmatprep.subr.mxu0 0.0
    %979 = vmatpush2.msra.mxu0 0.0
    %980 = vmatprep.subr.mxu0 0.0
    %981 = vmatpush2.msra.mxu0 0.0
    %982 = vmatprep.subr.mxu0 0.0
    %983 = vmatpush2.msra.mxu0 0.0
    %984 = vmatprep.subr.mxu0 0.0
    %985 = vmatpush2.msra.mxu0 0.0
    %986 = vmatprep.subr.mxu0 0.0
    %987 = vmatpush2.msra.mxu0 0.0
    %988 = vmatprep.subr.mxu0 0.0
    %989 = vmatpush2.msra.mxu0 0.0
    %990 = vmatprep.mubr.f32.mxu0 0.0
    %991 = vmatmul.mubr.f32.gmra.mxu0 %v924
    %v992 = vpop.f32.mrf.mxu0
    %v993 = vadd.f32 0.0, %v992
    %v994 = vpop.f32.mrf.mxu0
    %995 = vdwg.mxu0
    %996 = vrot.lane.b32.xlu0 %v190, 64
    %v997 = vpop.permute.xlu0 %996
    %v1000 = vsel %vm209, %v913, 0
    %1002 = vmatprep.subr.mxu0 0.0
    %1003 = vmatpush1.msra.mxu0 0.0
    %1004 = vmatprep.subr.mxu0 0.0
    %1005 = vmatpush1.msra.mxu0 0.0
    %1006 = vmatprep.subr.mxu0 0.0
    %1007 = vmatpush1.msra.mxu0 0.0
    %1008 = vmatprep.subr.mxu0 0.0
    %1009 = vmatpush1.msra.mxu0 0.0
    %1010 = vmatprep.subr.mxu0 0.0
    %1011 = vmatpush1.msra.mxu0 0.0
    %1012 = vmatprep.subr.mxu0 0.0
    %1013 = vmatpush1.msra.mxu0 0.0
    %1014 = vmatprep.subr.mxu0 0.0
    %1015 = vmatpush1.msra.mxu0 0.0
    %1016 = vmatprep.subr.mxu0 0.0
    %1017 = vmatpush1.msra.mxu0 0.0
    %1018 = vmatprep.subr.mxu0 0.0
    %1019 = vmatpush1.msra.mxu0 0.0
    %1020 = vmatprep.subr.mxu0 0.0
    %1021 = vmatpush1.msra.mxu0 0.0
    %1022 = vmatprep.subr.mxu0 0.0
    %1023 = vmatpush1.msra.mxu0 0.0
    %1024 = vmatprep.subr.mxu0 0.0
    %1025 = vmatpush1.msra.mxu0 0.0
    %1026 = vmatprep.subr.mxu0 0.0
    %1027 = vmatpush1.msra.mxu0 0.0
    %1028 = vmatprep.subr.mxu0 0.0
    %1029 = vmatpush1.msra.mxu0 0.0
    %1030 = vmatprep.subr.mxu0 0.0
    %1031 = vmatpush1.msra.mxu0 0.0
    %1032 = vmatprep.subr.mxu0 0.0
    %1033 = vmatpush1.msra.mxu0 %v997
    %1034 = vmatprep.subr.mxu0 0.0
    %1035 = vmatpush2.msra.mxu0 0.0
    %1036 = vmatprep.subr.mxu0 0.0
    %1037 = vmatpush2.msra.mxu0 0.0
    %1038 = vmatprep.subr.mxu0 0.0
    %1039 = vmatpush2.msra.mxu0 0.0
    %1040 = vmatprep.subr.mxu0 0.0
    %1041 = vmatpush2.msra.mxu0 0.0
    %1042 = vmatprep.subr.mxu0 0.0
    %1043 = vmatpush2.msra.mxu0 0.0
    %1044 = vmatprep.subr.mxu0 0.0
    %1045 = vmatpush2.msra.mxu0 0.0
    %1046 = vmatprep.subr.mxu0 0.0
    %1047 = vmatpush2.msra.mxu0 0.0
    %1048 = vmatprep.subr.mxu0 0.0
    %1049 = vmatpush2.msra.mxu0 0.0
    %1050 = vmatprep.subr.mxu0 0.0
    %1051 = vmatpush2.msra.mxu0 0.0
    %1052 = vmatprep.subr.mxu0 0.0
    %1053 = vmatpush2.msra.mxu0 0.0
    %1054 = vmatprep.subr.mxu0 0.0
    %1055 = vmatpush2.msra.mxu0 0.0
    %1056 = vmatprep.subr.mxu0 0.0
    %1057 = vmatpush2.msra.mxu0 0.0
    %1058 = vmatprep.subr.mxu0 0.0
    %1059 = vmatpush2.msra.mxu0 0.0
    %1060 = vmatprep.subr.mxu0 0.0
    %1061 = vmatpush2.msra.mxu0 0.0
    %1062 = vmatprep.subr.mxu0 0.0
    %1063 = vmatpush2.msra.mxu0 0.0
    %1064 = vmatprep.subr.mxu0 0.0
    %1065 = vmatpush2.msra.mxu0 0.0
    %1066 = vmatprep.mubr.f32.mxu0 0.0
    %1067 = vmatmul.mubr.f32.gmra.mxu0 %v1000
    %v1068 = vpop.f32.mrf.mxu0
    %v1069 = vadd.f32 0.0, %v1068
    %v1070 = vpop.f32.mrf.mxu0
    %1071 = vdwg.mxu0
    %1072 = vrot.lane.b32.xlu0 %v196, 64
    %v1073 = vpop.permute.xlu0 %1072
    %v1076 = vsel %vm209, %v914, 0
    %1078 = vmatprep.subr.mxu0 0.0
    %1079 = vmatpush1.msra.mxu0 0.0
    %1080 = vmatprep.subr.mxu0 0.0
    %1081 = vmatpush1.msra.mxu0 0.0
    %1082 = vmatprep.subr.mxu0 0.0
    %1083 = vmatpush1.msra.mxu0 0.0
    %1084 = vmatprep.subr.mxu0 0.0
    %1085 = vmatpush1.msra.mxu0 0.0
    %1086 = vmatprep.subr.mxu0 0.0
    %1087 = vmatpush1.msra.mxu0 0.0
    %1088 = vmatprep.subr.mxu0 0.0
    %1089 = vmatpush1.msra.mxu0 0.0
    %1090 = vmatprep.subr.mxu0 0.0
    %1091 = vmatpush1.msra.mxu0 0.0
    %1092 = vmatprep.subr.mxu0 0.0
    %1093 = vmatpush1.msra.mxu0 0.0
    %1094 = vmatprep.subr.mxu0 0.0
    %1095 = vmatpush1.msra.mxu0 0.0
    %1096 = vmatprep.subr.mxu0 0.0
    %1097 = vmatpush1.msra.mxu0 0.0
    %1098 = vmatprep.subr.mxu0 0.0
    %1099 = vmatpush1.msra.mxu0 0.0
    %1100 = vmatprep.subr.mxu0 0.0
    %1101 = vmatpush1.msra.mxu0 0.0
    %1102 = vmatprep.subr.mxu0 0.0
    %1103 = vmatpush1.msra.mxu0 0.0
    %1104 = vmatprep.subr.mxu0 0.0
    %1105 = vmatpush1.msra.mxu0 0.0
    %1106 = vmatprep.subr.mxu0 0.0
    %1107 = vmatpush1.msra.mxu0 0.0
    %1108 = vmatprep.subr.mxu0 0.0
    %1109 = vmatpush1.msra.mxu0 %v1073
    %1110 = vmatprep.subr.mxu0 0.0
    %1111 = vmatpush2.msra.mxu0 0.0
    %1112 = vmatprep.subr.mxu0 0.0
    %1113 = vmatpush2.msra.mxu0 0.0
    %1114 = vmatprep.subr.mxu0 0.0
    %1115 = vmatpush2.msra.mxu0 0.0
    %1116 = vmatprep.subr.mxu0 0.0
    %1117 = vmatpush2.msra.mxu0 0.0
    %1118 = vmatprep.subr.mxu0 0.0
    %1119 = vmatpush2.msra.mxu0 0.0
    %1120 = vmatprep.subr.mxu0 0.0
    %1121 = vmatpush2.msra.mxu0 0.0
    %1122 = vmatprep.subr.mxu0 0.0
    %1123 = vmatpush2.msra.mxu0 0.0
    %1124 = vmatprep.subr.mxu0 0.0
    %1125 = vmatpush2.msra.mxu0 0.0
    %1126 = vmatprep.subr.mxu0 0.0
    %1127 = vmatpush2.msra.mxu0 0.0
    %1128 = vmatprep.subr.mxu0 0.0
    %1129 = vmatpush2.msra.mxu0 0.0
    %1130 = vmatprep.subr.mxu0 0.0
    %1131 = vmatpush2.msra.mxu0 0.0
    %1132 = vmatprep.subr.mxu0 0.0
    %1133 = vmatpush2.msra.mxu0 0.0
    %1134 = vmatprep.subr.mxu0 0.0
    %1135 = vmatpush2.msra.mxu0 0.0
    %1136 = vmatprep.subr.mxu0 0.0
    %1137 = vmatpush2.msra.mxu0 0.0
    %1138 = vmatprep.subr.mxu0 0.0
    %1139 = vmatpush2.msra.mxu0 0.0
    %1140 = vmatprep.subr.mxu0 0.0
    %1141 = vmatpush2.msra.mxu0 0.0
    %1142 = vmatprep.mubr.f32.mxu0 0.0
    %1143 = vmatmul.mubr.f32.gmra.mxu0 %v1076
    %v1144 = vpop.f32.mrf.mxu0
    %v1145 = vadd.f32 0.0, %v1144
    %v1146 = vpop.f32.mrf.mxu0
    %1147 = vdwg.mxu0
    %1148 = vrot.lane.b32.xlu0 %v198, 64
    %v1149 = vpop.permute.xlu0 %1148
    %v1152 = vsel %vm209, %v915, 0
    %1154 = vmatprep.subr.mxu0 0.0
    %1155 = vmatpush1.msra.mxu0 0.0
    %1156 = vmatprep.subr.mxu0 0.0
    %1157 = vmatpush1.msra.mxu0 0.0
    %1158 = vmatprep.subr.mxu0 0.0
    %1159 = vmatpush1.msra.mxu0 0.0
    %1160 = vmatprep.subr.mxu0 0.0
    %1161 = vmatpush1.msra.mxu0 0.0
    %1162 = vmatprep.subr.mxu0 0.0
    %1163 = vmatpush1.msra.mxu0 0.0
    %1164 = vmatprep.subr.mxu0 0.0
    %1165 = vmatpush1.msra.mxu0 0.0
    %1166 = vmatprep.subr.mxu0 0.0
    %1167 = vmatpush1.msra.mxu0 0.0
    %1168 = vmatprep.subr.mxu0 0.0
    %1169 = vmatpush1.msra.mxu0 0.0
    %1170 = vmatprep.subr.mxu0 0.0
    %1171 = vmatpush1.msra.mxu0 0.0
    %1172 = vmatprep.subr.mxu0 0.0
    %1173 = vmatpush1.msra.mxu0 0.0
    %1174 = vmatprep.subr.mxu0 0.0
    %1175 = vmatpush1.msra.mxu0 0.0
    %1176 = vmatprep.subr.mxu0 0.0
    %1177 = vmatpush1.msra.mxu0 0.0
    %1178 = vmatprep.subr.mxu0 0.0
    %1179 = vmatpush1.msra.mxu0 0.0
    %1180 = vmatprep.subr.mxu0 0.0
    %1181 = vmatpush1.msra.mxu0 0.0
    %1182 = vmatprep.subr.mxu0 0.0
    %1183 = vmatpush1.msra.mxu0 0.0
    %1184 = vmatprep.subr.mxu0 0.0
    %1185 = vmatpush1.msra.mxu0 %v1149
    %1186 = vmatprep.subr.mxu0 0.0
    %1187 = vmatpush2.msra.mxu0 0.0
    %1188 = vmatprep.subr.mxu0 0.0
    %1189 = vmatpush2.msra.mxu0 0.0
    %1190 = vmatprep.subr.mxu0 0.0
    %1191 = vmatpush2.msra.mxu0 0.0
    %1192 = vmatprep.subr.mxu0 0.0
    %1193 = vmatpush2.msra.mxu0 0.0
    %1194 = vmatprep.subr.mxu0 0.0
    %1195 = vmatpush2.msra.mxu0 0.0
    %1196 = vmatprep.subr.mxu0 0.0
    %1197 = vmatpush2.msra.mxu0 0.0
    %1198 = vmatprep.subr.mxu0 0.0
    %1199 = vmatpush2.msra.mxu0 0.0
    %1200 = vmatprep.subr.mxu0 0.0
    %1201 = vmatpush2.msra.mxu0 0.0
    %1202 = vmatprep.subr.mxu0 0.0
    %1203 = vmatpush2.msra.mxu0 0.0
    %1204 = vmatprep.subr.mxu0 0.0
    %1205 = vmatpush2.msra.mxu0 0.0
    %1206 = vmatprep.subr.mxu0 0.0
    %1207 = vmatpush2.msra.mxu0 0.0
    %1208 = vmatprep.subr.mxu0 0.0
    %1209 = vmatpush2.msra.mxu0 0.0
    %1210 = vmatprep.subr.mxu0 0.0
    %1211 = vmatpush2.msra.mxu0 0.0
    %1212 = vmatprep.subr.mxu0 0.0
    %1213 = vmatpush2.msra.mxu0 0.0
    %1214 = vmatprep.subr.mxu0 0.0
    %1215 = vmatpush2.msra.mxu0 0.0
    %1216 = vmatprep.subr.mxu0 0.0
    %1217 = vmatpush2.msra.mxu0 0.0
    %1218 = vmatprep.mubr.f32.mxu0 0.0
    %1219 = vmatmul.mubr.f32.gmra.mxu0 %v1152
    %v1220 = vpop.f32.mrf.mxu0
    %v1221 = vadd.f32 0.0, %v1220
    %v1222 = vpop.f32.mrf.mxu0
    %1223 = vdwg.mxu0
    %1224 = vrot.lane.b32.xlu0 %v200, 64
    %v1225 = vpop.permute.xlu0 %1224
    %v1228 = vsel %vm209, %v916, 0
    %1230 = vmatprep.subr.mxu0 0.0
    %1231 = vmatpush1.msra.mxu0 0.0
    %1232 = vmatprep.subr.mxu0 0.0
    %1233 = vmatpush1.msra.mxu0 0.0
    %1234 = vmatprep.subr.mxu0 0.0
    %1235 = vmatpush1.msra.mxu0 0.0
    %1236 = vmatprep.subr.mxu0 0.0
    %1237 = vmatpush1.msra.mxu0 0.0
    %1238 = vmatprep.subr.mxu0 0.0
    %1239 = vmatpush1.msra.mxu0 0.0
    %1240 = vmatprep.subr.mxu0 0.0
    %1241 = vmatpush1.msra.mxu0 0.0
    %1242 = vmatprep.subr.mxu0 0.0
    %1243 = vmatpush1.msra.mxu0 0.0
    %1244 = vmatprep.subr.mxu0 0.0
    %1245 = vmatpush1.msra.mxu0 0.0
    %1246 = vmatprep.subr.mxu0 0.0
    %1247 = vmatpush1.msra.mxu0 0.0
    %1248 = vmatprep.subr.mxu0 0.0
    %1249 = vmatpush1.msra.mxu0 0.0
    %1250 = vmatprep.subr.mxu0 0.0
    %1251 = vmatpush1.msra.mxu0 0.0
    %1252 = vmatprep.subr.mxu0 0.0
    %1253 = vmatpush1.msra.mxu0 0.0
    %1254 = vmatprep.subr.mxu0 0.0
    %1255 = vmatpush1.msra.mxu0 0.0
    %1256 = vmatprep.subr.mxu0 0.0
    %1257 = vmatpush1.msra.mxu0 0.0
    %1258 = vmatprep.subr.mxu0 0.0
    %1259 = vmatpush1.msra.mxu0 0.0
    %1260 = vmatprep.subr.mxu0 0.0
    %1261 = vmatpush1.msra.mxu0 %v1225
    %1262 = vmatprep.subr.mxu0 0.0
    %1263 = vmatpush2.msra.mxu0 0.0
    %1264 = vmatprep.subr.mxu0 0.0
    %1265 = vmatpush2.msra.mxu0 0.0
    %1266 = vmatprep.subr.mxu0 0.0
    %1267 = vmatpush2.msra.mxu0 0.0
    %1268 = vmatprep.subr.mxu0 0.0
    %1269 = vmatpush2.msra.mxu0 0.0
    %1270 = vmatprep.subr.mxu0 0.0
    %1271 = vmatpush2.msra.mxu0 0.0
    %1272 = vmatprep.subr.mxu0 0.0
    %1273 = vmatpush2.msra.mxu0 0.0
    %1274 = vmatprep.subr.mxu0 0.0
    %1275 = vmatpush2.msra.mxu0 0.0
    %1276 = vmatprep.subr.mxu0 0.0
    %1277 = vmatpush2.msra.mxu0 0.0
    %1278 = vmatprep.subr.mxu0 0.0
    %1279 = vmatpush2.msra.mxu0 0.0
    %1280 = vmatprep.subr.mxu0 0.0
    %1281 = vmatpush2.msra.mxu0 0.0
    %1282 = vmatprep.subr.mxu0 0.0
    %1283 = vmatpush2.msra.mxu0 0.0
    %1284 = vmatprep.subr.mxu0 0.0
    %1285 = vmatpush2.msra.mxu0 0.0
    %1286 = vmatprep.subr.mxu0 0.0
    %1287 = vmatpush2.msra.mxu0 0.0
    %1288 = vmatprep.subr.mxu0 0.0
    %1289 = vmatpush2.msra.mxu0 0.0
    %1290 = vmatprep.subr.mxu0 0.0
    %1291 = vmatpush2.msra.mxu0 0.0
    %1292 = vmatprep.subr.mxu0 0.0
    %1293 = vmatpush2.msra.mxu0 0.0
    %1294 = vmatprep.mubr.f32.mxu0 0.0
    %1295 = vmatmul.mubr.f32.gmra.mxu0 %v1228
    %v1296 = vpop.f32.mrf.mxu0
    %v1297 = vadd.f32 0.0, %v1296
    %v1298 = vpop.f32.mrf.mxu0
    %1299 = vdwg.mxu0
    %1300 = vrot.lane.b32.xlu0 %v202, 64
    %v1301 = vpop.permute.xlu0 %1300
    %v1304 = vsel %vm209, %v917, 0
    %1306 = vmatprep.subr.mxu0 0.0
    %1307 = vmatpush1.msra.mxu0 0.0
    %1308 = vmatprep.subr.mxu0 0.0
    %1309 = vmatpush1.msra.mxu0 0.0
    %1310 = vmatprep.subr.mxu0 0.0
    %1311 = vmatpush1.msra.mxu0 0.0
    %1312 = vmatprep.subr.mxu0 0.0
    %1313 = vmatpush1.msra.mxu0 0.0
    %1314 = vmatprep.subr.mxu0 0.0
    %1315 = vmatpush1.msra.mxu0 0.0
    %1316 = vmatprep.subr.mxu0 0.0
    %1317 = vmatpush1.msra.mxu0 0.0
    %1318 = vmatprep.subr.mxu0 0.0
    %1319 = vmatpush1.msra.mxu0 0.0
    %1320 = vmatprep.subr.mxu0 0.0
    %1321 = vmatpush1.msra.mxu0 0.0
    %1322 = vmatprep.subr.mxu0 0.0
    %1323 = vmatpush1.msra.mxu0 0.0
    %1324 = vmatprep.subr.mxu0 0.0
    %1325 = vmatpush1.msra.mxu0 0.0
    %1326 = vmatprep.subr.mxu0 0.0
    %1327 = vmatpush1.msra.mxu0 0.0
    %1328 = vmatprep.subr.mxu0 0.0
    %1329 = vmatpush1.msra.mxu0 0.0
    %1330 = vmatprep.subr.mxu0 0.0
    %1331 = vmatpush1.msra.mxu0 0.0
    %1332 = vmatprep.subr.mxu0 0.0
    %1333 = vmatpush1.msra.mxu0 0.0
    %1334 = vmatprep.subr.mxu0 0.0
    %1335 = vmatpush1.msra.mxu0 0.0
    %1336 = vmatprep.subr.mxu0 0.0
    %1337 = vmatpush1.msra.mxu0 %v1301
    %1338 = vmatprep.subr.mxu0 0.0
    %1339 = vmatpush2.msra.mxu0 0.0
    %1340 = vmatprep.subr.mxu0 0.0
    %1341 = vmatpush2.msra.mxu0 0.0
    %1342 = vmatprep.subr.mxu0 0.0
    %1343 = vmatpush2.msra.mxu0 0.0
    %1344 = vmatprep.subr.mxu0 0.0
    %1345 = vmatpush2.msra.mxu0 0.0
    %1346 = vmatprep.subr.mxu0 0.0
    %1347 = vmatpush2.msra.mxu0 0.0
    %1348 = vmatprep.subr.mxu0 0.0
    %1349 = vmatpush2.msra.mxu0 0.0
    %1350 = vmatprep.subr.mxu0 0.0
    %1351 = vmatpush2.msra.mxu0 0.0
    %1352 = vmatprep.subr.mxu0 0.0
    %1353 = vmatpush2.msra.mxu0 0.0
    %1354 = vmatprep.subr.mxu0 0.0
    %1355 = vmatpush2.msra.mxu0 0.0
    %1356 = vmatprep.subr.mxu0 0.0
    %1357 = vmatpush2.msra.mxu0 0.0
    %1358 = vmatprep.subr.mxu0 0.0
    %1359 = vmatpush2.msra.mxu0 0.0
    %1360 = vmatprep.subr.mxu0 0.0
    %1361 = vmatpush2.msra.mxu0 0.0
    %1362 = vmatprep.subr.mxu0 0.0
    %1363 = vmatpush2.msra.mxu0 0.0
    %1364 = vmatprep.subr.mxu0 0.0
    %1365 = vmatpush2.msra.mxu0 0.0
    %1366 = vmatprep.subr.mxu0 0.0
    %1367 = vmatpush2.msra.mxu0 0.0
    %1368 = vmatprep.subr.mxu0 0.0
    %1369 = vmatpush2.msra.mxu0 0.0
    %1370 = vmatprep.mubr.f32.mxu0 0.0
    %1371 = vmatmul.mubr.f32.gmra.mxu0 %v1304
    %v1372 = vpop.f32.mrf.mxu0
    %v1373 = vadd.f32 0.0, %v1372
    %v1374 = vpop.f32.mrf.mxu0
    %1375 = vdwg.mxu0
    %1376 = vrot.lane.b32.xlu0 %v204, 64
    %v1377 = vpop.permute.xlu0 %1376
    %v1380 = vsel %vm209, %v918, 0
    %1382 = vmatprep.subr.mxu0 0.0
    %1383 = vmatpush1.msra.mxu0 0.0
    %1384 = vmatprep.subr.mxu0 0.0
    %1385 = vmatpush1.msra.mxu0 0.0
    %1386 = vmatprep.subr.mxu0 0.0
    %1387 = vmatpush1.msra.mxu0 0.0
    %1388 = vmatprep.subr.mxu0 0.0
    %1389 = vmatpush1.msra.mxu0 0.0
    %1390 = vmatprep.subr.mxu0 0.0
    %1391 = vmatpush1.msra.mxu0 0.0
    %1392 = vmatprep.subr.mxu0 0.0
    %1393 = vmatpush1.msra.mxu0 0.0
    %1394 = vmatprep.subr.mxu0 0.0
    %1395 = vmatpush1.msra.mxu0 0.0
    %1396 = vmatprep.subr.mxu0 0.0
    %1397 = vmatpush1.msra.mxu0 0.0
    %1398 = vmatprep.subr.mxu0 0.0
    %1399 = vmatpush1.msra.mxu0 0.0
    %1400 = vmatprep.subr.mxu0 0.0
    %1401 = vmatpush1.msra.mxu0 0.0
    %1402 = vmatprep.subr.mxu0 0.0
    %1403 = vmatpush1.msra.mxu0 0.0
    %1404 = vmatprep.subr.mxu0 0.0
    %1405 = vmatpush1.msra.mxu0 0.0
    %1406 = vmatprep.subr.mxu0 0.0
    %1407 = vmatpush1.msra.mxu0 0.0
    %1408 = vmatprep.subr.mxu0 0.0
    %1409 = vmatpush1.msra.mxu0 0.0
    %1410 = vmatprep.subr.mxu0 0.0
    %1411 = vmatpush1.msra.mxu0 0.0
    %1412 = vmatprep.subr.mxu0 0.0
    %1413 = vmatpush1.msra.mxu0 %v1377
    %1414 = vmatprep.subr.mxu0 0.0
    %1415 = vmatpush2.msra.mxu0 0.0
    %1416 = vmatprep.subr.mxu0 0.0
    %1417 = vmatpush2.msra.mxu0 0.0
    %1418 = vmatprep.subr.mxu0 0.0
    %1419 = vmatpush2.msra.mxu0 0.0
    %1420 = vmatprep.subr.mxu0 0.0
    %1421 = vmatpush2.msra.mxu0 0.0
    %1422 = vmatprep.subr.mxu0 0.0
    %1423 = vmatpush2.msra.mxu0 0.0
    %1424 = vmatprep.subr.mxu0 0.0
    %1425 = vmatpush2.msra.mxu0 0.0
    %1426 = vmatprep.subr.mxu0 0.0
    %1427 = vmatpush2.msra.mxu0 0.0
    %1428 = vmatprep.subr.mxu0 0.0
    %1429 = vmatpush2.msra.mxu0 0.0
    %1430 = vmatprep.subr.mxu0 0.0
    %1431 = vmatpush2.msra.mxu0 0.0
    %1432 = vmatprep.subr.mxu0 0.0
    %1433 = vmatpush2.msra.mxu0 0.0
    %1434 = vmatprep.subr.mxu0 0.0
    %1435 = vmatpush2.msra.mxu0 0.0
    %1436 = vmatprep.subr.mxu0 0.0
    %1437 = vmatpush2.msra.mxu0 0.0
    %1438 = vmatprep.subr.mxu0 0.0
    %1439 = vmatpush2.msra.mxu0 0.0
    %1440 = vmatprep.subr.mxu0 0.0
    %1441 = vmatpush2.msra.mxu0 0.0
    %1442 = vmatprep.subr.mxu0 0.0
    %1443 = vmatpush2.msra.mxu0 0.0
    %1444 = vmatprep.subr.mxu0 0.0
    %1445 = vmatpush2.msra.mxu0 0.0
    %1446 = vmatprep.mubr.f32.mxu0 0.0
    %1447 = vmatmul.mubr.f32.gmra.mxu0 %v1380
    %v1448 = vpop.f32.mrf.mxu0
    %v1449 = vadd.f32 0.0, %v1448
    %v1450 = vpop.f32.mrf.mxu0
    %1451 = vdwg.mxu0
    %1452 = vrot.lane.b32.xlu0 %v206, 64
    %v1453 = vpop.permute.xlu0 %1452
    %v1456 = vsel %vm209, %v919, 0
    %1458 = vmatprep.subr.mxu0 0.0
    %1459 = vmatpush1.msra.mxu0 0.0
    %1460 = vmatprep.subr.mxu0 0.0
    %1461 = vmatpush1.msra.mxu0 0.0
    %1462 = vmatprep.subr.mxu0 0.0
    %1463 = vmatpush1.msra.mxu0 0.0
    %1464 = vmatprep.subr.mxu0 0.0
    %1465 = vmatpush1.msra.mxu0 0.0
    %1466 = vmatprep.subr.mxu0 0.0
    %1467 = vmatpush1.msra.mxu0 0.0
    %1468 = vmatprep.subr.mxu0 0.0
    %1469 = vmatpush1.msra.mxu0 0.0
    %1470 = vmatprep.subr.mxu0 0.0
    %1471 = vmatpush1.msra.mxu0 0.0
    %1472 = vmatprep.subr.mxu0 0.0
    %1473 = vmatpush1.msra.mxu0 0.0
    %1474 = vmatprep.subr.mxu0 0.0
    %1475 = vmatpush1.msra.mxu0 0.0
    %1476 = vmatprep.subr.mxu0 0.0
    %1477 = vmatpush1.msra.mxu0 0.0
    %1478 = vmatprep.subr.mxu0 0.0
    %1479 = vmatpush1.msra.mxu0 0.0
    %1480 = vmatprep.subr.mxu0 0.0
    %1481 = vmatpush1.msra.mxu0 0.0
    %1482 = vmatprep.subr.mxu0 0.0
    %1483 = vmatpush1.msra.mxu0 0.0
    %1484 = vmatprep.subr.mxu0 0.0
    %1485 = vmatpush1.msra.mxu0 0.0
    %1486 = vmatprep.subr.mxu0 0.0
    %1487 = vmatpush1.msra.mxu0 0.0
    %1488 = vmatprep.subr.mxu0 0.0
    %1489 = vmatpush1.msra.mxu0 %v1453
    %1490 = vmatprep.subr.mxu0 0.0
    %1491 = vmatpush2.msra.mxu0 0.0
    %1492 = vmatprep.subr.mxu0 0.0
    %1493 = vmatpush2.msra.mxu0 0.0
    %1494 = vmatprep.subr.mxu0 0.0
    %1495 = vmatpush2.msra.mxu0 0.0
    %1496 = vmatprep.subr.mxu0 0.0
    %1497 = vmatpush2.msra.mxu0 0.0
    %1498 = vmatprep.subr.mxu0 0.0
    %1499 = vmatpush2.msra.mxu0 0.0
    %1500 = vmatprep.subr.mxu0 0.0
    %1501 = vmatpush2.msra.mxu0 0.0
    %1502 = vmatprep.subr.mxu0 0.0
    %1503 = vmatpush2.msra.mxu0 0.0
    %1504 = vmatprep.subr.mxu0 0.0
    %1505 = vmatpush2.msra.mxu0 0.0
    %1506 = vmatprep.subr.mxu0 0.0
    %1507 = vmatpush2.msra.mxu0 0.0
    %1508 = vmatprep.subr.mxu0 0.0
    %1509 = vmatpush2.msra.mxu0 0.0
    %1510 = vmatprep.subr.mxu0 0.0
    %1511 = vmatpush2.msra.mxu0 0.0
    %1512 = vmatprep.subr.mxu0 0.0
    %1513 = vmatpush2.msra.mxu0 0.0
    %1514 = vmatprep.subr.mxu0 0.0
    %1515 = vmatpush2.msra.mxu0 0.0
    %1516 = vmatprep.subr.mxu0 0.0
    %1517 = vmatpush2.msra.mxu0 0.0
    %1518 = vmatprep.subr.mxu0 0.0
    %1519 = vmatpush2.msra.mxu0 0.0
    %1520 = vmatprep.subr.mxu0 0.0
    %1521 = vmatpush2.msra.mxu0 0.0
    %1522 = vmatprep.mubr.f32.mxu0 0.0
    %1523 = vmatmul.mubr.f32.gmra.mxu0 %v1456
    %v1524 = vpop.f32.mrf.mxu0
    %v1525 = vadd.f32 0.0, %v1524
    %v1526 = vpop.f32.mrf.mxu0
    %1527 = vdwg.mxu0
    %1530 = vrot.lane.b32.xlu0 %v1145, 8
    %v1531 = vpop.permute.xlu0 %1530
    %1532 = vrot.lane.b32.xlu0 %v1221, 8
    %v1533 = vpop.permute.xlu0 %1532
    %1538 = vrot.lane.b32.xlu0 %v1297, 16
    %v1539 = vpop.permute.xlu0 %1538
    %1540 = vrot.lane.b32.xlu0 %v1373, 16
    %v1541 = vpop.permute.xlu0 %1540
    %1546 = vrot.lane.b32.xlu0 %v1449, 24
    %v1547 = vpop.permute.xlu0 %1546
    %1548 = vrot.lane.b32.xlu0 %v1525, 24
    %v1549 = vpop.permute.xlu0 %1548
    %v1552 = vsel %vm209, %v993, %v1531
    %v1553 = vsel %vm209, %v1069, %v1533
    %vm1554 = vcmask 130048
    %v1555 = vsel %vm1554, %v1552, %v1539
    %v1556 = vsel %vm1554, %v1553, %v1541
    %vm1557 = vcmask 195584
    %v1558 = vsel %vm1557, %v1555, %v1547
    %v1559 = vsel %vm1557, %v1556, %v1549
    %v1560 = vld [vmem:[%s4] sm:$0xff]
    %v1561 = vld [vmem:[%s4 + $0x8] sm:$0xff]
    %v1562 = vld [vmem:[%s4 + $0x10] sm:$0xff]
    %v1563 = vld [vmem:[%s4 + $0x18] sm:$0xff]
    %v1565 = vsel %vm64, %v1558, 0
    %v1568 = vsel %vm64, %v1559, 0
    %1570 = vmatprep.subr.mxu0 0.0
    %1571 = vmatpush1.msra.mxu0 0.0
    %1572 = vmatprep.subr.mxu0 0.0
    %1573 = vmatpush1.msra.mxu0 0.0
    %1574 = vmatprep.subr.mxu0 0.0
    %1575 = vmatpush1.msra.mxu0 0.0
    %1576 = vmatprep.subr.mxu0 0.0
    %1577 = vmatpush1.msra.mxu0 0.0
    %1578 = vmatprep.subr.mxu0 0.0
    %1579 = vmatpush1.msra.mxu0 0.0
    %1580 = vmatprep.subr.mxu0 0.0
    %1581 = vmatpush1.msra.mxu0 0.0
    %1582 = vmatprep.subr.mxu0 0.0
    %1583 = vmatpush1.msra.mxu0 0.0
    %1584 = vmatprep.subr.mxu0 0.0
    %1585 = vmatpush1.msra.mxu0 0.0
    %1586 = vmatprep.subr.mxu0 0.0
    %1587 = vmatpush1.msra.mxu0 0.0
    %1588 = vmatprep.subr.mxu0 0.0
    %1589 = vmatpush1.msra.mxu0 0.0
    %1590 = vmatprep.subr.mxu0 0.0
    %1591 = vmatpush1.msra.mxu0 0.0
    %1592 = vmatprep.subr.mxu0 0.0
    %1593 = vmatpush1.msra.mxu0 0.0
    %1594 = vmatprep.subr.mxu0 0.0
    %1595 = vmatpush1.msra.mxu0 %v1563
    %1596 = vmatprep.subr.mxu0 0.0
    %1597 = vmatpush1.msra.mxu0 %v1562
    %1598 = vmatprep.subr.mxu0 0.0
    %1599 = vmatpush1.msra.mxu0 %v1561
    %1600 = vmatprep.subr.mxu0 0.0
    %1601 = vmatpush1.msra.mxu0 %v1560
    %1602 = vmatprep.subr.mxu0 0.0
    %1603 = vmatpush2.msra.mxu0 0.0
    %1604 = vmatprep.subr.mxu0 0.0
    %1605 = vmatpush2.msra.mxu0 0.0
    %1606 = vmatprep.subr.mxu0 0.0
    %1607 = vmatpush2.msra.mxu0 0.0
    %1608 = vmatprep.subr.mxu0 0.0
    %1609 = vmatpush2.msra.mxu0 0.0
    %1610 = vmatprep.subr.mxu0 0.0
    %1611 = vmatpush2.msra.mxu0 0.0
    %1612 = vmatprep.subr.mxu0 0.0
    %1613 = vmatpush2.msra.mxu0 0.0
    %1614 = vmatprep.subr.mxu0 0.0
    %1615 = vmatpush2.msra.mxu0 0.0
    %1616 = vmatprep.subr.mxu0 0.0
    %1617 = vmatpush2.msra.mxu0 0.0
    %1618 = vmatprep.subr.mxu0 0.0
    %1619 = vmatpush2.msra.mxu0 0.0
    %1620 = vmatprep.subr.mxu0 0.0
    %1621 = vmatpush2.msra.mxu0 0.0
    %1622 = vmatprep.subr.mxu0 0.0
    %1623 = vmatpush2.msra.mxu0 0.0
    %1624 = vmatprep.subr.mxu0 0.0
    %1625 = vmatpush2.msra.mxu0 0.0
    %1626 = vmatprep.subr.mxu0 0.0
    %1627 = vmatpush2.msra.mxu0 0.0
    %1628 = vmatprep.subr.mxu0 0.0
    %1629 = vmatpush2.msra.mxu0 0.0
    %1630 = vmatprep.subr.mxu0 0.0
    %1631 = vmatpush2.msra.mxu0 0.0
    %1632 = vmatprep.subr.mxu0 0.0
    %1633 = vmatpush2.msra.mxu0 0.0
    %1634 = vmatprep.mubr.f32.mxu0 0.0
    %1635 = vmatmul.mubr.f32.gmra.mxu0 %v1565
    %v1636 = vpop.f32.mrf.mxu0
    %v1637 = vadd.f32 0.0, %v1636
    %v1638 = vpop.f32.mrf.mxu0
    %1639 = vmatprep.mubr.f32.mxu0 0.0
    %1640 = vmatmul.mubr.f32.gmra.mxu0 %v1568
    %v1641 = vpop.f32.mrf.mxu0
    %v1642 = vadd.f32 0.0, %v1641
    %v1643 = vpop.f32.mrf.mxu0
    %1644 = vdwg.mxu0
    %v1645 = vadd.f32 %v60, %v1637
    %v1646 = vadd.f32 %v61, %v1642
    %v1647 = vld [vmem:[%s5] sm:$0x1]
    %v1649 = vlaneseq
    %v1650 = vshrl.u32 %v1649, 7
    %v1651 = vsub.s32 0, %v1650
    %v1652 = vrot.slane %v1647, %v1651
    %v1654 = vadd.f32 %v1645, %v1652
    %v1655 = vadd.f32 %v1646, %v1652
    %v1656 = vld [vmem:[%s6] sm:$0x1]
    %v1657 = vld [vmem:[%s7] sm:$0x1]
    %v1658 = vsel %vm64, %v1654, 0.0
    %1659 = vadd.xlane.f32.xlu0 %v1658
    %v1660 = vpop.xlane.xlu0 %1659
    %v1661 = vsel %vm64, %v1655, 0.0
    %1662 = vadd.xlane.f32.xlu0 %v1661
    %v1663 = vpop.xlane.xlu0 %1662
    %v1664 = vmul.f32 %v1660, %v71
    %v1665 = vmul.f32 %v1663, %v71
    %v1666 = vsub.f32 %v1654, %v1664
    %v1667 = vsub.f32 %v1655, %v1665
    %v1668 = vmul.f32 %v1666, %v1666
    %v1669 = vmul.f32 %v1667, %v1667
    %v1670 = vsel %vm64, %v1668, 0.0
    %1671 = vadd.xlane.f32.xlu0 %v1670
    %v1672 = vpop.xlane.xlu0 %1671
    %v1673 = vsel %vm64, %v1669, 0.0
    %1674 = vadd.xlane.f32.xlu0 %v1673
    %v1675 = vpop.xlane.xlu0 %1674
    %v1676 = vmul.f32 %v1672, %v71
    %v1677 = vmul.f32 %v1675, %v71
    %v1678 = vadd.f32 %v1676, 1e-05
    %v1679 = vadd.f32 %v1677, 1e-05
    %v1680 = vrsqrt.pop %v1678
    %v1681 = vrsqrt.pop %v1679
    %v1682 = vmul.f32 %v1666, %v1680
    %v1683 = vmul.f32 %v1667, %v1681
    %v1685 = vlaneseq
    %v1686 = vshrl.u32 %v1685, 7
    %v1687 = vsub.s32 0, %v1686
    %v1688 = vrot.slane %v1656, %v1687
    %v1690 = vmul.f32 %v1682, %v1688
    %v1691 = vmul.f32 %v1683, %v1688
    %v1693 = vlaneseq
    %v1694 = vshrl.u32 %v1693, 7
    %v1695 = vsub.s32 0, %v1694
    %v1696 = vrot.slane %v1657, %v1695
    %v1698 = vadd.f32 %v1690, %v1696
    %v1699 = vadd.f32 %v1691, %v1696
    %v1700 = vld [vmem:[%s8] sm:$0xff]
    %v1701 = vld [vmem:[%s8 + $0x8] sm:$0xff]
    %v1702 = vld [vmem:[%s8 + $0x10] sm:$0xff]
    %v1703 = vld [vmem:[%s8 + $0x18] sm:$0xff]
    %v1704 = vld [vmem:[%s9] sm:$0x1]
    %v1706 = vlaneseq
    %v1707 = vshrl.u32 %v1706, 7
    %v1708 = vsub.s32 0, %v1707
    %v1709 = vrot.slane %v1704, %v1708
    %v1712 = vsel %vm64, %v1698, 0
    %v1715 = vsel %vm64, %v1699, 0
    %1717 = vmatprep.subr.mxu0 0.0
    %1718 = vmatpush1.msra.mxu0 0.0
    %1719 = vmatprep.subr.mxu0 0.0
    %1720 = vmatpush1.msra.mxu0 0.0
    %1721 = vmatprep.subr.mxu0 0.0
    %1722 = vmatpush1.msra.mxu0 0.0
    %1723 = vmatprep.subr.mxu0 0.0
    %1724 = vmatpush1.msra.mxu0 0.0
    %1725 = vmatprep.subr.mxu0 0.0
    %1726 = vmatpush1.msra.mxu0 0.0
    %1727 = vmatprep.subr.mxu0 0.0
    %1728 = vmatpush1.msra.mxu0 0.0
    %1729 = vmatprep.subr.mxu0 0.0
    %1730 = vmatpush1.msra.mxu0 0.0
    %1731 = vmatprep.subr.mxu0 0.0
    %1732 = vmatpush1.msra.mxu0 0.0
    %1733 = vmatprep.subr.mxu0 0.0
    %1734 = vmatpush1.msra.mxu0 0.0
    %1735 = vmatprep.subr.mxu0 0.0
    %1736 = vmatpush1.msra.mxu0 0.0
    %1737 = vmatprep.subr.mxu0 0.0
    %1738 = vmatpush1.msra.mxu0 0.0
    %1739 = vmatprep.subr.mxu0 0.0
    %1740 = vmatpush1.msra.mxu0 0.0
    %1741 = vmatprep.subr.mxu0 0.0
    %1742 = vmatpush1.msra.mxu0 %v1703
    %1743 = vmatprep.subr.mxu0 0.0
    %1744 = vmatpush1.msra.mxu0 %v1702
    %1745 = vmatprep.subr.mxu0 0.0
    %1746 = vmatpush1.msra.mxu0 %v1701
    %1747 = vmatprep.subr.mxu0 0.0
    %1748 = vmatpush1.msra.mxu0 %v1700
    %1749 = vmatprep.subr.mxu0 0.0
    %1750 = vmatpush2.msra.mxu0 0.0
    %1751 = vmatprep.subr.mxu0 0.0
    %1752 = vmatpush2.msra.mxu0 0.0
    %1753 = vmatprep.subr.mxu0 0.0
    %1754 = vmatpush2.msra.mxu0 0.0
    %1755 = vmatprep.subr.mxu0 0.0
    %1756 = vmatpush2.msra.mxu0 0.0
    %1757 = vmatprep.subr.mxu0 0.0
    %1758 = vmatpush2.msra.mxu0 0.0
    %1759 = vmatprep.subr.mxu0 0.0
    %1760 = vmatpush2.msra.mxu0 0.0
    %1761 = vmatprep.subr.mxu0 0.0
    %1762 = vmatpush2.msra.mxu0 0.0
    %1763 = vmatprep.subr.mxu0 0.0
    %1764 = vmatpush2.msra.mxu0 0.0
    %1765 = vmatprep.subr.mxu0 0.0
    %1766 = vmatpush2.msra.mxu0 0.0
    %1767 = vmatprep.subr.mxu0 0.0
    %1768 = vmatpush2.msra.mxu0 0.0
    %1769 = vmatprep.subr.mxu0 0.0
    %1770 = vmatpush2.msra.mxu0 0.0
    %1771 = vmatprep.subr.mxu0 0.0
    %1772 = vmatpush2.msra.mxu0 0.0
    %1773 = vmatprep.subr.mxu0 0.0
    %1774 = vmatpush2.msra.mxu0 0.0
    %1775 = vmatprep.subr.mxu0 0.0
    %1776 = vmatpush2.msra.mxu0 0.0
    %1777 = vmatprep.subr.mxu0 0.0
    %1778 = vmatpush2.msra.mxu0 0.0
    %1779 = vmatprep.subr.mxu0 0.0
    %1780 = vmatpush2.msra.mxu0 0.0
    %1781 = vmatprep.mubr.f32.mxu0 0.0
    %1782 = vmatmul.mubr.f32.gmra.mxu0 %v1712
    %v1783 = vpop.f32.mrf.mxu0
    %v1784 = vadd.f32 %v1709, %v1783
    %v1785 = vpop.f32.mrf.mxu0
    %1786 = vmatprep.mubr.f32.mxu0 0.0
    %1787 = vmatmul.mubr.f32.gmra.mxu0 %v1715
    %v1788 = vpop.f32.mrf.mxu0
    %v1789 = vadd.f32 %v1709, %v1788
    %v1790 = vpop.f32.mrf.mxu0
    %1791 = vdwg.mxu0
    %v1792 = vmax.f32 %v1784, 0.0
    %v1793 = vmax.f32 %v1789, 0.0
    %v1794 = vld [vmem:[%s10] sm:$0xff]
    %v1795 = vld [vmem:[%s10 + $0x8] sm:$0xff]
    %v1796 = vld [vmem:[%s10 + $0x10] sm:$0xff]
    %v1797 = vld [vmem:[%s10 + $0x18] sm:$0xff]
    %v1798 = vld [vmem:[%s10 + $0x20] sm:$0xff]
    %v1799 = vld [vmem:[%s10 + $0x28] sm:$0xff]
    %v1800 = vld [vmem:[%s10 + $0x30] sm:$0xff]
    %v1801 = vld [vmem:[%s10 + $0x38] sm:$0xff]
    %v1802 = vld [vmem:[%s10 + $0x40] sm:$0xff]
    %v1803 = vld [vmem:[%s10 + $0x48] sm:$0xff]
    %v1804 = vld [vmem:[%s10 + $0x50] sm:$0xff]
    %v1805 = vld [vmem:[%s10 + $0x58] sm:$0xff]
    %v1806 = vld [vmem:[%s10 + $0x60] sm:$0xff]
    %v1807 = vld [vmem:[%s10 + $0x68] sm:$0xff]
    %v1808 = vld [vmem:[%s10 + $0x70] sm:$0xff]
    %v1809 = vld [vmem:[%s10 + $0x78] sm:$0xff]
    %1810 = vmatprep.subr.mxu0 0.0
    %1811 = vmatpush1.msra.mxu0 %v1809
    %1812 = vmatprep.subr.mxu0 0.0
    %1813 = vmatpush1.msra.mxu0 %v1808
    %1814 = vmatprep.subr.mxu0 0.0
    %1815 = vmatpush1.msra.mxu0 %v1807
    %1816 = vmatprep.subr.mxu0 0.0
    %1817 = vmatpush1.msra.mxu0 %v1806
    %1818 = vmatprep.subr.mxu0 0.0
    %1819 = vmatpush1.msra.mxu0 %v1805
    %1820 = vmatprep.subr.mxu0 0.0
    %1821 = vmatpush1.msra.mxu0 %v1804
    %1822 = vmatprep.subr.mxu0 0.0
    %1823 = vmatpush1.msra.mxu0 %v1803
    %1824 = vmatprep.subr.mxu0 0.0
    %1825 = vmatpush1.msra.mxu0 %v1802
    %1826 = vmatprep.subr.mxu0 0.0
    %1827 = vmatpush1.msra.mxu0 %v1801
    %1828 = vmatprep.subr.mxu0 0.0
    %1829 = vmatpush1.msra.mxu0 %v1800
    %1830 = vmatprep.subr.mxu0 0.0
    %1831 = vmatpush1.msra.mxu0 %v1799
    %1832 = vmatprep.subr.mxu0 0.0
    %1833 = vmatpush1.msra.mxu0 %v1798
    %1834 = vmatprep.subr.mxu0 0.0
    %1835 = vmatpush1.msra.mxu0 %v1797
    %1836 = vmatprep.subr.mxu0 0.0
    %1837 = vmatpush1.msra.mxu0 %v1796
    %1838 = vmatprep.subr.mxu0 0.0
    %1839 = vmatpush1.msra.mxu0 %v1795
    %1840 = vmatprep.subr.mxu0 0.0
    %1841 = vmatpush1.msra.mxu0 %v1794
    %1842 = vmatprep.subr.mxu0 0.0
    %1843 = vmatpush2.msra.mxu0 0.0
    %1844 = vmatprep.subr.mxu0 0.0
    %1845 = vmatpush2.msra.mxu0 0.0
    %1846 = vmatprep.subr.mxu0 0.0
    %1847 = vmatpush2.msra.mxu0 0.0
    %1848 = vmatprep.subr.mxu0 0.0
    %1849 = vmatpush2.msra.mxu0 0.0
    %1850 = vmatprep.subr.mxu0 0.0
    %1851 = vmatpush2.msra.mxu0 0.0
    %1852 = vmatprep.subr.mxu0 0.0
    %1853 = vmatpush2.msra.mxu0 0.0
    %1854 = vmatprep.subr.mxu0 0.0
    %1855 = vmatpush2.msra.mxu0 0.0
    %1856 = vmatprep.subr.mxu0 0.0
    %1857 = vmatpush2.msra.mxu0 0.0
    %1858 = vmatprep.subr.mxu0 0.0
    %1859 = vmatpush2.msra.mxu0 0.0
    %1860 = vmatprep.subr.mxu0 0.0
    %1861 = vmatpush2.msra.mxu0 0.0
    %1862 = vmatprep.subr.mxu0 0.0
    %1863 = vmatpush2.msra.mxu0 0.0
    %1864 = vmatprep.subr.mxu0 0.0
    %1865 = vmatpush2.msra.mxu0 0.0
    %1866 = vmatprep.subr.mxu0 0.0
    %1867 = vmatpush2.msra.mxu0 0.0
    %1868 = vmatprep.subr.mxu0 0.0
    %1869 = vmatpush2.msra.mxu0 0.0
    %1870 = vmatprep.subr.mxu0 0.0
    %1871 = vmatpush2.msra.mxu0 0.0
    %1872 = vmatprep.subr.mxu0 0.0
    %1873 = vmatpush2.msra.mxu0 0.0
    %1874 = vmatprep.mubr.f32.mxu0 0.0
    %1875 = vmatmul.mubr.f32.gmra.mxu0 %v1792
    %v1876 = vpop.f32.mrf.mxu0
    %v1877 = vadd.f32 0.0, %v1876
    %v1878 = vpop.f32.mrf.mxu0
    %1879 = vmatprep.mubr.f32.mxu0 0.0
    %1880 = vmatmul.mubr.f32.gmra.mxu0 %v1793
    %v1881 = vpop.f32.mrf.mxu0
    %v1882 = vadd.f32 0.0, %v1881
    %v1883 = vpop.f32.mrf.mxu0
    %1884 = vdwg.mxu0
    %v1885 = vadd.f32 %v1654, %v1877
    %v1886 = vadd.f32 %v1655, %v1882
    %v1887 = vld [vmem:[%s11] sm:$0x1]
    %v1889 = vlaneseq
    %v1890 = vshrl.u32 %v1889, 7
    %v1891 = vsub.s32 0, %v1890
    %v1892 = vrot.slane %v1887, %v1891
    %v1894 = vadd.f32 %v1885, %v1892
    %v1895 = vadd.f32 %v1886, %v1892
    %s1896 = scalar_lea.vmem %s1, 1
    %v1897 = vld [vmem:[%s1896] sm:$0x1]
    %s1898 = scalar_lea.vmem %s2, 1
    %v1899 = vld [vmem:[%s1898] sm:$0x1]
    %v1900 = vsel %vm64, %v1894, 0.0
    %1901 = vadd.xlane.f32.xlu0 %v1900
    %v1902 = vpop.xlane.xlu0 %1901
    %v1903 = vsel %vm64, %v1895, 0.0
    %1904 = vadd.xlane.f32.xlu0 %v1903
    %v1905 = vpop.xlane.xlu0 %1904
    %v1906 = vmul.f32 %v1902, %v71
    %v1907 = vmul.f32 %v1905, %v71
    %v1908 = vsub.f32 %v1894, %v1906
    %v1909 = vsub.f32 %v1895, %v1907
    %v1910 = vmul.f32 %v1908, %v1908
    %v1911 = vmul.f32 %v1909, %v1909
    %v1912 = vsel %vm64, %v1910, 0.0
    %1913 = vadd.xlane.f32.xlu0 %v1912
    %v1914 = vpop.xlane.xlu0 %1913
    %v1915 = vsel %vm64, %v1911, 0.0
    %1916 = vadd.xlane.f32.xlu0 %v1915
    %v1917 = vpop.xlane.xlu0 %1916
    %v1918 = vmul.f32 %v1914, %v71
    %v1919 = vmul.f32 %v1917, %v71
    %v1920 = vadd.f32 %v1918, 1e-05
    %v1921 = vadd.f32 %v1919, 1e-05
    %v1922 = vrsqrt.pop %v1920
    %v1923 = vrsqrt.pop %v1921
    %v1924 = vmul.f32 %v1908, %v1922
    %v1925 = vmul.f32 %v1909, %v1923
    %v1927 = vlaneseq
    %v1928 = vshrl.u32 %v1927, 7
    %v1929 = vsub.s32 0, %v1928
    %v1930 = vrot.slane %v1897, %v1929
    %v1932 = vmul.f32 %v1924, %v1930
    %v1933 = vmul.f32 %v1925, %v1930
    %v1935 = vlaneseq
    %v1936 = vshrl.u32 %v1935, 7
    %v1937 = vsub.s32 0, %v1936
    %v1938 = vrot.slane %v1899, %v1937
    %v1940 = vadd.f32 %v1932, %v1938
    %v1941 = vadd.f32 %v1933, %v1938
    %s1942 = scalar_lea.vmem %s3, 32
    %v1943 = vld [vmem:[%s1942] sm:$0xff]
    %v1944 = vld [vmem:[%s1942 + $0x8] sm:$0xff]
    %v1945 = vld [vmem:[%s1942 + $0x10] sm:$0xff]
    %v1946 = vld [vmem:[%s1942 + $0x18] sm:$0xff]
    %v1948 = vsel %vm64, %v1940, 0
    %v1951 = vsel %vm64, %v1941, 0
    %1953 = vmatprep.subr.mxu0 0.0
    %1954 = vmatpush1.msra.mxu0 0.0
    %1955 = vmatprep.subr.mxu0 0.0
    %1956 = vmatpush1.msra.mxu0 0.0
    %1957 = vmatprep.subr.mxu0 0.0
    %1958 = vmatpush1.msra.mxu0 0.0
    %1959 = vmatprep.subr.mxu0 0.0
    %1960 = vmatpush1.msra.mxu0 0.0
    %1961 = vmatprep.subr.mxu0 0.0
    %1962 = vmatpush1.msra.mxu0 0.0
    %1963 = vmatprep.subr.mxu0 0.0
    %1964 = vmatpush1.msra.mxu0 0.0
    %1965 = vmatprep.subr.mxu0 0.0
    %1966 = vmatpush1.msra.mxu0 0.0
    %1967 = vmatprep.subr.mxu0 0.0
    %1968 = vmatpush1.msra.mxu0 0.0
    %1969 = vmatprep.subr.mxu0 0.0
    %1970 = vmatpush1.msra.mxu0 0.0
    %1971 = vmatprep.subr.mxu0 0.0
    %1972 = vmatpush1.msra.mxu0 0.0
    %1973 = vmatprep.subr.mxu0 0.0
    %1974 = vmatpush1.msra.mxu0 0.0
    %1975 = vmatprep.subr.mxu0 0.0
    %1976 = vmatpush1.msra.mxu0 0.0
    %1977 = vmatprep.subr.mxu0 0.0
    %1978 = vmatpush1.msra.mxu0 %v1946
    %1979 = vmatprep.subr.mxu0 0.0
    %1980 = vmatpush1.msra.mxu0 %v1945
    %1981 = vmatprep.subr.mxu0 0.0
    %1982 = vmatpush1.msra.mxu0 %v1944
    %1983 = vmatprep.subr.mxu0 0.0
    %1984 = vmatpush1.msra.mxu0 %v1943
    %1985 = vmatprep.subr.mxu0 0.0
    %1986 = vmatpush2.msra.mxu0 0.0
    %1987 = vmatprep.subr.mxu0 0.0
    %1988 = vmatpush2.msra.mxu0 0.0
    %1989 = vmatprep.subr.mxu0 0.0
    %1990 = vmatpush2.msra.mxu0 0.0
    %1991 = vmatprep.subr.mxu0 0.0
    %1992 = vmatpush2.msra.mxu0 0.0
    %1993 = vmatprep.subr.mxu0 0.0
    %1994 = vmatpush2.msra.mxu0 0.0
    %1995 = vmatprep.subr.mxu0 0.0
    %1996 = vmatpush2.msra.mxu0 0.0
    %1997 = vmatprep.subr.mxu0 0.0
    %1998 = vmatpush2.msra.mxu0 0.0
    %1999 = vmatprep.subr.mxu0 0.0
    %2000 = vmatpush2.msra.mxu0 0.0
    %2001 = vmatprep.subr.mxu0 0.0
    %2002 = vmatpush2.msra.mxu0 0.0
    %2003 = vmatprep.subr.mxu0 0.0
    %2004 = vmatpush2.msra.mxu0 0.0
    %2005 = vmatprep.subr.mxu0 0.0
    %2006 = vmatpush2.msra.mxu0 0.0
    %2007 = vmatprep.subr.mxu0 0.0
    %2008 = vmatpush2.msra.mxu0 0.0
    %2009 = vmatprep.subr.mxu0 0.0
    %2010 = vmatpush2.msra.mxu0 0.0
    %2011 = vmatprep.subr.mxu0 0.0
    %2012 = vmatpush2.msra.mxu0 0.0
    %2013 = vmatprep.subr.mxu0 0.0
    %2014 = vmatpush2.msra.mxu0 0.0
    %2015 = vmatprep.subr.mxu0 0.0
    %2016 = vmatpush2.msra.mxu0 0.0
    %2017 = vmatprep.mubr.f32.mxu0 0.0
    %2018 = vmatmul.mubr.f32.gmra.mxu0 %v1948
    %v2019 = vpop.f32.mrf.mxu0
    %v2020 = vadd.f32 0.0, %v2019
    %v2021 = vpop.f32.mrf.mxu0
    %2022 = vmatprep.mubr.f32.mxu0 0.0
    %2023 = vmatmul.mubr.f32.gmra.mxu0 %v1951
    %v2024 = vpop.f32.mrf.mxu0
    %v2025 = vadd.f32 0.0, %v2024
    %v2026 = vpop.f32.mrf.mxu0
    %2027 = vdwg.mxu0
    %2030 = vrot.lane.b32.xlu0 %v2020, 120
    %v2031 = vpop.permute.xlu0 %2030
    %2032 = vrot.lane.b32.xlu0 %v2025, 120
    %v2033 = vpop.permute.xlu0 %2032
    %2034 = vrot.lane.b32.xlu0 %v2020, 112
    %v2035 = vpop.permute.xlu0 %2034
    %2036 = vrot.lane.b32.xlu0 %v2025, 112
    %v2037 = vpop.permute.xlu0 %2036
    %2038 = vrot.lane.b32.xlu0 %v2020, 104
    %v2039 = vpop.permute.xlu0 %2038
    %2040 = vrot.lane.b32.xlu0 %v2025, 104
    %v2041 = vpop.permute.xlu0 %2040
    %2042 = vrot.lane.b32.xlu0 %v2020, 96
    %v2043 = vpop.permute.xlu0 %2042
    %v2044 = vsel %vm209, %v2020, 0
    %v2046 = vsel %vm209, %v2043, 0
    %2048 = vmatprep.subr.mxu0 0.0
    %2049 = vmatpush1.xpose.msra.mxu0 0.0
    %2050 = vmatprep.subr.mxu0 0.0
    %2051 = vmatpush1.xpose.msra.mxu0 0.0
    %2052 = vmatprep.subr.mxu0 0.0
    %2053 = vmatpush1.xpose.msra.mxu0 0.0
    %2054 = vmatprep.subr.mxu0 0.0
    %2055 = vmatpush1.xpose.msra.mxu0 0.0
    %2056 = vmatprep.subr.mxu0 0.0
    %2057 = vmatpush1.xpose.msra.mxu0 0.0
    %2058 = vmatprep.subr.mxu0 0.0
    %2059 = vmatpush1.xpose.msra.mxu0 0.0
    %2060 = vmatprep.subr.mxu0 0.0
    %2061 = vmatpush1.xpose.msra.mxu0 0.0
    %2062 = vmatprep.subr.mxu0 0.0
    %2063 = vmatpush1.xpose.msra.mxu0 0.0
    %2064 = vmatprep.subr.mxu0 0.0
    %2065 = vmatpush1.xpose.msra.mxu0 0.0
    %2066 = vmatprep.subr.mxu0 0.0
    %2067 = vmatpush1.xpose.msra.mxu0 0.0
    %2068 = vmatprep.subr.mxu0 0.0
    %2069 = vmatpush1.xpose.msra.mxu0 0.0
    %2070 = vmatprep.subr.mxu0 0.0
    %2071 = vmatpush1.xpose.msra.mxu0 0.0
    %2072 = vmatprep.subr.mxu0 0.0
    %2073 = vmatpush1.xpose.msra.mxu0 0.0
    %2074 = vmatprep.subr.mxu0 0.0
    %2075 = vmatpush1.xpose.msra.mxu0 0.0
    %2076 = vmatprep.subr.mxu0 0.0
    %2077 = vmatpush1.xpose.msra.mxu0 0.0
    %2078 = vmatprep.subr.mxu0 0.0
    %2079 = vmatpush1.xpose.msra.mxu0 %v2046
    %2080 = vmatprep.subr.mxu0 0.0
    %2081 = vmatpush2.xpose.msra.mxu0 0.0
    %2082 = vmatprep.subr.mxu0 0.0
    %2083 = vmatpush2.xpose.msra.mxu0 0.0
    %2084 = vmatprep.subr.mxu0 0.0
    %2085 = vmatpush2.xpose.msra.mxu0 0.0
    %2086 = vmatprep.subr.mxu0 0.0
    %2087 = vmatpush2.xpose.msra.mxu0 0.0
    %2088 = vmatprep.subr.mxu0 0.0
    %2089 = vmatpush2.xpose.msra.mxu0 0.0
    %2090 = vmatprep.subr.mxu0 0.0
    %2091 = vmatpush2.xpose.msra.mxu0 0.0
    %2092 = vmatprep.subr.mxu0 0.0
    %2093 = vmatpush2.xpose.msra.mxu0 0.0
    %2094 = vmatprep.subr.mxu0 0.0
    %2095 = vmatpush2.xpose.msra.mxu0 0.0
    %2096 = vmatprep.subr.mxu0 0.0
    %2097 = vmatpush2.xpose.msra.mxu0 0.0
    %2098 = vmatprep.subr.mxu0 0.0
    %2099 = vmatpush2.xpose.msra.mxu0 0.0
    %2100 = vmatprep.subr.mxu0 0.0
    %2101 = vmatpush2.xpose.msra.mxu0 0.0
    %2102 = vmatprep.subr.mxu0 0.0
    %2103 = vmatpush2.xpose.msra.mxu0 0.0
    %2104 = vmatprep.subr.mxu0 0.0
    %2105 = vmatpush2.xpose.msra.mxu0 0.0
    %2106 = vmatprep.subr.mxu0 0.0
    %2107 = vmatpush2.xpose.msra.mxu0 0.0
    %2108 = vmatprep.subr.mxu0 0.0
    %2109 = vmatpush2.xpose.msra.mxu0 0.0
    %2110 = vmatprep.subr.mxu0 0.0
    %2111 = vmatpush2.xpose.msra.mxu0 0.0
    %2112 = vmatprep.mubr.f32.mxu0 0.0
    %2113 = vmatmul.mubr.f32.gmra.mxu0 %v2044
    %v2114 = vpop.f32.mrf.mxu0
    %v2115 = vadd.f32 0.0, %v2114
    %v2116 = vpop.f32.mrf.mxu0
    %2117 = vdwg.mxu0
    %2118 = vrot.lane.b32.xlu0 %v2025, 96
    %v2119 = vpop.permute.xlu0 %2118
    %v2120 = vsel %vm209, %v2025, 0
    %v2122 = vsel %vm209, %v2119, 0
    %2124 = vmatprep.subr.mxu0 0.0
    %2125 = vmatpush1.xpose.msra.mxu0 0.0
    %2126 = vmatprep.subr.mxu0 0.0
    %2127 = vmatpush1.xpose.msra.mxu0 0.0
    %2128 = vmatprep.subr.mxu0 0.0
    %2129 = vmatpush1.xpose.msra.mxu0 0.0
    %2130 = vmatprep.subr.mxu0 0.0
    %2131 = vmatpush1.xpose.msra.mxu0 0.0
    %2132 = vmatprep.subr.mxu0 0.0
    %2133 = vmatpush1.xpose.msra.mxu0 0.0
    %2134 = vmatprep.subr.mxu0 0.0
    %2135 = vmatpush1.xpose.msra.mxu0 0.0
    %2136 = vmatprep.subr.mxu0 0.0
    %2137 = vmatpush1.xpose.msra.mxu0 0.0
    %2138 = vmatprep.subr.mxu0 0.0
    %2139 = vmatpush1.xpose.msra.mxu0 0.0
    %2140 = vmatprep.subr.mxu0 0.0
    %2141 = vmatpush1.xpose.msra.mxu0 0.0
    %2142 = vmatprep.subr.mxu0 0.0
    %2143 = vmatpush1.xpose.msra.mxu0 0.0
    %2144 = vmatprep.subr.mxu0 0.0
    %2145 = vmatpush1.xpose.msra.mxu0 0.0
    %2146 = vmatprep.subr.mxu0 0.0
    %2147 = vmatpush1.xpose.msra.mxu0 0.0
    %2148 = vmatprep.subr.mxu0 0.0
    %2149 = vmatpush1.xpose.msra.mxu0 0.0
    %2150 = vmatprep.subr.mxu0 0.0
    %2151 = vmatpush1.xpose.msra.mxu0 0.0
    %2152 = vmatprep.subr.mxu0 0.0
    %2153 = vmatpush1.xpose.msra.mxu0 0.0
    %2154 = vmatprep.subr.mxu0 0.0
    %2155 = vmatpush1.xpose.msra.mxu0 %v2122
    %2156 = vmatprep.subr.mxu0 0.0
    %2157 = vmatpush2.xpose.msra.mxu0 0.0
    %2158 = vmatprep.subr.mxu0 0.0
    %2159 = vmatpush2.xpose.msra.mxu0 0.0
    %2160 = vmatprep.subr.mxu0 0.0
    %2161 = vmatpush2.xpose.msra.mxu0 0.0
    %2162 = vmatprep.subr.mxu0 0.0
    %2163 = vmatpush2.xpose.msra.mxu0 0.0
    %2164 = vmatprep.subr.mxu0 0.0
    %2165 = vmatpush2.xpose.msra.mxu0 0.0
    %2166 = vmatprep.subr.mxu0 0.0
    %2167 = vmatpush2.xpose.msra.mxu0 0.0
    %2168 = vmatprep.subr.mxu0 0.0
    %2169 = vmatpush2.xpose.msra.mxu0 0.0
    %2170 = vmatprep.subr.mxu0 0.0
    %2171 = vmatpush2.xpose.msra.mxu0 0.0
    %2172 = vmatprep.subr.mxu0 0.0
    %2173 = vmatpush2.xpose.msra.mxu0 0.0
    %2174 = vmatprep.subr.mxu0 0.0
    %2175 = vmatpush2.xpose.msra.mxu0 0.0
    %2176 = vmatprep.subr.mxu0 0.0
    %2177 = vmatpush2.xpose.msra.mxu0 0.0
    %2178 = vmatprep.subr.mxu0 0.0
    %2179 = vmatpush2.xpose.msra.mxu0 0.0
    %2180 = vmatprep.subr.mxu0 0.0
    %2181 = vmatpush2.xpose.msra.mxu0 0.0
    %2182 = vmatprep.subr.mxu0 0.0
    %2183 = vmatpush2.xpose.msra.mxu0 0.0
    %2184 = vmatprep.subr.mxu0 0.0
    %2185 = vmatpush2.xpose.msra.mxu0 0.0
    %2186 = vmatprep.subr.mxu0 0.0
    %2187 = vmatpush2.xpose.msra.mxu0 0.0
    %2188 = vmatprep.mubr.f32.mxu0 0.0
    %2189 = vmatmul.mubr.f32.gmra.mxu0 %v2120
    %v2190 = vpop.f32.mrf.mxu0
    %v2191 = vadd.f32 0.0, %v2190
    %v2192 = vpop.f32.mrf.mxu0
    %2193 = vdwg.mxu0
    %2194 = vrot.lane.b32.xlu0 %v2031, 96
    %v2195 = vpop.permute.xlu0 %2194
    %v2196 = vsel %vm209, %v2031, 0
    %v2198 = vsel %vm209, %v2195, 0
    %2200 = vmatprep.subr.mxu0 0.0
    %2201 = vmatpush1.xpose.msra.mxu0 0.0
    %2202 = vmatprep.subr.mxu0 0.0
    %2203 = vmatpush1.xpose.msra.mxu0 0.0
    %2204 = vmatprep.subr.mxu0 0.0
    %2205 = vmatpush1.xpose.msra.mxu0 0.0
    %2206 = vmatprep.subr.mxu0 0.0
    %2207 = vmatpush1.xpose.msra.mxu0 0.0
    %2208 = vmatprep.subr.mxu0 0.0
    %2209 = vmatpush1.xpose.msra.mxu0 0.0
    %2210 = vmatprep.subr.mxu0 0.0
    %2211 = vmatpush1.xpose.msra.mxu0 0.0
    %2212 = vmatprep.subr.mxu0 0.0
    %2213 = vmatpush1.xpose.msra.mxu0 0.0
    %2214 = vmatprep.subr.mxu0 0.0
    %2215 = vmatpush1.xpose.msra.mxu0 0.0
    %2216 = vmatprep.subr.mxu0 0.0
    %2217 = vmatpush1.xpose.msra.mxu0 0.0
    %2218 = vmatprep.subr.mxu0 0.0
    %2219 = vmatpush1.xpose.msra.mxu0 0.0
    %2220 = vmatprep.subr.mxu0 0.0
    %2221 = vmatpush1.xpose.msra.mxu0 0.0
    %2222 = vmatprep.subr.mxu0 0.0
    %2223 = vmatpush1.xpose.msra.mxu0 0.0
    %2224 = vmatprep.subr.mxu0 0.0
    %2225 = vmatpush1.xpose.msra.mxu0 0.0
    %2226 = vmatprep.subr.mxu0 0.0
    %2227 = vmatpush1.xpose.msra.mxu0 0.0
    %2228 = vmatprep.subr.mxu0 0.0
    %2229 = vmatpush1.xpose.msra.mxu0 0.0
    %2230 = vmatprep.subr.mxu0 0.0
    %2231 = vmatpush1.xpose.msra.mxu0 %v2198
    %2232 = vmatprep.subr.mxu0 0.0
    %2233 = vmatpush2.xpose.msra.mxu0 0.0
    %2234 = vmatprep.subr.mxu0 0.0
    %2235 = vmatpush2.xpose.msra.mxu0 0.0
    %2236 = vmatprep.subr.mxu0 0.0
    %2237 = vmatpush2.xpose.msra.mxu0 0.0
    %2238 = vmatprep.subr.mxu0 0.0
    %2239 = vmatpush2.xpose.msra.mxu0 0.0
    %2240 = vmatprep.subr.mxu0 0.0
    %2241 = vmatpush2.xpose.msra.mxu0 0.0
    %2242 = vmatprep.subr.mxu0 0.0
    %2243 = vmatpush2.xpose.msra.mxu0 0.0
    %2244 = vmatprep.subr.mxu0 0.0
    %2245 = vmatpush2.xpose.msra.mxu0 0.0
    %2246 = vmatprep.subr.mxu0 0.0
    %2247 = vmatpush2.xpose.msra.mxu0 0.0
    %2248 = vmatprep.subr.mxu0 0.0
    %2249 = vmatpush2.xpose.msra.mxu0 0.0
    %2250 = vmatprep.subr.mxu0 0.0
    %2251 = vmatpush2.xpose.msra.mxu0 0.0
    %2252 = vmatprep.subr.mxu0 0.0
    %2253 = vmatpush2.xpose.msra.mxu0 0.0
    %2254 = vmatprep.subr.mxu0 0.0
    %2255 = vmatpush2.xpose.msra.mxu0 0.0
    %2256 = vmatprep.subr.mxu0 0.0
    %2257 = vmatpush2.xpose.msra.mxu0 0.0
    %2258 = vmatprep.subr.mxu0 0.0
    %2259 = vmatpush2.xpose.msra.mxu0 0.0
    %2260 = vmatprep.subr.mxu0 0.0
    %2261 = vmatpush2.xpose.msra.mxu0 0.0
    %2262 = vmatprep.subr.mxu0 0.0
    %2263 = vmatpush2.xpose.msra.mxu0 0.0
    %2264 = vmatprep.mubr.f32.mxu0 0.0
    %2265 = vmatmul.mubr.f32.gmra.mxu0 %v2196
    %v2266 = vpop.f32.mrf.mxu0
    %v2267 = vadd.f32 0.0, %v2266
    %v2268 = vpop.f32.mrf.mxu0
    %2269 = vdwg.mxu0
    %2270 = vrot.lane.b32.xlu0 %v2033, 96
    %v2271 = vpop.permute.xlu0 %2270
    %v2272 = vsel %vm209, %v2033, 0
    %v2274 = vsel %vm209, %v2271, 0
    %2276 = vmatprep.subr.mxu0 0.0
    %2277 = vmatpush1.xpose.msra.mxu0 0.0
    %2278 = vmatprep.subr.mxu0 0.0
    %2279 = vmatpush1.xpose.msra.mxu0 0.0
    %2280 = vmatprep.subr.mxu0 0.0
    %2281 = vmatpush1.xpose.msra.mxu0 0.0
    %2282 = vmatprep.subr.mxu0 0.0
    %2283 = vmatpush1.xpose.msra.mxu0 0.0
    %2284 = vmatprep.subr.mxu0 0.0
    %2285 = vmatpush1.xpose.msra.mxu0 0.0
    %2286 = vmatprep.subr.mxu0 0.0
    %2287 = vmatpush1.xpose.msra.mxu0 0.0
    %2288 = vmatprep.subr.mxu0 0.0
    %2289 = vmatpush1.xpose.msra.mxu0 0.0
    %2290 = vmatprep.subr.mxu0 0.0
    %2291 = vmatpush1.xpose.msra.mxu0 0.0
    %2292 = vmatprep.subr.mxu0 0.0
    %2293 = vmatpush1.xpose.msra.mxu0 0.0
    %2294 = vmatprep.subr.mxu0 0.0
    %2295 = vmatpush1.xpose.msra.mxu0 0.0
    %2296 = vmatprep.subr.mxu0 0.0
    %2297 = vmatpush1.xpose.msra.mxu0 0.0
    %2298 = vmatprep.subr.mxu0 0.0
    %2299 = vmatpush1.xpose.msra.mxu0 0.0
    %2300 = vmatprep.subr.mxu0 0.0
    %2301 = vmatpush1.xpose.msra.mxu0 0.0
    %2302 = vmatprep.subr.mxu0 0.0
    %2303 = vmatpush1.xpose.msra.mxu0 0.0
    %2304 = vmatprep.subr.mxu0 0.0
    %2305 = vmatpush1.xpose.msra.mxu0 0.0
    %2306 = vmatprep.subr.mxu0 0.0
    %2307 = vmatpush1.xpose.msra.mxu0 %v2274
    %2308 = vmatprep.subr.mxu0 0.0
    %2309 = vmatpush2.xpose.msra.mxu0 0.0
    %2310 = vmatprep.subr.mxu0 0.0
    %2311 = vmatpush2.xpose.msra.mxu0 0.0
    %2312 = vmatprep.subr.mxu0 0.0
    %2313 = vmatpush2.xpose.msra.mxu0 0.0
    %2314 = vmatprep.subr.mxu0 0.0
    %2315 = vmatpush2.xpose.msra.mxu0 0.0
    %2316 = vmatprep.subr.mxu0 0.0
    %2317 = vmatpush2.xpose.msra.mxu0 0.0
    %2318 = vmatprep.subr.mxu0 0.0
    %2319 = vmatpush2.xpose.msra.mxu0 0.0
    %2320 = vmatprep.subr.mxu0 0.0
    %2321 = vmatpush2.xpose.msra.mxu0 0.0
    %2322 = vmatprep.subr.mxu0 0.0
    %2323 = vmatpush2.xpose.msra.mxu0 0.0
    %2324 = vmatprep.subr.mxu0 0.0
    %2325 = vmatpush2.xpose.msra.mxu0 0.0
    %2326 = vmatprep.subr.mxu0 0.0
    %2327 = vmatpush2.xpose.msra.mxu0 0.0
    %2328 = vmatprep.subr.mxu0 0.0
    %2329 = vmatpush2.xpose.msra.mxu0 0.0
    %2330 = vmatprep.subr.mxu0 0.0
    %2331 = vmatpush2.xpose.msra.mxu0 0.0
    %2332 = vmatprep.subr.mxu0 0.0
    %2333 = vmatpush2.xpose.msra.mxu0 0.0
    %2334 = vmatprep.subr.mxu0 0.0
    %2335 = vmatpush2.xpose.msra.mxu0 0.0
    %2336 = vmatprep.subr.mxu0 0.0
    %2337 = vmatpush2.xpose.msra.mxu0 0.0
    %2338 = vmatprep.subr.mxu0 0.0
    %2339 = vmatpush2.xpose.msra.mxu0 0.0
    %2340 = vmatprep.mubr.f32.mxu0 0.0
    %2341 = vmatmul.mubr.f32.gmra.mxu0 %v2272
    %v2342 = vpop.f32.mrf.mxu0
    %v2343 = vadd.f32 0.0, %v2342
    %v2344 = vpop.f32.mrf.mxu0
    %2345 = vdwg.mxu0
    %2346 = vrot.lane.b32.xlu0 %v2035, 96
    %v2347 = vpop.permute.xlu0 %2346
    %v2348 = vsel %vm209, %v2035, 0
    %v2350 = vsel %vm209, %v2347, 0
    %2352 = vmatprep.subr.mxu0 0.0
    %2353 = vmatpush1.xpose.msra.mxu0 0.0
    %2354 = vmatprep.subr.mxu0 0.0
    %2355 = vmatpush1.xpose.msra.mxu0 0.0
    %2356 = vmatprep.subr.mxu0 0.0
    %2357 = vmatpush1.xpose.msra.mxu0 0.0
    %2358 = vmatprep.subr.mxu0 0.0
    %2359 = vmatpush1.xpose.msra.mxu0 0.0
    %2360 = vmatprep.subr.mxu0 0.0
    %2361 = vmatpush1.xpose.msra.mxu0 0.0
    %2362 = vmatprep.subr.mxu0 0.0
    %2363 = vmatpush1.xpose.msra.mxu0 0.0
    %2364 = vmatprep.subr.mxu0 0.0
    %2365 = vmatpush1.xpose.msra.mxu0 0.0
    %2366 = vmatprep.subr.mxu0 0.0
    %2367 = vmatpush1.xpose.msra.mxu0 0.0
    %2368 = vmatprep.subr.mxu0 0.0
    %2369 = vmatpush1.xpose.msra.mxu0 0.0
    %2370 = vmatprep.subr.mxu0 0.0
    %2371 = vmatpush1.xpose.msra.mxu0 0.0
    %2372 = vmatprep.subr.mxu0 0.0
    %2373 = vmatpush1.xpose.msra.mxu0 0.0
    %2374 = vmatprep.subr.mxu0 0.0
    %2375 = vmatpush1.xpose.msra.mxu0 0.0
    %2376 = vmatprep.subr.mxu0 0.0
    %2377 = vmatpush1.xpose.msra.mxu0 0.0
    %2378 = vmatprep.subr.mxu0 0.0
    %2379 = vmatpush1.xpose.msra.mxu0 0.0
    %2380 = vmatprep.subr.mxu0 0.0
    %2381 = vmatpush1.xpose.msra.mxu0 0.0
    %2382 = vmatprep.subr.mxu0 0.0
    %2383 = vmatpush1.xpose.msra.mxu0 %v2350
    %2384 = vmatprep.subr.mxu0 0.0
    %2385 = vmatpush2.xpose.msra.mxu0 0.0
    %2386 = vmatprep.subr.mxu0 0.0
    %2387 = vmatpush2.xpose.msra.mxu0 0.0
    %2388 = vmatprep.subr.mxu0 0.0
    %2389 = vmatpush2.xpose.msra.mxu0 0.0
    %2390 = vmatprep.subr.mxu0 0.0
    %2391 = vmatpush2.xpose.msra.mxu0 0.0
    %2392 = vmatprep.subr.mxu0 0.0
    %2393 = vmatpush2.xpose.msra.mxu0 0.0
    %2394 = vmatprep.subr.mxu0 0.0
    %2395 = vmatpush2.xpose.msra.mxu0 0.0
    %2396 = vmatprep.subr.mxu0 0.0
    %2397 = vmatpush2.xpose.msra.mxu0 0.0
    %2398 = vmatprep.subr.mxu0 0.0
    %2399 = vmatpush2.xpose.msra.mxu0 0.0
    %2400 = vmatprep.subr.mxu0 0.0
    %2401 = vmatpush2.xpose.msra.mxu0 0.0
    %2402 = vmatprep.subr.mxu0 0.0
    %2403 = vmatpush2.xpose.msra.mxu0 0.0
    %2404 = vmatprep.subr.mxu0 0.0
    %2405 = vmatpush2.xpose.msra.mxu0 0.0
    %2406 = vmatprep.subr.mxu0 0.0
    %2407 = vmatpush2.xpose.msra.mxu0 0.0
    %2408 = vmatprep.subr.mxu0 0.0
    %2409 = vmatpush2.xpose.msra.mxu0 0.0
    %2410 = vmatprep.subr.mxu0 0.0
    %2411 = vmatpush2.xpose.msra.mxu0 0.0
    %2412 = vmatprep.subr.mxu0 0.0
    %2413 = vmatpush2.xpose.msra.mxu0 0.0
    %2414 = vmatprep.subr.mxu0 0.0
    %2415 = vmatpush2.xpose.msra.mxu0 0.0
    %2416 = vmatprep.mubr.f32.mxu0 0.0
    %2417 = vmatmul.mubr.f32.gmra.mxu0 %v2348
    %v2418 = vpop.f32.mrf.mxu0
    %v2419 = vadd.f32 0.0, %v2418
    %v2420 = vpop.f32.mrf.mxu0
    %2421 = vdwg.mxu0
    %2422 = vrot.lane.b32.xlu0 %v2037, 96
    %v2423 = vpop.permute.xlu0 %2422
    %v2424 = vsel %vm209, %v2037, 0
    %v2426 = vsel %vm209, %v2423, 0
    %2428 = vmatprep.subr.mxu0 0.0
    %2429 = vmatpush1.xpose.msra.mxu0 0.0
    %2430 = vmatprep.subr.mxu0 0.0
    %2431 = vmatpush1.xpose.msra.mxu0 0.0
    %2432 = vmatprep.subr.mxu0 0.0
    %2433 = vmatpush1.xpose.msra.mxu0 0.0
    %2434 = vmatprep.subr.mxu0 0.0
    %2435 = vmatpush1.xpose.msra.mxu0 0.0
    %2436 = vmatprep.subr.mxu0 0.0
    %2437 = vmatpush1.xpose.msra.mxu0 0.0
    %2438 = vmatprep.subr.mxu0 0.0
    %2439 = vmatpush1.xpose.msra.mxu0 0.0
    %2440 = vmatprep.subr.mxu0 0.0
    %2441 = vmatpush1.xpose.msra.mxu0 0.0
    %2442 = vmatprep.subr.mxu0 0.0
    %2443 = vmatpush1.xpose.msra.mxu0 0.0
    %2444 = vmatprep.subr.mxu0 0.0
    %2445 = vmatpush1.xpose.msra.mxu0 0.0
    %2446 = vmatprep.subr.mxu0 0.0
    %2447 = vmatpush1.xpose.msra.mxu0 0.0
    %2448 = vmatprep.subr.mxu0 0.0
    %2449 = vmatpush1.xpose.msra.mxu0 0.0
    %2450 = vmatprep.subr.mxu0 0.0
    %2451 = vmatpush1.xpose.msra.mxu0 0.0
    %2452 = vmatprep.subr.mxu0 0.0
    %2453 = vmatpush1.xpose.msra.mxu0 0.0
    %2454 = vmatprep.subr.mxu0 0.0
    %2455 = vmatpush1.xpose.msra.mxu0 0.0
    %2456 = vmatprep.subr.mxu0 0.0
    %2457 = vmatpush1.xpose.msra.mxu0 0.0
    %2458 = vmatprep.subr.mxu0 0.0
    %2459 = vmatpush1.xpose.msra.mxu0 %v2426
    %2460 = vmatprep.subr.mxu0 0.0
    %2461 = vmatpush2.xpose.msra.mxu0 0.0
    %2462 = vmatprep.subr.mxu0 0.0
    %2463 = vmatpush2.xpose.msra.mxu0 0.0
    %2464 = vmatprep.subr.mxu0 0.0
    %2465 = vmatpush2.xpose.msra.mxu0 0.0
    %2466 = vmatprep.subr.mxu0 0.0
    %2467 = vmatpush2.xpose.msra.mxu0 0.0
    %2468 = vmatprep.subr.mxu0 0.0
    %2469 = vmatpush2.xpose.msra.mxu0 0.0
    %2470 = vmatprep.subr.mxu0 0.0
    %2471 = vmatpush2.xpose.msra.mxu0 0.0
    %2472 = vmatprep.subr.mxu0 0.0
    %2473 = vmatpush2.xpose.msra.mxu0 0.0
    %2474 = vmatprep.subr.mxu0 0.0
    %2475 = vmatpush2.xpose.msra.mxu0 0.0
    %2476 = vmatprep.subr.mxu0 0.0
    %2477 = vmatpush2.xpose.msra.mxu0 0.0
    %2478 = vmatprep.subr.mxu0 0.0
    %2479 = vmatpush2.xpose.msra.mxu0 0.0
    %2480 = vmatprep.subr.mxu0 0.0
    %2481 = vmatpush2.xpose.msra.mxu0 0.0
    %2482 = vmatprep.subr.mxu0 0.0
    %2483 = vmatpush2.xpose.msra.mxu0 0.0
    %2484 = vmatprep.subr.mxu0 0.0
    %2485 = vmatpush2.xpose.msra.mxu0 0.0
    %2486 = vmatprep.subr.mxu0 0.0
    %2487 = vmatpush2.xpose.msra.mxu0 0.0
    %2488 = vmatprep.subr.mxu0 0.0
    %2489 = vmatpush2.xpose.msra.mxu0 0.0
    %2490 = vmatprep.subr.mxu0 0.0
    %2491 = vmatpush2.xpose.msra.mxu0 0.0
    %2492 = vmatprep.mubr.f32.mxu0 0.0
    %2493 = vmatmul.mubr.f32.gmra.mxu0 %v2424
    %v2494 = vpop.f32.mrf.mxu0
    %v2495 = vadd.f32 0.0, %v2494
    %v2496 = vpop.f32.mrf.mxu0
    %2497 = vdwg.mxu0
    %2498 = vrot.lane.b32.xlu0 %v2039, 96
    %v2499 = vpop.permute.xlu0 %2498
    %v2500 = vsel %vm209, %v2039, 0
    %v2502 = vsel %vm209, %v2499, 0
    %2504 = vmatprep.subr.mxu0 0.0
    %2505 = vmatpush1.xpose.msra.mxu0 0.0
    %2506 = vmatprep.subr.mxu0 0.0
    %2507 = vmatpush1.xpose.msra.mxu0 0.0
    %2508 = vmatprep.subr.mxu0 0.0
    %2509 = vmatpush1.xpose.msra.mxu0 0.0
    %2510 = vmatprep.subr.mxu0 0.0
    %2511 = vmatpush1.xpose.msra.mxu0 0.0
    %2512 = vmatprep.subr.mxu0 0.0
    %2513 = vmatpush1.xpose.msra.mxu0 0.0
    %2514 = vmatprep.subr.mxu0 0.0
    %2515 = vmatpush1.xpose.msra.mxu0 0.0
    %2516 = vmatprep.subr.mxu0 0.0
    %2517 = vmatpush1.xpose.msra.mxu0 0.0
    %2518 = vmatprep.subr.mxu0 0.0
    %2519 = vmatpush1.xpose.msra.mxu0 0.0
    %2520 = vmatprep.subr.mxu0 0.0
    %2521 = vmatpush1.xpose.msra.mxu0 0.0
    %2522 = vmatprep.subr.mxu0 0.0
    %2523 = vmatpush1.xpose.msra.mxu0 0.0
    %2524 = vmatprep.subr.mxu0 0.0
    %2525 = vmatpush1.xpose.msra.mxu0 0.0
    %2526 = vmatprep.subr.mxu0 0.0
    %2527 = vmatpush1.xpose.msra.mxu0 0.0
    %2528 = vmatprep.subr.mxu0 0.0
    %2529 = vmatpush1.xpose.msra.mxu0 0.0
    %2530 = vmatprep.subr.mxu0 0.0
    %2531 = vmatpush1.xpose.msra.mxu0 0.0
    %2532 = vmatprep.subr.mxu0 0.0
    %2533 = vmatpush1.xpose.msra.mxu0 0.0
    %2534 = vmatprep.subr.mxu0 0.0
    %2535 = vmatpush1.xpose.msra.mxu0 %v2502
    %2536 = vmatprep.subr.mxu0 0.0
    %2537 = vmatpush2.xpose.msra.mxu0 0.0
    %2538 = vmatprep.subr.mxu0 0.0
    %2539 = vmatpush2.xpose.msra.mxu0 0.0
    %2540 = vmatprep.subr.mxu0 0.0
    %2541 = vmatpush2.xpose.msra.mxu0 0.0
    %2542 = vmatprep.subr.mxu0 0.0
    %2543 = vmatpush2.xpose.msra.mxu0 0.0
    %2544 = vmatprep.subr.mxu0 0.0
    %2545 = vmatpush2.xpose.msra.mxu0 0.0
    %2546 = vmatprep.subr.mxu0 0.0
    %2547 = vmatpush2.xpose.msra.mxu0 0.0
    %2548 = vmatprep.subr.mxu0 0.0
    %2549 = vmatpush2.xpose.msra.mxu0 0.0
    %2550 = vmatprep.subr.mxu0 0.0
    %2551 = vmatpush2.xpose.msra.mxu0 0.0
    %2552 = vmatprep.subr.mxu0 0.0
    %2553 = vmatpush2.xpose.msra.mxu0 0.0
    %2554 = vmatprep.subr.mxu0 0.0
    %2555 = vmatpush2.xpose.msra.mxu0 0.0
    %2556 = vmatprep.subr.mxu0 0.0
    %2557 = vmatpush2.xpose.msra.mxu0 0.0
    %2558 = vmatprep.subr.mxu0 0.0
    %2559 = vmatpush2.xpose.msra.mxu0 0.0
    %2560 = vmatprep.subr.mxu0 0.0
    %2561 = vmatpush2.xpose.msra.mxu0 0.0
    %2562 = vmatprep.subr.mxu0 0.0
    %2563 = vmatpush2.xpose.msra.mxu0 0.0
    %2564 = vmatprep.subr.mxu0 0.0
    %2565 = vmatpush2.xpose.msra.mxu0 0.0
    %2566 = vmatprep.subr.mxu0 0.0
    %2567 = vmatpush2.xpose.msra.mxu0 0.0
    %2568 = vmatprep.mubr.f32.mxu0 0.0
    %2569 = vmatmul.mubr.f32.gmra.mxu0 %v2500
    %v2570 = vpop.f32.mrf.mxu0
    %v2571 = vadd.f32 0.0, %v2570
    %v2572 = vpop.f32.mrf.mxu0
    %2573 = vdwg.mxu0
    %2574 = vrot.lane.b32.xlu0 %v2041, 96
    %v2575 = vpop.permute.xlu0 %2574
    %v2576 = vsel %vm209, %v2041, 0
    %v2578 = vsel %vm209, %v2575, 0
    %2580 = vmatprep.subr.mxu0 0.0
    %2581 = vmatpush1.xpose.msra.mxu0 0.0
    %2582 = vmatprep.subr.mxu0 0.0
    %2583 = vmatpush1.xpose.msra.mxu0 0.0
    %2584 = vmatprep.subr.mxu0 0.0
    %2585 = vmatpush1.xpose.msra.mxu0 0.0
    %2586 = vmatprep.subr.mxu0 0.0
    %2587 = vmatpush1.xpose.msra.mxu0 0.0
    %2588 = vmatprep.subr.mxu0 0.0
    %2589 = vmatpush1.xpose.msra.mxu0 0.0
    %2590 = vmatprep.subr.mxu0 0.0
    %2591 = vmatpush1.xpose.msra.mxu0 0.0
    %2592 = vmatprep.subr.mxu0 0.0
    %2593 = vmatpush1.xpose.msra.mxu0 0.0
    %2594 = vmatprep.subr.mxu0 0.0
    %2595 = vmatpush1.xpose.msra.mxu0 0.0
    %2596 = vmatprep.subr.mxu0 0.0
    %2597 = vmatpush1.xpose.msra.mxu0 0.0
    %2598 = vmatprep.subr.mxu0 0.0
    %2599 = vmatpush1.xpose.msra.mxu0 0.0
    %2600 = vmatprep.subr.mxu0 0.0
    %2601 = vmatpush1.xpose.msra.mxu0 0.0
    %2602 = vmatprep.subr.mxu0 0.0
    %2603 = vmatpush1.xpose.msra.mxu0 0.0
    %2604 = vmatprep.subr.mxu0 0.0
    %2605 = vmatpush1.xpose.msra.mxu0 0.0
    %2606 = vmatprep.subr.mxu0 0.0
    %2607 = vmatpush1.xpose.msra.mxu0 0.0
    %2608 = vmatprep.subr.mxu0 0.0
    %2609 = vmatpush1.xpose.msra.mxu0 0.0
    %2610 = vmatprep.subr.mxu0 0.0
    %2611 = vmatpush1.xpose.msra.mxu0 %v2578
    %2612 = vmatprep.subr.mxu0 0.0
    %2613 = vmatpush2.xpose.msra.mxu0 0.0
    %2614 = vmatprep.subr.mxu0 0.0
    %2615 = vmatpush2.xpose.msra.mxu0 0.0
    %2616 = vmatprep.subr.mxu0 0.0
    %2617 = vmatpush2.xpose.msra.mxu0 0.0
    %2618 = vmatprep.subr.mxu0 0.0
    %2619 = vmatpush2.xpose.msra.mxu0 0.0
    %2620 = vmatprep.subr.mxu0 0.0
    %2621 = vmatpush2.xpose.msra.mxu0 0.0
    %2622 = vmatprep.subr.mxu0 0.0
    %2623 = vmatpush2.xpose.msra.mxu0 0.0
    %2624 = vmatprep.subr.mxu0 0.0
    %2625 = vmatpush2.xpose.msra.mxu0 0.0
    %2626 = vmatprep.subr.mxu0 0.0
    %2627 = vmatpush2.xpose.msra.mxu0 0.0
    %2628 = vmatprep.subr.mxu0 0.0
    %2629 = vmatpush2.xpose.msra.mxu0 0.0
    %2630 = vmatprep.subr.mxu0 0.0
    %2631 = vmatpush2.xpose.msra.mxu0 0.0
    %2632 = vmatprep.subr.mxu0 0.0
    %2633 = vmatpush2.xpose.msra.mxu0 0.0
    %2634 = vmatprep.subr.mxu0 0.0
    %2635 = vmatpush2.xpose.msra.mxu0 0.0
    %2636 = vmatprep.subr.mxu0 0.0
    %2637 = vmatpush2.xpose.msra.mxu0 0.0
    %2638 = vmatprep.subr.mxu0 0.0
    %2639 = vmatpush2.xpose.msra.mxu0 0.0
    %2640 = vmatprep.subr.mxu0 0.0
    %2641 = vmatpush2.xpose.msra.mxu0 0.0
    %2642 = vmatprep.subr.mxu0 0.0
    %2643 = vmatpush2.xpose.msra.mxu0 0.0
    %2644 = vmatprep.mubr.f32.mxu0 0.0
    %2645 = vmatmul.mubr.f32.gmra.mxu0 %v2576
    %v2646 = vpop.f32.mrf.mxu0
    %v2647 = vadd.f32 0.0, %v2646
    %v2648 = vpop.f32.mrf.mxu0
    %2649 = vdwg.mxu0
    %v2650 = vmul.f32 %v2115, 0.35355338
    %v2651 = vmul.f32 %v2191, 0.35355338
    %v2652 = vmul.f32 %v2267, 0.35355338
    %v2653 = vmul.f32 %v2343, 0.35355338
    %v2654 = vmul.f32 %v2419, 0.35355338
    %v2655 = vmul.f32 %v2495, 0.35355338
    %v2656 = vmul.f32 %v2571, 0.35355338
    %v2657 = vmul.f32 %v2647, 0.35355338
    %v2658 = vadd.f32 %v2650, %v59
    %v2659 = vadd.f32 %v2651, %v59
    %v2660 = vadd.f32 %v2652, %v59
    %v2661 = vadd.f32 %v2653, %v59
    %v2662 = vadd.f32 %v2654, %v59
    %v2663 = vadd.f32 %v2655, %v59
    %v2664 = vadd.f32 %v2656, %v59
    %v2665 = vadd.f32 %v2657, %v59
    %v2666 = vsel %vm209, %v2658, -inf
    %2667 = vmax.xlane.f32.xlu0 %v2666
    %v2668 = vpop.xlane.xlu0 %2667
    %v2669 = vsel %vm209, %v2659, -inf
    %2670 = vmax.xlane.f32.xlu0 %v2669
    %v2671 = vpop.xlane.xlu0 %2670
    %v2672 = vsel %vm209, %v2660, -inf
    %2673 = vmax.xlane.f32.xlu0 %v2672
    %v2674 = vpop.xlane.xlu0 %2673
    %v2675 = vsel %vm209, %v2661, -inf
    %2676 = vmax.xlane.f32.xlu0 %v2675
    %v2677 = vpop.xlane.xlu0 %2676
    %v2678 = vsel %vm209, %v2662, -inf
    %2679 = vmax.xlane.f32.xlu0 %v2678
    %v2680 = vpop.xlane.xlu0 %2679
    %v2681 = vsel %vm209, %v2663, -inf
    %2682 = vmax.xlane.f32.xlu0 %v2681
    %v2683 = vpop.xlane.xlu0 %2682
    %v2684 = vsel %vm209, %v2664, -inf
    %2685 = vmax.xlane.f32.xlu0 %v2684
    %v2686 = vpop.xlane.xlu0 %2685
    %v2687 = vsel %vm209, %v2665, -inf
    %2688 = vmax.xlane.f32.xlu0 %v2687
    %v2689 = vpop.xlane.xlu0 %2688
    %v2690 = vsub.f32 %v2658, %v2668
    %v2691 = vsub.f32 %v2659, %v2671
    %v2692 = vsub.f32 %v2660, %v2674
    %v2693 = vsub.f32 %v2661, %v2677
    %v2694 = vsub.f32 %v2662, %v2680
    %v2695 = vsub.f32 %v2663, %v2683
    %v2696 = vsub.f32 %v2664, %v2686
    %v2697 = vsub.f32 %v2665, %v2689
    %v2698 = vmul.f32 %v2690, 1.442695
    %v2699 = vpow.pop %v2698
    %v2700 = vmul.f32 %v2691, 1.442695
    %v2701 = vpow.pop %v2700
    %v2702 = vmul.f32 %v2692, 1.442695
    %v2703 = vpow.pop %v2702
    %v2704 = vmul.f32 %v2693, 1.442695
    %v2705 = vpow.pop %v2704
    %v2706 = vmul.f32 %v2694, 1.442695
    %v2707 = vpow.pop %v2706
    %v2708 = vmul.f32 %v2695, 1.442695
    %v2709 = vpow.pop %v2708
    %v2710 = vmul.f32 %v2696, 1.442695
    %v2711 = vpow.pop %v2710
    %v2712 = vmul.f32 %v2697, 1.442695
    %v2713 = vpow.pop %v2712
    %v2714 = vsel %vm209, %v2699, 0.0
    %2715 = vadd.xlane.f32.xlu0 %v2714
    %v2716 = vpop.xlane.xlu0 %2715
    %v2717 = vsel %vm209, %v2701, 0.0
    %2718 = vadd.xlane.f32.xlu0 %v2717
    %v2719 = vpop.xlane.xlu0 %2718
    %v2720 = vsel %vm209, %v2703, 0.0
    %2721 = vadd.xlane.f32.xlu0 %v2720
    %v2722 = vpop.xlane.xlu0 %2721
    %v2723 = vsel %vm209, %v2705, 0.0
    %2724 = vadd.xlane.f32.xlu0 %v2723
    %v2725 = vpop.xlane.xlu0 %2724
    %v2726 = vsel %vm209, %v2707, 0.0
    %2727 = vadd.xlane.f32.xlu0 %v2726
    %v2728 = vpop.xlane.xlu0 %2727
    %v2729 = vsel %vm209, %v2709, 0.0
    %2730 = vadd.xlane.f32.xlu0 %v2729
    %v2731 = vpop.xlane.xlu0 %2730
    %v2732 = vsel %vm209, %v2711, 0.0
    %2733 = vadd.xlane.f32.xlu0 %v2732
    %v2734 = vpop.xlane.xlu0 %2733
    %v2735 = vsel %vm209, %v2713, 0.0
    %2736 = vadd.xlane.f32.xlu0 %v2735
    %v2737 = vpop.xlane.xlu0 %2736
    %v2738 = vrcp.pop %v2716
    %v2739 = vrcp.pop %v2719
    %v2740 = vrcp.pop %v2722
    %v2741 = vrcp.pop %v2725
    %v2742 = vrcp.pop %v2728
    %v2743 = vrcp.pop %v2731
    %v2744 = vrcp.pop %v2734
    %v2745 = vrcp.pop %v2737
    %v2746 = vmul.f32 %v2699, %v2738
    %v2747 = vmul.f32 %v2701, %v2739
    %v2748 = vmul.f32 %v2703, %v2740
    %v2749 = vmul.f32 %v2705, %v2741
    %v2750 = vmul.f32 %v2707, %v2742
    %v2751 = vmul.f32 %v2709, %v2743
    %v2752 = vmul.f32 %v2711, %v2744
    %v2753 = vmul.f32 %v2713, %v2745
    %2754 = vrot.lane.b32.xlu0 %v2020, 64
    %v2755 = vpop.permute.xlu0 %2754
    %v2758 = vsel %vm209, %v2746, 0
    %2760 = vmatprep.subr.mxu0 0.0
    %2761 = vmatpush1.msra.mxu0 0.0
    %2762 = vmatprep.subr.mxu0 0.0
    %2763 = vmatpush1.msra.mxu0 0.0
    %2764 = vmatprep.subr.mxu0 0.0
    %2765 = vmatpush1.msra.mxu0 0.0
    %2766 = vmatprep.subr.mxu0 0.0
    %2767 = vmatpush1.msra.mxu0 0.0
    %2768 = vmatprep.subr.mxu0 0.0
    %2769 = vmatpush1.msra.mxu0 0.0
    %2770 = vmatprep.subr.mxu0 0.0
    %2771 = vmatpush1.msra.mxu0 0.0
    %2772 = vmatprep.subr.mxu0 0.0
    %2773 = vmatpush1.msra.mxu0 0.0
    %2774 = vmatprep.subr.mxu0 0.0
    %2775 = vmatpush1.msra.mxu0 0.0
    %2776 = vmatprep.subr.mxu0 0.0
    %2777 = vmatpush1.msra.mxu0 0.0
    %2778 = vmatprep.subr.mxu0 0.0
    %2779 = vmatpush1.msra.mxu0 0.0
    %2780 = vmatprep.subr.mxu0 0.0
    %2781 = vmatpush1.msra.mxu0 0.0
    %2782 = vmatprep.subr.mxu0 0.0
    %2783 = vmatpush1.msra.mxu0 0.0
    %2784 = vmatprep.subr.mxu0 0.0
    %2785 = vmatpush1.msra.mxu0 0.0
    %2786 = vmatprep.subr.mxu0 0.0
    %2787 = vmatpush1.msra.mxu0 0.0
    %2788 = vmatprep.subr.mxu0 0.0
    %2789 = vmatpush1.msra.mxu0 0.0
    %2790 = vmatprep.subr.mxu0 0.0
    %2791 = vmatpush1.msra.mxu0 %v2755
    %2792 = vmatprep.subr.mxu0 0.0
    %2793 = vmatpush2.msra.mxu0 0.0
    %2794 = vmatprep.subr.mxu0 0.0
    %2795 = vmatpush2.msra.mxu0 0.0
    %2796 = vmatprep.subr.mxu0 0.0
    %2797 = vmatpush2.msra.mxu0 0.0
    %2798 = vmatprep.subr.mxu0 0.0
    %2799 = vmatpush2.msra.mxu0 0.0
    %2800 = vmatprep.subr.mxu0 0.0
    %2801 = vmatpush2.msra.mxu0 0.0
    %2802 = vmatprep.subr.mxu0 0.0
    %2803 = vmatpush2.msra.mxu0 0.0
    %2804 = vmatprep.subr.mxu0 0.0
    %2805 = vmatpush2.msra.mxu0 0.0
    %2806 = vmatprep.subr.mxu0 0.0
    %2807 = vmatpush2.msra.mxu0 0.0
    %2808 = vmatprep.subr.mxu0 0.0
    %2809 = vmatpush2.msra.mxu0 0.0
    %2810 = vmatprep.subr.mxu0 0.0
    %2811 = vmatpush2.msra.mxu0 0.0
    %2812 = vmatprep.subr.mxu0 0.0
    %2813 = vmatpush2.msra.mxu0 0.0
    %2814 = vmatprep.subr.mxu0 0.0
    %2815 = vmatpush2.msra.mxu0 0.0
    %2816 = vmatprep.subr.mxu0 0.0
    %2817 = vmatpush2.msra.mxu0 0.0
    %2818 = vmatprep.subr.mxu0 0.0
    %2819 = vmatpush2.msra.mxu0 0.0
    %2820 = vmatprep.subr.mxu0 0.0
    %2821 = vmatpush2.msra.mxu0 0.0
    %2822 = vmatprep.subr.mxu0 0.0
    %2823 = vmatpush2.msra.mxu0 0.0
    %2824 = vmatprep.mubr.f32.mxu0 0.0
    %2825 = vmatmul.mubr.f32.gmra.mxu0 %v2758
    %v2826 = vpop.f32.mrf.mxu0
    %v2827 = vadd.f32 0.0, %v2826
    %v2828 = vpop.f32.mrf.mxu0
    %2829 = vdwg.mxu0
    %2830 = vrot.lane.b32.xlu0 %v2025, 64
    %v2831 = vpop.permute.xlu0 %2830
    %v2834 = vsel %vm209, %v2747, 0
    %2836 = vmatprep.subr.mxu0 0.0
    %2837 = vmatpush1.msra.mxu0 0.0
    %2838 = vmatprep.subr.mxu0 0.0
    %2839 = vmatpush1.msra.mxu0 0.0
    %2840 = vmatprep.subr.mxu0 0.0
    %2841 = vmatpush1.msra.mxu0 0.0
    %2842 = vmatprep.subr.mxu0 0.0
    %2843 = vmatpush1.msra.mxu0 0.0
    %2844 = vmatprep.subr.mxu0 0.0
    %2845 = vmatpush1.msra.mxu0 0.0
    %2846 = vmatprep.subr.mxu0 0.0
    %2847 = vmatpush1.msra.mxu0 0.0
    %2848 = vmatprep.subr.mxu0 0.0
    %2849 = vmatpush1.msra.mxu0 0.0
    %2850 = vmatprep.subr.mxu0 0.0
    %2851 = vmatpush1.msra.mxu0 0.0
    %2852 = vmatprep.subr.mxu0 0.0
    %2853 = vmatpush1.msra.mxu0 0.0
    %2854 = vmatprep.subr.mxu0 0.0
    %2855 = vmatpush1.msra.mxu0 0.0
    %2856 = vmatprep.subr.mxu0 0.0
    %2857 = vmatpush1.msra.mxu0 0.0
    %2858 = vmatprep.subr.mxu0 0.0
    %2859 = vmatpush1.msra.mxu0 0.0
    %2860 = vmatprep.subr.mxu0 0.0
    %2861 = vmatpush1.msra.mxu0 0.0
    %2862 = vmatprep.subr.mxu0 0.0
    %2863 = vmatpush1.msra.mxu0 0.0
    %2864 = vmatprep.subr.mxu0 0.0
    %2865 = vmatpush1.msra.mxu0 0.0
    %2866 = vmatprep.subr.mxu0 0.0
    %2867 = vmatpush1.msra.mxu0 %v2831
    %2868 = vmatprep.subr.mxu0 0.0
    %2869 = vmatpush2.msra.mxu0 0.0
    %2870 = vmatprep.subr.mxu0 0.0
    %2871 = vmatpush2.msra.mxu0 0.0
    %2872 = vmatprep.subr.mxu0 0.0
    %2873 = vmatpush2.msra.mxu0 0.0
    %2874 = vmatprep.subr.mxu0 0.0
    %2875 = vmatpush2.msra.mxu0 0.0
    %2876 = vmatprep.subr.mxu0 0.0
    %2877 = vmatpush2.msra.mxu0 0.0
    %2878 = vmatprep.subr.mxu0 0.0
    %2879 = vmatpush2.msra.mxu0 0.0
    %2880 = vmatprep.subr.mxu0 0.0
    %2881 = vmatpush2.msra.mxu0 0.0
    %2882 = vmatprep.subr.mxu0 0.0
    %2883 = vmatpush2.msra.mxu0 0.0
    %2884 = vmatprep.subr.mxu0 0.0
    %2885 = vmatpush2.msra.mxu0 0.0
    %2886 = vmatprep.subr.mxu0 0.0
    %2887 = vmatpush2.msra.mxu0 0.0
    %2888 = vmatprep.subr.mxu0 0.0
    %2889 = vmatpush2.msra.mxu0 0.0
    %2890 = vmatprep.subr.mxu0 0.0
    %2891 = vmatpush2.msra.mxu0 0.0
    %2892 = vmatprep.subr.mxu0 0.0
    %2893 = vmatpush2.msra.mxu0 0.0
    %2894 = vmatprep.subr.mxu0 0.0
    %2895 = vmatpush2.msra.mxu0 0.0
    %2896 = vmatprep.subr.mxu0 0.0
    %2897 = vmatpush2.msra.mxu0 0.0
    %2898 = vmatprep.subr.mxu0 0.0
    %2899 = vmatpush2.msra.mxu0 0.0
    %2900 = vmatprep.mubr.f32.mxu0 0.0
    %2901 = vmatmul.mubr.f32.gmra.mxu0 %v2834
    %v2902 = vpop.f32.mrf.mxu0
    %v2903 = vadd.f32 0.0, %v2902
    %v2904 = vpop.f32.mrf.mxu0
    %2905 = vdwg.mxu0
    %2906 = vrot.lane.b32.xlu0 %v2031, 64
    %v2907 = vpop.permute.xlu0 %2906
    %v2910 = vsel %vm209, %v2748, 0
    %2912 = vmatprep.subr.mxu0 0.0
    %2913 = vmatpush1.msra.mxu0 0.0
    %2914 = vmatprep.subr.mxu0 0.0
    %2915 = vmatpush1.msra.mxu0 0.0
    %2916 = vmatprep.subr.mxu0 0.0
    %2917 = vmatpush1.msra.mxu0 0.0
    %2918 = vmatprep.subr.mxu0 0.0
    %2919 = vmatpush1.msra.mxu0 0.0
    %2920 = vmatprep.subr.mxu0 0.0
    %2921 = vmatpush1.msra.mxu0 0.0
    %2922 = vmatprep.subr.mxu0 0.0
    %2923 = vmatpush1.msra.mxu0 0.0
    %2924 = vmatprep.subr.mxu0 0.0
    %2925 = vmatpush1.msra.mxu0 0.0
    %2926 = vmatprep.subr.mxu0 0.0
    %2927 = vmatpush1.msra.mxu0 0.0
    %2928 = vmatprep.subr.mxu0 0.0
    %2929 = vmatpush1.msra.mxu0 0.0
    %2930 = vmatprep.subr.mxu0 0.0
    %2931 = vmatpush1.msra.mxu0 0.0
    %2932 = vmatprep.subr.mxu0 0.0
    %2933 = vmatpush1.msra.mxu0 0.0
    %2934 = vmatprep.subr.mxu0 0.0
    %2935 = vmatpush1.msra.mxu0 0.0
    %2936 = vmatprep.subr.mxu0 0.0
    %2937 = vmatpush1.msra.mxu0 0.0
    %2938 = vmatprep.subr.mxu0 0.0
    %2939 = vmatpush1.msra.mxu0 0.0
    %2940 = vmatprep.subr.mxu0 0.0
    %2941 = vmatpush1.msra.mxu0 0.0
    %2942 = vmatprep.subr.mxu0 0.0
    %2943 = vmatpush1.msra.mxu0 %v2907
    %2944 = vmatprep.subr.mxu0 0.0
    %2945 = vmatpush2.msra.mxu0 0.0
    %2946 = vmatprep.subr.mxu0 0.0
    %2947 = vmatpush2.msra.mxu0 0.0
    %2948 = vmatprep.subr.mxu0 0.0
    %2949 = vmatpush2.msra.mxu0 0.0
    %2950 = vmatprep.subr.mxu0 0.0
    %2951 = vmatpush2.msra.mxu0 0.0
    %2952 = vmatprep.subr.mxu0 0.0
    %2953 = vmatpush2.msra.mxu0 0.0
    %2954 = vmatprep.subr.mxu0 0.0
    %2955 = vmatpush2.msra.mxu0 0.0
    %2956 = vmatprep.subr.mxu0 0.0
    %2957 = vmatpush2.msra.mxu0 0.0
    %2958 = vmatprep.subr.mxu0 0.0
    %2959 = vmatpush2.msra.mxu0 0.0
    %2960 = vmatprep.subr.mxu0 0.0
    %2961 = vmatpush2.msra.mxu0 0.0
    %2962 = vmatprep.subr.mxu0 0.0
    %2963 = vmatpush2.msra.mxu0 0.0
    %2964 = vmatprep.subr.mxu0 0.0
    %2965 = vmatpush2.msra.mxu0 0.0
    %2966 = vmatprep.subr.mxu0 0.0
    %2967 = vmatpush2.msra.mxu0 0.0
    %2968 = vmatprep.subr.mxu0 0.0
    %2969 = vmatpush2.msra.mxu0 0.0
    %2970 = vmatprep.subr.mxu0 0.0
    %2971 = vmatpush2.msra.mxu0 0.0
    %2972 = vmatprep.subr.mxu0 0.0
    %2973 = vmatpush2.msra.mxu0 0.0
    %2974 = vmatprep.subr.mxu0 0.0
    %2975 = vmatpush2.msra.mxu0 0.0
    %2976 = vmatprep.mubr.f32.mxu0 0.0
    %2977 = vmatmul.mubr.f32.gmra.mxu0 %v2910
    %v2978 = vpop.f32.mrf.mxu0
    %v2979 = vadd.f32 0.0, %v2978
    %v2980 = vpop.f32.mrf.mxu0
    %2981 = vdwg.mxu0
    %2982 = vrot.lane.b32.xlu0 %v2033, 64
    %v2983 = vpop.permute.xlu0 %2982
    %v2986 = vsel %vm209, %v2749, 0
    %2988 = vmatprep.subr.mxu0 0.0
    %2989 = vmatpush1.msra.mxu0 0.0
    %2990 = vmatprep.subr.mxu0 0.0
    %2991 = vmatpush1.msra.mxu0 0.0
    %2992 = vmatprep.subr.mxu0 0.0
    %2993 = vmatpush1.msra.mxu0 0.0
    %2994 = vmatprep.subr.mxu0 0.0
    %2995 = vmatpush1.msra.mxu0 0.0
    %2996 = vmatprep.subr.mxu0 0.0
    %2997 = vmatpush1.msra.mxu0 0.0
    %2998 = vmatprep.subr.mxu0 0.0
    %2999 = vmatpush1.msra.mxu0 0.0
    %3000 = vmatprep.subr.mxu0 0.0
    %3001 = vmatpush1.msra.mxu0 0.0
    %3002 = vmatprep.subr.mxu0 0.0
    %3003 = vmatpush1.msra.mxu0 0.0
    %3004 = vmatprep.subr.mxu0 0.0
    %3005 = vmatpush1.msra.mxu0 0.0
    %3006 = vmatprep.subr.mxu0 0.0
    %3007 = vmatpush1.msra.mxu0 0.0
    %3008 = vmatprep.subr.mxu0 0.0
    %3009 = vmatpush1.msra.mxu0 0.0
    %3010 = vmatprep.subr.mxu0 0.0
    %3011 = vmatpush1.msra.mxu0 0.0
    %3012 = vmatprep.subr.mxu0 0.0
    %3013 = vmatpush1.msra.mxu0 0.0
    %3014 = vmatprep.subr.mxu0 0.0
    %3015 = vmatpush1.msra.mxu0 0.0
    %3016 = vmatprep.subr.mxu0 0.0
    %3017 = vmatpush1.msra.mxu0 0.0
    %3018 = vmatprep.subr.mxu0 0.0
    %3019 = vmatpush1.msra.mxu0 %v2983
    %3020 = vmatprep.subr.mxu0 0.0
    %3021 = vmatpush2.msra.mxu0 0.0
    %3022 = vmatprep.subr.mxu0 0.0
    %3023 = vmatpush2.msra.mxu0 0.0
    %3024 = vmatprep.subr.mxu0 0.0
    %3025 = vmatpush2.msra.mxu0 0.0
    %3026 = vmatprep.subr.mxu0 0.0
    %3027 = vmatpush2.msra.mxu0 0.0
    %3028 = vmatprep.subr.mxu0 0.0
    %3029 = vmatpush2.msra.mxu0 0.0
    %3030 = vmatprep.subr.mxu0 0.0
    %3031 = vmatpush2.msra.mxu0 0.0
    %3032 = vmatprep.subr.mxu0 0.0
    %3033 = vmatpush2.msra.mxu0 0.0
    %3034 = vmatprep.subr.mxu0 0.0
    %3035 = vmatpush2.msra.mxu0 0.0
    %3036 = vmatprep.subr.mxu0 0.0
    %3037 = vmatpush2.msra.mxu0 0.0
    %3038 = vmatprep.subr.mxu0 0.0
    %3039 = vmatpush2.msra.mxu0 0.0
    %3040 = vmatprep.subr.mxu0 0.0
    %3041 = vmatpush2.msra.mxu0 0.0
    %3042 = vmatprep.subr.mxu0 0.0
    %3043 = vmatpush2.msra.mxu0 0.0
    %3044 = vmatprep.subr.mxu0 0.0
    %3045 = vmatpush2.msra.mxu0 0.0
    %3046 = vmatprep.subr.mxu0 0.0
    %3047 = vmatpush2.msra.mxu0 0.0
    %3048 = vmatprep.subr.mxu0 0.0
    %3049 = vmatpush2.msra.mxu0 0.0
    %3050 = vmatprep.subr.mxu0 0.0
    %3051 = vmatpush2.msra.mxu0 0.0
    %3052 = vmatprep.mubr.f32.mxu0 0.0
    %3053 = vmatmul.mubr.f32.gmra.mxu0 %v2986
    %v3054 = vpop.f32.mrf.mxu0
    %v3055 = vadd.f32 0.0, %v3054
    %v3056 = vpop.f32.mrf.mxu0
    %3057 = vdwg.mxu0
    %3058 = vrot.lane.b32.xlu0 %v2035, 64
    %v3059 = vpop.permute.xlu0 %3058
    %v3062 = vsel %vm209, %v2750, 0
    %3064 = vmatprep.subr.mxu0 0.0
    %3065 = vmatpush1.msra.mxu0 0.0
    %3066 = vmatprep.subr.mxu0 0.0
    %3067 = vmatpush1.msra.mxu0 0.0
    %3068 = vmatprep.subr.mxu0 0.0
    %3069 = vmatpush1.msra.mxu0 0.0
    %3070 = vmatprep.subr.mxu0 0.0
    %3071 = vmatpush1.msra.mxu0 0.0
    %3072 = vmatprep.subr.mxu0 0.0
    %3073 = vmatpush1.msra.mxu0 0.0
    %3074 = vmatprep.subr.mxu0 0.0
    %3075 = vmatpush1.msra.mxu0 0.0
    %3076 = vmatprep.subr.mxu0 0.0
    %3077 = vmatpush1.msra.mxu0 0.0
    %3078 = vmatprep.subr.mxu0 0.0
    %3079 = vmatpush1.msra.mxu0 0.0
    %3080 = vmatprep.subr.mxu0 0.0
    %3081 = vmatpush1.msra.mxu0 0.0
    %3082 = vmatprep.subr.mxu0 0.0
    %3083 = vmatpush1.msra.mxu0 0.0
    %3084 = vmatprep.subr.mxu0 0.0
    %3085 = vmatpush1.msra.mxu0 0.0
    %3086 = vmatprep.subr.mxu0 0.0
    %3087 = vmatpush1.msra.mxu0 0.0
    %3088 = vmatprep.subr.mxu0 0.0
    %3089 = vmatpush1.msra.mxu0 0.0
    %3090 = vmatprep.subr.mxu0 0.0
    %3091 = vmatpush1.msra.mxu0 0.0
    %3092 = vmatprep.subr.mxu0 0.0
    %3093 = vmatpush1.msra.mxu0 0.0
    %3094 = vmatprep.subr.mxu0 0.0
    %3095 = vmatpush1.msra.mxu0 %v3059
    %3096 = vmatprep.subr.mxu0 0.0
    %3097 = vmatpush2.msra.mxu0 0.0
    %3098 = vmatprep.subr.mxu0 0.0
    %3099 = vmatpush2.msra.mxu0 0.0
    %3100 = vmatprep.subr.mxu0 0.0
    %3101 = vmatpush2.msra.mxu0 0.0
    %3102 = vmatprep.subr.mxu0 0.0
    %3103 = vmatpush2.msra.mxu0 0.0
    %3104 = vmatprep.subr.mxu0 0.0
    %3105 = vmatpush2.msra.mxu0 0.0
    %3106 = vmatprep.subr.mxu0 0.0
    %3107 = vmatpush2.msra.mxu0 0.0
    %3108 = vmatprep.subr.mxu0 0.0
    %3109 = vmatpush2.msra.mxu0 0.0
    %3110 = vmatprep.subr.mxu0 0.0
    %3111 = vmatpush2.msra.mxu0 0.0
    %3112 = vmatprep.subr.mxu0 0.0
    %3113 = vmatpush2.msra.mxu0 0.0
    %3114 = vmatprep.subr.mxu0 0.0
    %3115 = vmatpush2.msra.mxu0 0.0
    %3116 = vmatprep.subr.mxu0 0.0
    %3117 = vmatpush2.msra.mxu0 0.0
    %3118 = vmatprep.subr.mxu0 0.0
    %3119 = vmatpush2.msra.mxu0 0.0
    %3120 = vmatprep.subr.mxu0 0.0
    %3121 = vmatpush2.msra.mxu0 0.0
    %3122 = vmatprep.subr.mxu0 0.0
    %3123 = vmatpush2.msra.mxu0 0.0
    %3124 = vmatprep.subr.mxu0 0.0
    %3125 = vmatpush2.msra.mxu0 0.0
    %3126 = vmatprep.subr.mxu0 0.0
    %3127 = vmatpush2.msra.mxu0 0.0
    %3128 = vmatprep.mubr.f32.mxu0 0.0
    %3129 = vmatmul.mubr.f32.gmra.mxu0 %v3062
    %v3130 = vpop.f32.mrf.mxu0
    %v3131 = vadd.f32 0.0, %v3130
    %v3132 = vpop.f32.mrf.mxu0
    %3133 = vdwg.mxu0
    %3134 = vrot.lane.b32.xlu0 %v2037, 64
    %v3135 = vpop.permute.xlu0 %3134
    %v3138 = vsel %vm209, %v2751, 0
    %3140 = vmatprep.subr.mxu0 0.0
    %3141 = vmatpush1.msra.mxu0 0.0
    %3142 = vmatprep.subr.mxu0 0.0
    %3143 = vmatpush1.msra.mxu0 0.0
    %3144 = vmatprep.subr.mxu0 0.0
    %3145 = vmatpush1.msra.mxu0 0.0
    %3146 = vmatprep.subr.mxu0 0.0
    %3147 = vmatpush1.msra.mxu0 0.0
    %3148 = vmatprep.subr.mxu0 0.0
    %3149 = vmatpush1.msra.mxu0 0.0
    %3150 = vmatprep.subr.mxu0 0.0
    %3151 = vmatpush1.msra.mxu0 0.0
    %3152 = vmatprep.subr.mxu0 0.0
    %3153 = vmatpush1.msra.mxu0 0.0
    %3154 = vmatprep.subr.mxu0 0.0
    %3155 = vmatpush1.msra.mxu0 0.0
    %3156 = vmatprep.subr.mxu0 0.0
    %3157 = vmatpush1.msra.mxu0 0.0
    %3158 = vmatprep.subr.mxu0 0.0
    %3159 = vmatpush1.msra.mxu0 0.0
    %3160 = vmatprep.subr.mxu0 0.0
    %3161 = vmatpush1.msra.mxu0 0.0
    %3162 = vmatprep.subr.mxu0 0.0
    %3163 = vmatpush1.msra.mxu0 0.0
    %3164 = vmatprep.subr.mxu0 0.0
    %3165 = vmatpush1.msra.mxu0 0.0
    %3166 = vmatprep.subr.mxu0 0.0
    %3167 = vmatpush1.msra.mxu0 0.0
    %3168 = vmatprep.subr.mxu0 0.0
    %3169 = vmatpush1.msra.mxu0 0.0
    %3170 = vmatprep.subr.mxu0 0.0
    %3171 = vmatpush1.msra.mxu0 %v3135
    %3172 = vmatprep.subr.mxu0 0.0
    %3173 = vmatpush2.msra.mxu0 0.0
    %3174 = vmatprep.subr.mxu0 0.0
    %3175 = vmatpush2.msra.mxu0 0.0
    %3176 = vmatprep.subr.mxu0 0.0
    %3177 = vmatpush2.msra.mxu0 0.0
    %3178 = vmatprep.subr.mxu0 0.0
    %3179 = vmatpush2.msra.mxu0 0.0
    %3180 = vmatprep.subr.mxu0 0.0
    %3181 = vmatpush2.msra.mxu0 0.0
    %3182 = vmatprep.subr.mxu0 0.0
    %3183 = vmatpush2.msra.mxu0 0.0
    %3184 = vmatprep.subr.mxu0 0.0
    %3185 = vmatpush2.msra.mxu0 0.0
    %3186 = vmatprep.subr.mxu0 0.0
    %3187 = vmatpush2.msra.mxu0 0.0
    %3188 = vmatprep.subr.mxu0 0.0
    %3189 = vmatpush2.msra.mxu0 0.0
    %3190 = vmatprep.subr.mxu0 0.0
    %3191 = vmatpush2.msra.mxu0 0.0
    %3192 = vmatprep.subr.mxu0 0.0
    %3193 = vmatpush2.msra.mxu0 0.0
    %3194 = vmatprep.subr.mxu0 0.0
    %3195 = vmatpush2.msra.mxu0 0.0
    %3196 = vmatprep.subr.mxu0 0.0
    %3197 = vmatpush2.msra.mxu0 0.0
    %3198 = vmatprep.subr.mxu0 0.0
    %3199 = vmatpush2.msra.mxu0 0.0
    %3200 = vmatprep.subr.mxu0 0.0
    %3201 = vmatpush2.msra.mxu0 0.0
    %3202 = vmatprep.subr.mxu0 0.0
    %3203 = vmatpush2.msra.mxu0 0.0
    %3204 = vmatprep.mubr.f32.mxu0 0.0
    %3205 = vmatmul.mubr.f32.gmra.mxu0 %v3138
    %v3206 = vpop.f32.mrf.mxu0
    %v3207 = vadd.f32 0.0, %v3206
    %v3208 = vpop.f32.mrf.mxu0
    %3209 = vdwg.mxu0
    %3210 = vrot.lane.b32.xlu0 %v2039, 64
    %v3211 = vpop.permute.xlu0 %3210
    %v3214 = vsel %vm209, %v2752, 0
    %3216 = vmatprep.subr.mxu0 0.0
    %3217 = vmatpush1.msra.mxu0 0.0
    %3218 = vmatprep.subr.mxu0 0.0
    %3219 = vmatpush1.msra.mxu0 0.0
    %3220 = vmatprep.subr.mxu0 0.0
    %3221 = vmatpush1.msra.mxu0 0.0
    %3222 = vmatprep.subr.mxu0 0.0
    %3223 = vmatpush1.msra.mxu0 0.0
    %3224 = vmatprep.subr.mxu0 0.0
    %3225 = vmatpush1.msra.mxu0 0.0
    %3226 = vmatprep.subr.mxu0 0.0
    %3227 = vmatpush1.msra.mxu0 0.0
    %3228 = vmatprep.subr.mxu0 0.0
    %3229 = vmatpush1.msra.mxu0 0.0
    %3230 = vmatprep.subr.mxu0 0.0
    %3231 = vmatpush1.msra.mxu0 0.0
    %3232 = vmatprep.subr.mxu0 0.0
    %3233 = vmatpush1.msra.mxu0 0.0
    %3234 = vmatprep.subr.mxu0 0.0
    %3235 = vmatpush1.msra.mxu0 0.0
    %3236 = vmatprep.subr.mxu0 0.0
    %3237 = vmatpush1.msra.mxu0 0.0
    %3238 = vmatprep.subr.mxu0 0.0
    %3239 = vmatpush1.msra.mxu0 0.0
    %3240 = vmatprep.subr.mxu0 0.0
    %3241 = vmatpush1.msra.mxu0 0.0
    %3242 = vmatprep.subr.mxu0 0.0
    %3243 = vmatpush1.msra.mxu0 0.0
    %3244 = vmatprep.subr.mxu0 0.0
    %3245 = vmatpush1.msra.mxu0 0.0
    %3246 = vmatprep.subr.mxu0 0.0
    %3247 = vmatpush1.msra.mxu0 %v3211
    %3248 = vmatprep.subr.mxu0 0.0
    %3249 = vmatpush2.msra.mxu0 0.0
    %3250 = vmatprep.subr.mxu0 0.0
    %3251 = vmatpush2.msra.mxu0 0.0
    %3252 = vmatprep.subr.mxu0 0.0
    %3253 = vmatpush2.msra.mxu0 0.0
    %3254 = vmatprep.subr.mxu0 0.0
    %3255 = vmatpush2.msra.mxu0 0.0
    %3256 = vmatprep.subr.mxu0 0.0
    %3257 = vmatpush2.msra.mxu0 0.0
    %3258 = vmatprep.subr.mxu0 0.0
    %3259 = vmatpush2.msra.mxu0 0.0
    %3260 = vmatprep.subr.mxu0 0.0
    %3261 = vmatpush2.msra.mxu0 0.0
    %3262 = vmatprep.subr.mxu0 0.0
    %3263 = vmatpush2.msra.mxu0 0.0
    %3264 = vmatprep.subr.mxu0 0.0
    %3265 = vmatpush2.msra.mxu0 0.0
    %3266 = vmatprep.subr.mxu0 0.0
    %3267 = vmatpush2.msra.mxu0 0.0
    %3268 = vmatprep.subr.mxu0 0.0
    %3269 = vmatpush2.msra.mxu0 0.0
    %3270 = vmatprep.subr.mxu0 0.0
    %3271 = vmatpush2.msra.mxu0 0.0
    %3272 = vmatprep.subr.mxu0 0.0
    %3273 = vmatpush2.msra.mxu0 0.0
    %3274 = vmatprep.subr.mxu0 0.0
    %3275 = vmatpush2.msra.mxu0 0.0
    %3276 = vmatprep.subr.mxu0 0.0
    %3277 = vmatpush2.msra.mxu0 0.0
    %3278 = vmatprep.subr.mxu0 0.0
    %3279 = vmatpush2.msra.mxu0 0.0
    %3280 = vmatprep.mubr.f32.mxu0 0.0
    %3281 = vmatmul.mubr.f32.gmra.mxu0 %v3214
    %v3282 = vpop.f32.mrf.mxu0
    %v3283 = vadd.f32 0.0, %v3282
    %v3284 = vpop.f32.mrf.mxu0
    %3285 = vdwg.mxu0
    %3286 = vrot.lane.b32.xlu0 %v2041, 64
    %v3287 = vpop.permute.xlu0 %3286
    %v3290 = vsel %vm209, %v2753, 0
    %3292 = vmatprep.subr.mxu0 0.0
    %3293 = vmatpush1.msra.mxu0 0.0
    %3294 = vmatprep.subr.mxu0 0.0
    %3295 = vmatpush1.msra.mxu0 0.0
    %3296 = vmatprep.subr.mxu0 0.0
    %3297 = vmatpush1.msra.mxu0 0.0
    %3298 = vmatprep.subr.mxu0 0.0
    %3299 = vmatpush1.msra.mxu0 0.0
    %3300 = vmatprep.subr.mxu0 0.0
    %3301 = vmatpush1.msra.mxu0 0.0
    %3302 = vmatprep.subr.mxu0 0.0
    %3303 = vmatpush1.msra.mxu0 0.0
    %3304 = vmatprep.subr.mxu0 0.0
    %3305 = vmatpush1.msra.mxu0 0.0
    %3306 = vmatprep.subr.mxu0 0.0
    %3307 = vmatpush1.msra.mxu0 0.0
    %3308 = vmatprep.subr.mxu0 0.0
    %3309 = vmatpush1.msra.mxu0 0.0
    %3310 = vmatprep.subr.mxu0 0.0
    %3311 = vmatpush1.msra.mxu0 0.0
    %3312 = vmatprep.subr.mxu0 0.0
    %3313 = vmatpush1.msra.mxu0 0.0
    %3314 = vmatprep.subr.mxu0 0.0
    %3315 = vmatpush1.msra.mxu0 0.0
    %3316 = vmatprep.subr.mxu0 0.0
    %3317 = vmatpush1.msra.mxu0 0.0
    %3318 = vmatprep.subr.mxu0 0.0
    %3319 = vmatpush1.msra.mxu0 0.0
    %3320 = vmatprep.subr.mxu0 0.0
    %3321 = vmatpush1.msra.mxu0 0.0
    %3322 = vmatprep.subr.mxu0 0.0
    %3323 = vmatpush1.msra.mxu0 %v3287
    %3324 = vmatprep.subr.mxu0 0.0
    %3325 = vmatpush2.msra.mxu0 0.0
    %3326 = vmatprep.subr.mxu0 0.0
    %3327 = vmatpush2.msra.mxu0 0.0
    %3328 = vmatprep.subr.mxu0 0.0
    %3329 = vmatpush2.msra.mxu0 0.0
    %3330 = vmatprep.subr.mxu0 0.0
    %3331 = vmatpush2.msra.mxu0 0.0
    %3332 = vmatprep.subr.mxu0 0.0
    %3333 = vmatpush2.msra.mxu0 0.0
    %3334 = vmatprep.subr.mxu0 0.0
    %3335 = vmatpush2.msra.mxu0 0.0
    %3336 = vmatprep.subr.mxu0 0.0
    %3337 = vmatpush2.msra.mxu0 0.0
    %3338 = vmatprep.subr.mxu0 0.0
    %3339 = vmatpush2.msra.mxu0 0.0
    %3340 = vmatprep.subr.mxu0 0.0
    %3341 = vmatpush2.msra.mxu0 0.0
    %3342 = vmatprep.subr.mxu0 0.0
    %3343 = vmatpush2.msra.mxu0 0.0
    %3344 = vmatprep.subr.mxu0 0.0
    %3345 = vmatpush2.msra.mxu0 0.0
    %3346 = vmatprep.subr.mxu0 0.0
    %3347 = vmatpush2.msra.mxu0 0.0
    %3348 = vmatprep.subr.mxu0 0.0
    %3349 = vmatpush2.msra.mxu0 0.0
    %3350 = vmatprep.subr.mxu0 0.0
    %3351 = vmatpush2.msra.mxu0 0.0
    %3352 = vmatprep.subr.mxu0 0.0
    %3353 = vmatpush2.msra.mxu0 0.0
    %3354 = vmatprep.subr.mxu0 0.0
    %3355 = vmatpush2.msra.mxu0 0.0
    %3356 = vmatprep.mubr.f32.mxu0 0.0
    %3357 = vmatmul.mubr.f32.gmra.mxu0 %v3290
    %v3358 = vpop.f32.mrf.mxu0
    %v3359 = vadd.f32 0.0, %v3358
    %v3360 = vpop.f32.mrf.mxu0
    %3361 = vdwg.mxu0
    %3364 = vrot.lane.b32.xlu0 %v2979, 8
    %v3365 = vpop.permute.xlu0 %3364
    %3366 = vrot.lane.b32.xlu0 %v3055, 8
    %v3367 = vpop.permute.xlu0 %3366
    %3372 = vrot.lane.b32.xlu0 %v3131, 16
    %v3373 = vpop.permute.xlu0 %3372
    %3374 = vrot.lane.b32.xlu0 %v3207, 16
    %v3375 = vpop.permute.xlu0 %3374
    %3380 = vrot.lane.b32.xlu0 %v3283, 24
    %v3381 = vpop.permute.xlu0 %3380
    %3382 = vrot.lane.b32.xlu0 %v3359, 24
    %v3383 = vpop.permute.xlu0 %3382
    %v3386 = vsel %vm209, %v2827, %v3365
    %v3387 = vsel %vm209, %v2903, %v3367
    %v3388 = vsel %vm1554, %v3386, %v3373
    %v3389 = vsel %vm1554, %v3387, %v3375
    %v3390 = vsel %vm1557, %v3388, %v3381
    %v3391 = vsel %vm1557, %v3389, %v3383
    %s3392 = scalar_lea.vmem %s4, 32
    %v3393 = vld [vmem:[%s3392] sm:$0xff]
    %v3394 = vld [vmem:[%s3392 + $0x8] sm:$0xff]
    %v3395 = vld [vmem:[%s3392 + $0x10] sm:$0xff]
    %v3396 = vld [vmem:[%s3392 + $0x18] sm:$0xff]
    %v3398 = vsel %vm64, %v3390, 0
    %v3401 = vsel %vm64, %v3391, 0
    %3403 = vmatprep.subr.mxu0 0.0
    %3404 = vmatpush1.msra.mxu0 0.0
    %3405 = vmatprep.subr.mxu0 0.0
    %3406 = vmatpush1.msra.mxu0 0.0
    %3407 = vmatprep.subr.mxu0 0.0
    %3408 = vmatpush1.msra.mxu0 0.0
    %3409 = vmatprep.subr.mxu0 0.0
    %3410 = vmatpush1.msra.mxu0 0.0
    %3411 = vmatprep.subr.mxu0 0.0
    %3412 = vmatpush1.msra.mxu0 0.0
    %3413 = vmatprep.subr.mxu0 0.0
    %3414 = vmatpush1.msra.mxu0 0.0
    %3415 = vmatprep.subr.mxu0 0.0
    %3416 = vmatpush1.msra.mxu0 0.0
    %3417 = vmatprep.subr.mxu0 0.0
    %3418 = vmatpush1.msra.mxu0 0.0
    %3419 = vmatprep.subr.mxu0 0.0
    %3420 = vmatpush1.msra.mxu0 0.0
    %3421 = vmatprep.subr.mxu0 0.0
    %3422 = vmatpush1.msra.mxu0 0.0
    %3423 = vmatprep.subr.mxu0 0.0
    %3424 = vmatpush1.msra.mxu0 0.0
    %3425 = vmatprep.subr.mxu0 0.0
    %3426 = vmatpush1.msra.mxu0 0.0
    %3427 = vmatprep.subr.mxu0 0.0
    %3428 = vmatpush1.msra.mxu0 %v3396
    %3429 = vmatprep.subr.mxu0 0.0
    %3430 = vmatpush1.msra.mxu0 %v3395
    %3431 = vmatprep.subr.mxu0 0.0
    %3432 = vmatpush1.msra.mxu0 %v3394
    %3433 = vmatprep.subr.mxu0 0.0
    %3434 = vmatpush1.msra.mxu0 %v3393
    %3435 = vmatprep.subr.mxu0 0.0
    %3436 = vmatpush2.msra.mxu0 0.0
    %3437 = vmatprep.subr.mxu0 0.0
    %3438 = vmatpush2.msra.mxu0 0.0
    %3439 = vmatprep.subr.mxu0 0.0
    %3440 = vmatpush2.msra.mxu0 0.0
    %3441 = vmatprep.subr.mxu0 0.0
    %3442 = vmatpush2.msra.mxu0 0.0
    %3443 = vmatprep.subr.mxu0 0.0
    %3444 = vmatpush2.msra.mxu0 0.0
    %3445 = vmatprep.subr.mxu0 0.0
    %3446 = vmatpush2.msra.mxu0 0.0
    %3447 = vmatprep.subr.mxu0 0.0
    %3448 = vmatpush2.msra.mxu0 0.0
    %3449 = vmatprep.subr.mxu0 0.0
    %3450 = vmatpush2.msra.mxu0 0.0
    %3451 = vmatprep.subr.mxu0 0.0
    %3452 = vmatpush2.msra.mxu0 0.0
    %3453 = vmatprep.subr.mxu0 0.0
    %3454 = vmatpush2.msra.mxu0 0.0
    %3455 = vmatprep.subr.mxu0 0.0
    %3456 = vmatpush2.msra.mxu0 0.0
    %3457 = vmatprep.subr.mxu0 0.0
    %3458 = vmatpush2.msra.mxu0 0.0
    %3459 = vmatprep.subr.mxu0 0.0
    %3460 = vmatpush2.msra.mxu0 0.0
    %3461 = vmatprep.subr.mxu0 0.0
    %3462 = vmatpush2.msra.mxu0 0.0
    %3463 = vmatprep.subr.mxu0 0.0
    %3464 = vmatpush2.msra.mxu0 0.0
    %3465 = vmatprep.subr.mxu0 0.0
    %3466 = vmatpush2.msra.mxu0 0.0
    %3467 = vmatprep.mubr.f32.mxu0 0.0
    %3468 = vmatmul.mubr.f32.gmra.mxu0 %v3398
    %v3469 = vpop.f32.mrf.mxu0
    %v3470 = vadd.f32 0.0, %v3469
    %v3471 = vpop.f32.mrf.mxu0
    %3472 = vmatprep.mubr.f32.mxu0 0.0
    %3473 = vmatmul.mubr.f32.gmra.mxu0 %v3401
    %v3474 = vpop.f32.mrf.mxu0
    %v3475 = vadd.f32 0.0, %v3474
    %v3476 = vpop.f32.mrf.mxu0
    %3477 = vdwg.mxu0
    %v3478 = vadd.f32 %v1894, %v3470
    %v3479 = vadd.f32 %v1895, %v3475
    %s3480 = scalar_lea.vmem %s5, 1
    %v3481 = vld [vmem:[%s3480] sm:$0x1]
    %v3483 = vlaneseq
    %v3484 = vshrl.u32 %v3483, 7
    %v3485 = vsub.s32 0, %v3484
    %v3486 = vrot.slane %v3481, %v3485
    %v3488 = vadd.f32 %v3478, %v3486
    %v3489 = vadd.f32 %v3479, %v3486
    %s3490 = scalar_lea.vmem %s6, 1
    %v3491 = vld [vmem:[%s3490] sm:$0x1]
    %s3492 = scalar_lea.vmem %s7, 1
    %v3493 = vld [vmem:[%s3492] sm:$0x1]
    %v3494 = vsel %vm64, %v3488, 0.0
    %3495 = vadd.xlane.f32.xlu0 %v3494
    %v3496 = vpop.xlane.xlu0 %3495
    %v3497 = vsel %vm64, %v3489, 0.0
    %3498 = vadd.xlane.f32.xlu0 %v3497
    %v3499 = vpop.xlane.xlu0 %3498
    %v3500 = vmul.f32 %v3496, %v71
    %v3501 = vmul.f32 %v3499, %v71
    %v3502 = vsub.f32 %v3488, %v3500
    %v3503 = vsub.f32 %v3489, %v3501
    %v3504 = vmul.f32 %v3502, %v3502
    %v3505 = vmul.f32 %v3503, %v3503
    %v3506 = vsel %vm64, %v3504, 0.0
    %3507 = vadd.xlane.f32.xlu0 %v3506
    %v3508 = vpop.xlane.xlu0 %3507
    %v3509 = vsel %vm64, %v3505, 0.0
    %3510 = vadd.xlane.f32.xlu0 %v3509
    %v3511 = vpop.xlane.xlu0 %3510
    %v3512 = vmul.f32 %v3508, %v71
    %v3513 = vmul.f32 %v3511, %v71
    %v3514 = vadd.f32 %v3512, 1e-05
    %v3515 = vadd.f32 %v3513, 1e-05
    %v3516 = vrsqrt.pop %v3514
    %v3517 = vrsqrt.pop %v3515
    %v3518 = vmul.f32 %v3502, %v3516
    %v3519 = vmul.f32 %v3503, %v3517
    %v3521 = vlaneseq
    %v3522 = vshrl.u32 %v3521, 7
    %v3523 = vsub.s32 0, %v3522
    %v3524 = vrot.slane %v3491, %v3523
    %v3526 = vmul.f32 %v3518, %v3524
    %v3527 = vmul.f32 %v3519, %v3524
    %v3529 = vlaneseq
    %v3530 = vshrl.u32 %v3529, 7
    %v3531 = vsub.s32 0, %v3530
    %v3532 = vrot.slane %v3493, %v3531
    %v3534 = vadd.f32 %v3526, %v3532
    %v3535 = vadd.f32 %v3527, %v3532
    %s3536 = scalar_lea.vmem %s8, 32
    %v3537 = vld [vmem:[%s3536] sm:$0xff]
    %v3538 = vld [vmem:[%s3536 + $0x8] sm:$0xff]
    %v3539 = vld [vmem:[%s3536 + $0x10] sm:$0xff]
    %v3540 = vld [vmem:[%s3536 + $0x18] sm:$0xff]
    %s3541 = scalar_lea.vmem %s9, 1
    %v3542 = vld [vmem:[%s3541] sm:$0x1]
    %v3544 = vlaneseq
    %v3545 = vshrl.u32 %v3544, 7
    %v3546 = vsub.s32 0, %v3545
    %v3547 = vrot.slane %v3542, %v3546
    %v3550 = vsel %vm64, %v3534, 0
    %v3553 = vsel %vm64, %v3535, 0
    %3555 = vmatprep.subr.mxu0 0.0
    %3556 = vmatpush1.msra.mxu0 0.0
    %3557 = vmatprep.subr.mxu0 0.0
    %3558 = vmatpush1.msra.mxu0 0.0
    %3559 = vmatprep.subr.mxu0 0.0
    %3560 = vmatpush1.msra.mxu0 0.0
    %3561 = vmatprep.subr.mxu0 0.0
    %3562 = vmatpush1.msra.mxu0 0.0
    %3563 = vmatprep.subr.mxu0 0.0
    %3564 = vmatpush1.msra.mxu0 0.0
    %3565 = vmatprep.subr.mxu0 0.0
    %3566 = vmatpush1.msra.mxu0 0.0
    %3567 = vmatprep.subr.mxu0 0.0
    %3568 = vmatpush1.msra.mxu0 0.0
    %3569 = vmatprep.subr.mxu0 0.0
    %3570 = vmatpush1.msra.mxu0 0.0
    %3571 = vmatprep.subr.mxu0 0.0
    %3572 = vmatpush1.msra.mxu0 0.0
    %3573 = vmatprep.subr.mxu0 0.0
    %3574 = vmatpush1.msra.mxu0 0.0
    %3575 = vmatprep.subr.mxu0 0.0
    %3576 = vmatpush1.msra.mxu0 0.0
    %3577 = vmatprep.subr.mxu0 0.0
    %3578 = vmatpush1.msra.mxu0 0.0
    %3579 = vmatprep.subr.mxu0 0.0
    %3580 = vmatpush1.msra.mxu0 %v3540
    %3581 = vmatprep.subr.mxu0 0.0
    %3582 = vmatpush1.msra.mxu0 %v3539
    %3583 = vmatprep.subr.mxu0 0.0
    %3584 = vmatpush1.msra.mxu0 %v3538
    %3585 = vmatprep.subr.mxu0 0.0
    %3586 = vmatpush1.msra.mxu0 %v3537
    %3587 = vmatprep.subr.mxu0 0.0
    %3588 = vmatpush2.msra.mxu0 0.0
    %3589 = vmatprep.subr.mxu0 0.0
    %3590 = vmatpush2.msra.mxu0 0.0
    %3591 = vmatprep.subr.mxu0 0.0
    %3592 = vmatpush2.msra.mxu0 0.0
    %3593 = vmatprep.subr.mxu0 0.0
    %3594 = vmatpush2.msra.mxu0 0.0
    %3595 = vmatprep.subr.mxu0 0.0
    %3596 = vmatpush2.msra.mxu0 0.0
    %3597 = vmatprep.subr.mxu0 0.0
    %3598 = vmatpush2.msra.mxu0 0.0
    %3599 = vmatprep.subr.mxu0 0.0
    %3600 = vmatpush2.msra.mxu0 0.0
    %3601 = vmatprep.subr.mxu0 0.0
    %3602 = vmatpush2.msra.mxu0 0.0
    %3603 = vmatprep.subr.mxu0 0.0
    %3604 = vmatpush2.msra.mxu0 0.0
    %3605 = vmatprep.subr.mxu0 0.0
    %3606 = vmatpush2.msra.mxu0 0.0
    %3607 = vmatprep.subr.mxu0 0.0
    %3608 = vmatpush2.msra.mxu0 0.0
    %3609 = vmatprep.subr.mxu0 0.0
    %3610 = vmatpush2.msra.mxu0 0.0
    %3611 = vmatprep.subr.mxu0 0.0
    %3612 = vmatpush2.msra.mxu0 0.0
    %3613 = vmatprep.subr.mxu0 0.0
    %3614 = vmatpush2.msra.mxu0 0.0
    %3615 = vmatprep.subr.mxu0 0.0
    %3616 = vmatpush2.msra.mxu0 0.0
    %3617 = vmatprep.subr.mxu0 0.0
    %3618 = vmatpush2.msra.mxu0 0.0
    %3619 = vmatprep.mubr.f32.mxu0 0.0
    %3620 = vmatmul.mubr.f32.gmra.mxu0 %v3550
    %v3621 = vpop.f32.mrf.mxu0
    %v3622 = vadd.f32 %v3547, %v3621
    %v3623 = vpop.f32.mrf.mxu0
    %3624 = vmatprep.mubr.f32.mxu0 0.0
    %3625 = vmatmul.mubr.f32.gmra.mxu0 %v3553
    %v3626 = vpop.f32.mrf.mxu0
    %v3627 = vadd.f32 %v3547, %v3626
    %v3628 = vpop.f32.mrf.mxu0
    %3629 = vdwg.mxu0
    %v3630 = vmax.f32 %v3622, 0.0
    %v3631 = vmax.f32 %v3627, 0.0
    %s3632 = scalar_lea.vmem %s10, 128
    %v3633 = vld [vmem:[%s3632] sm:$0xff]
    %v3634 = vld [vmem:[%s3632 + $0x8] sm:$0xff]
    %v3635 = vld [vmem:[%s3632 + $0x10] sm:$0xff]
    %v3636 = vld [vmem:[%s3632 + $0x18] sm:$0xff]
    %v3637 = vld [vmem:[%s3632 + $0x20] sm:$0xff]
    %v3638 = vld [vmem:[%s3632 + $0x28] sm:$0xff]
    %v3639 = vld [vmem:[%s3632 + $0x30] sm:$0xff]
    %v3640 = vld [vmem:[%s3632 + $0x38] sm:$0xff]
    %v3641 = vld [vmem:[%s3632 + $0x40] sm:$0xff]
    %v3642 = vld [vmem:[%s3632 + $0x48] sm:$0xff]
    %v3643 = vld [vmem:[%s3632 + $0x50] sm:$0xff]
    %v3644 = vld [vmem:[%s3632 + $0x58] sm:$0xff]
    %v3645 = vld [vmem:[%s3632 + $0x60] sm:$0xff]
    %v3646 = vld [vmem:[%s3632 + $0x68] sm:$0xff]
    %v3647 = vld [vmem:[%s3632 + $0x70] sm:$0xff]
    %v3648 = vld [vmem:[%s3632 + $0x78] sm:$0xff]
    %3649 = vmatprep.subr.mxu0 0.0
    %3650 = vmatpush1.msra.mxu0 %v3648
    %3651 = vmatprep.subr.mxu0 0.0
    %3652 = vmatpush1.msra.mxu0 %v3647
    %3653 = vmatprep.subr.mxu0 0.0
    %3654 = vmatpush1.msra.mxu0 %v3646
    %3655 = vmatprep.subr.mxu0 0.0
    %3656 = vmatpush1.msra.mxu0 %v3645
    %3657 = vmatprep.subr.mxu0 0.0
    %3658 = vmatpush1.msra.mxu0 %v3644
    %3659 = vmatprep.subr.mxu0 0.0
    %3660 = vmatpush1.msra.mxu0 %v3643
    %3661 = vmatprep.subr.mxu0 0.0
    %3662 = vmatpush1.msra.mxu0 %v3642
    %3663 = vmatprep.subr.mxu0 0.0
    %3664 = vmatpush1.msra.mxu0 %v3641
    %3665 = vmatprep.subr.mxu0 0.0
    %3666 = vmatpush1.msra.mxu0 %v3640
    %3667 = vmatprep.subr.mxu0 0.0
    %3668 = vmatpush1.msra.mxu0 %v3639
    %3669 = vmatprep.subr.mxu0 0.0
    %3670 = vmatpush1.msra.mxu0 %v3638
    %3671 = vmatprep.subr.mxu0 0.0
    %3672 = vmatpush1.msra.mxu0 %v3637
    %3673 = vmatprep.subr.mxu0 0.0
    %3674 = vmatpush1.msra.mxu0 %v3636
    %3675 = vmatprep.subr.mxu0 0.0
    %3676 = vmatpush1.msra.mxu0 %v3635
    %3677 = vmatprep.subr.mxu0 0.0
    %3678 = vmatpush1.msra.mxu0 %v3634
    %3679 = vmatprep.subr.mxu0 0.0
    %3680 = vmatpush1.msra.mxu0 %v3633
    %3681 = vmatprep.subr.mxu0 0.0
    %3682 = vmatpush2.msra.mxu0 0.0
    %3683 = vmatprep.subr.mxu0 0.0
    %3684 = vmatpush2.msra.mxu0 0.0
    %3685 = vmatprep.subr.mxu0 0.0
    %3686 = vmatpush2.msra.mxu0 0.0
    %3687 = vmatprep.subr.mxu0 0.0
    %3688 = vmatpush2.msra.mxu0 0.0
    %3689 = vmatprep.subr.mxu0 0.0
    %3690 = vmatpush2.msra.mxu0 0.0
    %3691 = vmatprep.subr.mxu0 0.0
    %3692 = vmatpush2.msra.mxu0 0.0
    %3693 = vmatprep.subr.mxu0 0.0
    %3694 = vmatpush2.msra.mxu0 0.0
    %3695 = vmatprep.subr.mxu0 0.0
    %3696 = vmatpush2.msra.mxu0 0.0
    %3697 = vmatprep.subr.mxu0 0.0
    %3698 = vmatpush2.msra.mxu0 0.0
    %3699 = vmatprep.subr.mxu0 0.0
    %3700 = vmatpush2.msra.mxu0 0.0
    %3701 = vmatprep.subr.mxu0 0.0
    %3702 = vmatpush2.msra.mxu0 0.0
    %3703 = vmatprep.subr.mxu0 0.0
    %3704 = vmatpush2.msra.mxu0 0.0
    %3705 = vmatprep.subr.mxu0 0.0
    %3706 = vmatpush2.msra.mxu0 0.0
    %3707 = vmatprep.subr.mxu0 0.0
    %3708 = vmatpush2.msra.mxu0 0.0
    %3709 = vmatprep.subr.mxu0 0.0
    %3710 = vmatpush2.msra.mxu0 0.0
    %3711 = vmatprep.subr.mxu0 0.0
    %3712 = vmatpush2.msra.mxu0 0.0
    %3713 = vmatprep.mubr.f32.mxu0 0.0
    %3714 = vmatmul.mubr.f32.gmra.mxu0 %v3630
    %v3715 = vpop.f32.mrf.mxu0
    %v3716 = vadd.f32 0.0, %v3715
    %v3717 = vpop.f32.mrf.mxu0
    %3718 = vmatprep.mubr.f32.mxu0 0.0
    %3719 = vmatmul.mubr.f32.gmra.mxu0 %v3631
    %v3720 = vpop.f32.mrf.mxu0
    %v3721 = vadd.f32 0.0, %v3720
    %v3722 = vpop.f32.mrf.mxu0
    %3723 = vdwg.mxu0
    %v3724 = vadd.f32 %v3488, %v3716
    %v3725 = vadd.f32 %v3489, %v3721
    %s3726 = scalar_lea.vmem %s11, 1
    %v3727 = vld [vmem:[%s3726] sm:$0x1]
    %v3729 = vlaneseq
    %v3730 = vshrl.u32 %v3729, 7
    %v3731 = vsub.s32 0, %v3730
    %v3732 = vrot.slane %v3727, %v3731
    %v3734 = vadd.f32 %v3724, %v3732
    %v3735 = vadd.f32 %v3725, %v3732
    %v3736 = vld [vmem:[%s12] sm:$0x1]
    %v3737 = vld [vmem:[%s13] sm:$0x1]
    %v3738 = vsel %vm64, %v3734, 0.0
    %3739 = vadd.xlane.f32.xlu0 %v3738
    %v3740 = vpop.xlane.xlu0 %3739
    %v3741 = vsel %vm64, %v3735, 0.0
    %3742 = vadd.xlane.f32.xlu0 %v3741
    %v3743 = vpop.xlane.xlu0 %3742
    %v3744 = vmul.f32 %v3740, %v71
    %v3745 = vmul.f32 %v3743, %v71
    %v3746 = vsub.f32 %v3734, %v3744
    %v3747 = vsub.f32 %v3735, %v3745
    %v3748 = vmul.f32 %v3746, %v3746
    %v3749 = vmul.f32 %v3747, %v3747
    %v3750 = vsel %vm64, %v3748, 0.0
    %3751 = vadd.xlane.f32.xlu0 %v3750
    %v3752 = vpop.xlane.xlu0 %3751
    %v3753 = vsel %vm64, %v3749, 0.0
    %3754 = vadd.xlane.f32.xlu0 %v3753
    %v3755 = vpop.xlane.xlu0 %3754
    %v3756 = vmul.f32 %v3752, %v71
    %v3757 = vmul.f32 %v3755, %v71
    %v3758 = vadd.f32 %v3756, 1e-05
    %v3759 = vadd.f32 %v3757, 1e-05
    %v3760 = vrsqrt.pop %v3758
    %v3761 = vrsqrt.pop %v3759
    %v3762 = vmul.f32 %v3746, %v3760
    %v3763 = vmul.f32 %v3747, %v3761
    %v3765 = vlaneseq
    %v3766 = vshrl.u32 %v3765, 7
    %v3767 = vsub.s32 0, %v3766
    %v3768 = vrot.slane %v3736, %v3767
    %v3770 = vmul.f32 %v3762, %v3768
    %v3771 = vmul.f32 %v3763, %v3768
    %v3773 = vlaneseq
    %v3774 = vshrl.u32 %v3773, 7
    %v3775 = vsub.s32 0, %v3774
    %v3776 = vrot.slane %v3737, %v3775
    %v3778 = vadd.f32 %v3770, %v3776
    %v3779 = vadd.f32 %v3771, %v3776
    %v3780 = vld [vmem:[%s14] sm:$0xff]
    %v3781 = vld [vmem:[%s14 + $0x8] sm:$0xff]
    %v3782 = vld [vmem:[%s14 + $0x10] sm:$0xff]
    %v3783 = vld [vmem:[%s14 + $0x18] sm:$0xff]
    %v3784 = vld [vmem:[%s15] sm:$0x1]
    %v3786 = vlaneseq
    %v3787 = vshrl.u32 %v3786, 7
    %v3788 = vsub.s32 0, %v3787
    %v3789 = vrot.slane %v3784, %v3788
    %v3792 = vsel %vm64, %v3778, 0
    %v3795 = vsel %vm64, %v3779, 0
    %3797 = vmatprep.subr.mxu0 0.0
    %3798 = vmatpush1.msra.mxu0 0.0
    %3799 = vmatprep.subr.mxu0 0.0
    %3800 = vmatpush1.msra.mxu0 0.0
    %3801 = vmatprep.subr.mxu0 0.0
    %3802 = vmatpush1.msra.mxu0 0.0
    %3803 = vmatprep.subr.mxu0 0.0
    %3804 = vmatpush1.msra.mxu0 0.0
    %3805 = vmatprep.subr.mxu0 0.0
    %3806 = vmatpush1.msra.mxu0 0.0
    %3807 = vmatprep.subr.mxu0 0.0
    %3808 = vmatpush1.msra.mxu0 0.0
    %3809 = vmatprep.subr.mxu0 0.0
    %3810 = vmatpush1.msra.mxu0 0.0
    %3811 = vmatprep.subr.mxu0 0.0
    %3812 = vmatpush1.msra.mxu0 0.0
    %3813 = vmatprep.subr.mxu0 0.0
    %3814 = vmatpush1.msra.mxu0 0.0
    %3815 = vmatprep.subr.mxu0 0.0
    %3816 = vmatpush1.msra.mxu0 0.0
    %3817 = vmatprep.subr.mxu0 0.0
    %3818 = vmatpush1.msra.mxu0 0.0
    %3819 = vmatprep.subr.mxu0 0.0
    %3820 = vmatpush1.msra.mxu0 0.0
    %3821 = vmatprep.subr.mxu0 0.0
    %3822 = vmatpush1.msra.mxu0 %v3783
    %3823 = vmatprep.subr.mxu0 0.0
    %3824 = vmatpush1.msra.mxu0 %v3782
    %3825 = vmatprep.subr.mxu0 0.0
    %3826 = vmatpush1.msra.mxu0 %v3781
    %3827 = vmatprep.subr.mxu0 0.0
    %3828 = vmatpush1.msra.mxu0 %v3780
    %3829 = vmatprep.subr.mxu0 0.0
    %3830 = vmatpush2.msra.mxu0 0.0
    %3831 = vmatprep.subr.mxu0 0.0
    %3832 = vmatpush2.msra.mxu0 0.0
    %3833 = vmatprep.subr.mxu0 0.0
    %3834 = vmatpush2.msra.mxu0 0.0
    %3835 = vmatprep.subr.mxu0 0.0
    %3836 = vmatpush2.msra.mxu0 0.0
    %3837 = vmatprep.subr.mxu0 0.0
    %3838 = vmatpush2.msra.mxu0 0.0
    %3839 = vmatprep.subr.mxu0 0.0
    %3840 = vmatpush2.msra.mxu0 0.0
    %3841 = vmatprep.subr.mxu0 0.0
    %3842 = vmatpush2.msra.mxu0 0.0
    %3843 = vmatprep.subr.mxu0 0.0
    %3844 = vmatpush2.msra.mxu0 0.0
    %3845 = vmatprep.subr.mxu0 0.0
    %3846 = vmatpush2.msra.mxu0 0.0
    %3847 = vmatprep.subr.mxu0 0.0
    %3848 = vmatpush2.msra.mxu0 0.0
    %3849 = vmatprep.subr.mxu0 0.0
    %3850 = vmatpush2.msra.mxu0 0.0
    %3851 = vmatprep.subr.mxu0 0.0
    %3852 = vmatpush2.msra.mxu0 0.0
    %3853 = vmatprep.subr.mxu0 0.0
    %3854 = vmatpush2.msra.mxu0 0.0
    %3855 = vmatprep.subr.mxu0 0.0
    %3856 = vmatpush2.msra.mxu0 0.0
    %3857 = vmatprep.subr.mxu0 0.0
    %3858 = vmatpush2.msra.mxu0 0.0
    %3859 = vmatprep.subr.mxu0 0.0
    %3860 = vmatpush2.msra.mxu0 0.0
    %3861 = vmatprep.mubr.f32.mxu0 0.0
    %3862 = vmatmul.mubr.f32.gmra.mxu0 %v3792
    %v3863 = vpop.f32.mrf.mxu0
    %v3864 = vadd.f32 %v3789, %v3863
    %v3865 = vpop.f32.mrf.mxu0
    %3866 = vmatprep.mubr.f32.mxu0 0.0
    %3867 = vmatmul.mubr.f32.gmra.mxu0 %v3795
    %v3868 = vpop.f32.mrf.mxu0
    %v3869 = vadd.f32 %v3789, %v3868
    %v3870 = vpop.f32.mrf.mxu0
    %3871 = vdwg.mxu0
    %3872 = vst [vmem:[#allocation2] sm:$0xff] %v3864
    %3873 = vst [vmem:[#allocation2 + $0x8] sm:$0xff] %v3869
    // Predicated region
    $region66: #{tpu_custom_call.1} parent=1 // pred_check
      _
    $region67: #{tpu_custom_call.1} parent=1 // pred_check_branch
      %3875 = sbr.rel (0) target = $region69
    $region68: #{tpu_custom_call.1} parent=1 // pred_region
      %s3877 = ssub.s32 256, 256
      %3878 = vsyncadd [#allocation3], %s3877
      %s3879 = sshll.u32 [#allocation2], 4
      %s3880 = int_to_ptr.vmem [resolvable:$true] %s3879
      %3885 = dma.vmem_to_hbm [thread:$0]  %s3880, 256, %s16, [#allocation3], 128, 128, 8
    $region69: #{tpu_custom_call.1} parent=1 // pred_fallthru
      _
    // Predicated region
    $region70: #{tpu_custom_call.1} parent=1 // pred_check
      _
    $region71: #{tpu_custom_call.1} parent=1 // pred_check_branch
      %3887 = sbr.rel (0) target = $region73
    $region72: #{tpu_custom_call.1} parent=1 // pred_region
      %3888 = dma.done [#allocation3], 256
    $region73: #{tpu_custom_call.1} parent=1 // pred_fallthru
      _
    %3889 = vsyncpa [#allocation3], 1

</llo_original>
